<compile_context>
chip_gen: v7x
topology: tpu7x:2x2x1
jax: 0.10.0
libtpu: 0.0.40
codegen_flags: <defaults>
</compile_context>

<pallas_src>
import functools

import jax
import jax.numpy as jnp
from jax.experimental import pallas as pl
from jax.experimental.pallas import tpu as pltpu

_EPS = 1e-5


# ----------------------------- Pallas kernels ------------------------------

def _head_kernel(z_ref, w1_ref, b1_ref, w2_ref, b2_ref, o_ref):
    """Fused nn.Linear(z_dim,512) -> ConvTranspose2d(512,512,(4,1),stride=2)
    on a 1x1 spatial input (which is exactly a second matmul)."""
    h = jnp.dot(z_ref[...], w1_ref[...],
                preferred_element_type=jnp.float32) + b1_ref[...]
    h = h.astype(w2_ref.dtype)
    o_ref[...] = jnp.dot(h, w2_ref[...],
                         preferred_element_type=jnp.float32) + b2_ref[...]


def head(z, w1, b1, w2, b2):
    B = z.shape[0]
    N = w2.shape[1]
    return pl.pallas_call(
        _head_kernel,
        out_shape=jax.ShapeDtypeStruct((B, N), jnp.float32),
    )(z, w1, b1.reshape(1, -1), w2, b2.reshape(1, -1))


def _conv3x3_kernel(x_ref, w_ref, sc_ref, bs_ref, *rest, H, W, relu, has_res):
    # x_ref : (1, H*W + 2*W + 2, Cin)  bf16 flat input, zero-padded by W+1 rows
    #                                  at the front and back (wrapper-side).
    # w_ref : (9, Cin, Cout)           bf16 3x3 taps (t = dy*3 + dx).
    # sc/bs : (1, Cout)                f32 folded BatchNorm/bias scale & shift.
    # r_ref : (1, H*W, Cout)           optional bf16 residual (flat).
    # o_ref : (1, H*W, Cout)           bf16 output (flat, lane-dense).
    # acc   : (H*W, Cout)              f32 VMEM accumulator scratch.
    if has_res:
        r_ref, o_ref, acc_ref = rest
    else:
        o_ref, acc_ref = rest
    HW = H * W

    # Column index of every flat output row; masks kill the W-boundary wrap
    # reads of the left/right taps (the H-boundary reads hit the zero pad).
    col = jax.lax.broadcasted_iota(jnp.int32, (HW, 1), 0) % W
    not_left = col != 0
    not_right = col != (W - 1)

    for t in range(9):                       # unrolled: 9 shifted-view matmuls
        dy, dx = divmod(t, 3)
        off = dy * W + dx                    # static row offset, no reshape
        xt = x_ref[0, off:off + HW, :]
        if dx == 0:
            xt = jnp.where(not_left, xt, 0).astype(xt.dtype)
        elif dx == 2:
            xt = jnp.where(not_right, xt, 0).astype(xt.dtype)
        prod = jnp.dot(xt, w_ref[t], preferred_element_type=jnp.float32)
        if t == 0:
            acc_ref[...] = prod
        else:
            acc_ref[...] += prod

    y = acc_ref[...] * sc_ref[...] + bs_ref[...]
    if has_res:
        y = y + r_ref[0].astype(jnp.float32)
    if relu:
        y = jnp.maximum(y, 0.0)
    o_ref[0] = y.astype(o_ref.dtype)


def conv3x3(x, w9, scale, shift, relu=False, residual=None):
    """3x3 / stride 1 / pad 1 conv on NHWC bf16, fused with per-channel f32
    scale+shift (BatchNorm and/or conv bias), optional residual add + ReLU."""
    B, H, W, Cin = x.shape
    Cout = w9.shape[-1]
    HW = H * W
    L = HW + 2 * W + 2

    xf = x.reshape(B, HW, Cin)
    xp = jnp.pad(xf, ((0, 0), (W + 1, W + 1), (0, 0)))

    kern = functools.partial(_conv3x3_kernel, H=H, W=W, relu=relu,
                             has_res=residual is not None)
    # NOTE: the weight/scale/shift specs have constant index maps, so Pallas
    # only DMAs them once per call; their (unused) second pipeline buffer fits
    # comfortably under the 48 MiB VMEM cap, so pl.Buffered(1) is not needed.
    in_specs = [
        pl.BlockSpec((1, L, Cin), lambda b: (b, 0, 0)),
        pl.BlockSpec((9, Cin, Cout), lambda b: (0, 0, 0)),
        pl.BlockSpec((1, Cout), lambda b: (0, 0)),
        pl.BlockSpec((1, Cout), lambda b: (0, 0)),
    ]
    args = [xp, w9,
            scale.reshape(1, Cout).astype(jnp.float32),
            shift.reshape(1, Cout).astype(jnp.float32)]
    if residual is not None:
        in_specs.append(pl.BlockSpec((1, HW, Cout), lambda b: (b, 0, 0)))
        args.append(residual.reshape(B, HW, Cout))

    out = pl.pallas_call(
        kern,
        out_shape=jax.ShapeDtypeStruct((B, HW, Cout), x.dtype),
        grid=(B,),
        in_specs=in_specs,
        out_specs=pl.BlockSpec((1, HW, Cout), lambda b: (b, 0, 0)),
        scratch_shapes=[pltpu.VMEM((HW, Cout), jnp.float32)],
        compiler_params=pltpu.CompilerParams(
            dimension_semantics=("parallel",),        # megacore over batch
            vmem_limit_bytes=48 * 1024 * 1024),       # fits v7x's 64 MiB VMEM
    )(*args)
    return out.reshape(B, H, W, Cout)


# ------------------------------ JAX glue ops -------------------------------

def up_nearest(x, s):
    """F.interpolate(mode='nearest', scale_factor=s) on NHWC."""
    x = jnp.repeat(x, s, axis=1)
    x = jnp.repeat(x, s, axis=2)
    return x


# ----------------------------- Parameter setup -----------------------------

def build_params(key, z_dim=10, nc=1):
    keys = iter(jax.random.split(key, 256))

    def nk():
        return next(keys)

    def conv_w(cin, cout):
        std = (2.0 / (9 * cin)) ** 0.5
        w = std * jax.random.normal(nk(), (9, cin, cout), jnp.float32)
        return w.astype(jnp.bfloat16)

    def bias(c):
        return 0.05 * jax.random.normal(nk(), (c,), jnp.float32)

    def bn_fold(c):
        gamma = 1.0 + 0.05 * jax.random.normal(nk(), (c,), jnp.float32)
        beta = 0.05 * jax.random.normal(nk(), (c,), jnp.float32)
        mean = 0.05 * jax.random.normal(nk(), (c,), jnp.float32)
        var = 1.0 + 0.05 * jnp.abs(jax.random.normal(nk(), (c,), jnp.float32))
        sc = gamma * jax.lax.rsqrt(var + _EPS)
        return sc, beta - mean * sc

    P = {}
    # nn.Linear(z_dim, 512)
    P['lin_w'] = ((1.0 / z_dim) ** 0.5 * jax.random.normal(
        nk(), (z_dim, 512), jnp.float32)).astype(jnp.bfloat16)
    P['lin_b'] = bias(512)
    # nn.ConvTranspose2d(512, 512, (4,1), stride=2) on a 1x1 input is exactly
    # a matmul: out[b, co, kh, 0] = sum_ci x[b,ci] * W[ci,co,kh] + b[co]
    w_ct = (1.0 / 512) ** 0.5 * jax.random.normal(
        nk(), (512, 512, 4), jnp.float32)
    P['ct_w'] = w_ct.reshape(512, 512 * 4).astype(jnp.bfloat16)
    P['ct_b'] = jnp.repeat(bias(512), 4)

    def block(cin, stride):
        p = {'stride': stride}
        p['w2'] = conv_w(cin, cin)          # conv2 (no bias) + bn2
        p['bn2'] = bn_fold(cin)
        cout = cin // stride
        p['w1'] = conv_w(cin, cout)         # conv1 + bn1
        p['bn1'] = bn_fold(cout)
        if stride != 1:
            p['b1'] = bias(cout)            # ResizeConv2d conv bias
            p['ws'] = conv_w(cin, cout)     # shortcut ResizeConv2d + BN
            p['bs'] = bias(cout)
            p['bns'] = bn_fold(cout)
        return p

    # _make_layer iterates reversed([stride] + [1]*(n-1)) -> [stride=1, stride=2]
    P['layer4'] = [block(512, 1), block(512, 2)]
    P['layer3'] = [block(256, 1), block(256, 2)]
    P['layer2'] = [block(128, 1), block(128, 2)]
    P['layer1'] = [block(64, 1), block(64, 1)]
    # final ResizeConv2d(64, nc, 3, scale_factor=1)
    P['conv1_w'] = conv_w(64, nc)
    P['conv1_b'] = bias(nc)
    return P


# ------------------------------ Model forward ------------------------------

def block_forward(x, p):
    s2, t2 = p['bn2']
    out = conv3x3(x, p['w2'], s2, t2, relu=True)            # relu(bn2(conv2(x)))
    s1, t1 = p['bn1']
    if p['stride'] == 1:
        # relu(bn1(conv1(out)) + x)
        return conv3x3(out, p['w1'], s1, t1, relu=True, residual=x)
    # stride != 1: ResizeConv2d branches (nearest up-sample then 3x3 conv)
    out = up_nearest(out, p['stride'])
    x_up = up_nearest(x, p['stride'])
    ss, ts = p['bns']
    shortcut = conv3x3(x_up, p['ws'], ss, p['bs'] * ss + ts, relu=False)
    return conv3x3(out, p['w1'], s1, p['b1'] * s1 + t1,
                   relu=True, residual=shortcut)


def resnet18dec_forward(z, P, nc=1):
    B = z.shape[0]
    x = head(z.astype(jnp.bfloat16),
             P['lin_w'], P['lin_b'], P['ct_w'], P['ct_b'])   # (B, 2048) f32
    x = x.reshape(B, 512, 4, 1)                              # NCHW (B,512,4,1)
    x = jnp.transpose(x, (0, 2, 3, 1)).astype(jnp.bfloat16)  # NHWC (B,4,1,512)
    x = up_nearest(x, 4)                                     # (B,16,4,512)
    for blk in P['layer4']:
        x = block_forward(x, blk)                            # -> (B,32,8,256)
    for blk in P['layer3']:
        x = block_forward(x, blk)                            # -> (B,64,16,128)
    for blk in P['layer2']:
        x = block_forward(x, blk)                            # -> (B,128,32,64)
    for blk in P['layer1']:
        x = block_forward(x, blk)                            # -> (B,128,32,64)
    ones = jnp.ones((nc,), jnp.float32)
    x = conv3x3(x, P['conv1_w'], ones, P['conv1_b'], relu=False)  # (B,128,32,1)
    x = jnp.transpose(x, (0, 3, 1, 2)).astype(jnp.float32)   # NCHW (B,1,128,32)
    return x.reshape(B, 1, 128, 32)                          # matches final .view


# ---------------------------------- Main -----------------------------------

if __name__ == "__main__":
    key = jax.random.PRNGKey(0)
    kz, kp = jax.random.split(key)
    B, z_dim = 2, 10
    z = jax.random.normal(kz, (B, z_dim), jnp.float32)
    params = build_params(kp, z_dim=z_dim, nc=1)

    out = resnet18dec_forward(z, params, nc=1)
    out = jax.block_until_ready(out)

    assert out.shape == (B, 1, 128, 32), out.shape
    assert bool(jnp.all(jnp.isfinite(out)))
    print("KERNEL_OK")
</pallas_src>

<mosaic_0001>
module attributes {stable_mosaic.version = 11 : i64} {
  func.func @_head_kernel(%arg0: memref<2x10xbf16, #tpu.memory_space<vmem>>, %arg1: memref<10x512xbf16, #tpu.memory_space<vmem>>, %arg2: memref<1x512xf32, #tpu.memory_space<vmem>>, %arg3: memref<512x2048xbf16, #tpu.memory_space<vmem>>, %arg4: memref<1x2048xf32, #tpu.memory_space<vmem>>, %arg5: memref<2x2048xf32, #tpu.memory_space<vmem>>) attributes {dimension_semantics = [], scalar_prefetch = 0 : i64, scratch_operands = 0 : i64, tpu.core_type = #tpu.core_type<tc>} {
    %c0 = arith.constant 0 : index
    %c0_0 = arith.constant 0 : index
    %0 = vector.load %arg0[%c0, %c0_0] : memref<2x10xbf16, #tpu.memory_space<vmem>>, vector<2x10xbf16>
    %c0_1 = arith.constant 0 : index
    %c0_2 = arith.constant 0 : index
    %1 = vector.load %arg1[%c0_1, %c0_2] : memref<10x512xbf16, #tpu.memory_space<vmem>>, vector<10x512xbf16>
    %cst = arith.constant dense<0.000000e+00> : vector<2x512xf32>
    %2 = tpu.matmul %0, %1, %cst {dimension_numbers = #tpu.dot_dimension_numbers<[1], [0], [0], [1], [0, 0, 1, 1], [], []>} : vector<2x10xbf16>, vector<10x512xbf16>, vector<2x512xf32> -> vector<2x512xf32>
    %c0_3 = arith.constant 0 : index
    %c0_4 = arith.constant 0 : index
    %3 = vector.load %arg2[%c0_3, %c0_4] : memref<1x512xf32, #tpu.memory_space<vmem>>, vector<1x512xf32>
    %4 = vector.broadcast %3 : vector<1x512xf32> to vector<2x512xf32>
    %5 = arith.addf %2, %4 : vector<2x512xf32>
    %6 = arith.truncf %5 : vector<2x512xf32> to vector<2x512xbf16>
    %c0_5 = arith.constant 0 : index
    %c0_6 = arith.constant 0 : index
    %7 = vector.load %arg3[%c0_5, %c0_6] : memref<512x2048xbf16, #tpu.memory_space<vmem>>, vector<512x2048xbf16>
    %cst_7 = arith.constant dense<0.000000e+00> : vector<2x2048xf32>
    %8 = tpu.matmul %6, %7, %cst_7 {dimension_numbers = #tpu.dot_dimension_numbers<[1], [0], [0], [1], [0, 0, 1, 1], [], []>} : vector<2x512xbf16>, vector<512x2048xbf16>, vector<2x2048xf32> -> vector<2x2048xf32>
    %c0_8 = arith.constant 0 : index
    %c0_9 = arith.constant 0 : index
    %9 = vector.load %arg4[%c0_8, %c0_9] : memref<1x2048xf32, #tpu.memory_space<vmem>>, vector<1x2048xf32>
    %10 = vector.broadcast %9 : vector<1x2048xf32> to vector<2x2048xf32>
    %11 = arith.addf %8, %10 : vector<2x2048xf32>
    %c0_10 = arith.constant 0 : index
    %c0_11 = arith.constant 0 : index
    %12 = vector.load %arg5[%c0_10, %c0_11] : memref<2x2048xf32, #tpu.memory_space<vmem>>, vector<2x2048xf32>
    tpu.vector_store %arg5[%c0_10, %c0_11], %11 {strides = array<i32>} : memref<2x2048xf32, #tpu.memory_space<vmem>>, vector<2x2048xf32>,
    return
  }
}

</mosaic_0001>

<llo_original>
// kernel: tpu_custom_call.1
$region0: #{tpu_custom_call.1}
  #allocation0 [shape = 'u32[]', space=smem, size = 0x4, offset = 0x4, fixed_abs, tag = 'smem constant byte address 0x4 - core index']
  #allocation1 [shape = 'u32[144,128]{1,0:T(1,128)}', space=vmem, size = 0x12000, scoped, tag = 'internal scratch']
  %s0 = inlined_call_operand.hbm [shape: bf16[2,10], index: 0, kind: input, shape index: {}]
  %s1 = inlined_call_operand.hbm [shape: bf16[10,512], index: 1, kind: input, shape index: {}]
  %s2 = inlined_call_operand.hbm [shape: f32[1,512], index: 2, kind: input, shape index: {}]
  %s3 = inlined_call_operand.hbm [shape: bf16[512,2048], index: 3, kind: input, shape index: {}]
  %s4 = inlined_call_operand.hbm [shape: f32[1,2048], index: 4, kind: input, shape index: {}]
  %s5 = inlined_call_operand.hbm [shape: f32[2,2048], index: 5, kind: output, shape index: {}]
  %s6 = sld [smem:[#allocation0]]
  $region50: #{tpu_custom_call.1} parent=0
    _
  %s8 = ssub.s32 1, %s6
  %s9 = scalar_select 0, %s8, %s6
  $region1: #{tpu_custom_call.1} parent=0
    #allocation2 [shape = 'u8[512]{0}', space=vmem, size = 0x400, scoped, tag = 'input window, operand 0, single buffered']
    #allocation3 [shape = 's32[1]{0}', space=sflag, size = 0x4, scoped, tag = 'scoped memory for tpu_custom_call.1']
    #allocation4 [shape = 's32[1]{0}', space=sflag, size = 0x4, scoped, tag = 'scoped memory for tpu_custom_call.1']
    #allocation5 [shape = 'u8[16384]{0}', space=vmem, size = 0x4000, scoped, tag = 'input window, operand 1, single buffered']
    #allocation6 [shape = 's32[1]{0}', space=sflag, size = 0x4, scoped, tag = 'scoped memory for tpu_custom_call.1']
    #allocation7 [shape = 'u8[2048]{0}', space=vmem, size = 0x800, scoped, tag = 'input window, operand 2, single buffered']
    #allocation8 [shape = 'u8[2097152]{0}', space=vmem, size = 0x200000, scoped, tag = 'input window, operand 3, single buffered']
    #allocation9 [shape = 's32[1]{0}', space=sflag, size = 0x4, scoped, tag = 'scoped memory for tpu_custom_call.1']
    #allocation10 [shape = 'u8[8192]{0}', space=vmem, size = 0x2000, scoped, tag = 'input window, operand 4, single buffered']
    #allocation11 [shape = 'u8[16384]{0}', space=vmem, size = 0x4000, scoped, tag = 'output window, operand 0, single buffered']
    %10 = vsyncpa [#allocation3], 0
    %11 = vsyncpa [#allocation6], 0
    %12 = vsyncpa [#allocation9], 0
    %13 = vsyncpa [#allocation4], 0
    // Predicated region
    $region2: #{tpu_custom_call.1} parent=1 // pred_check
      _
    $region3: #{tpu_custom_call.1} parent=1 // pred_check_branch
      %15 = sbr.rel (0) target = $region5
    $region4: #{tpu_custom_call.1} parent=1 // pred_region
      %s17 = ssub.s32 16, 16
      %18 = vsyncadd [#allocation3], %s17
      %s20 = sshll.u32 [#allocation2], 4
      %s21 = int_to_ptr.vmem [resolvable:$true] %s20
      %23 = dma.hbm_to_vmem [thread:$0]  %s0, 16, %s21, [#allocation3]
    $region5: #{tpu_custom_call.1} parent=1 // pred_fallthru
      _
    // Predicated region
    $region6: #{tpu_custom_call.1} parent=1 // pred_check
      _
    $region7: #{tpu_custom_call.1} parent=1 // pred_check_branch
      %25 = sbr.rel (0) target = $region9
    $region8: #{tpu_custom_call.1} parent=1 // pred_region
      %s27 = ssub.s32 512, 512
      %28 = vsyncadd [#allocation6], %s27
      %s29 = sshll.u32 [#allocation5], 4
      %s30 = int_to_ptr.vmem [resolvable:$true] %s29
      %35 = dma.hbm_to_vmem [thread:$0]  %s1, 512, %s30, [#allocation6], 256, 256, 16
    $region9: #{tpu_custom_call.1} parent=1 // pred_fallthru
      _
    // Predicated region
    $region10: #{tpu_custom_call.1} parent=1 // pred_check
      _
    $region11: #{tpu_custom_call.1} parent=1 // pred_check_branch
      %37 = sbr.rel (0) target = $region13
    $region12: #{tpu_custom_call.1} parent=1 // pred_region
      %s39 = ssub.s32 64, 64
      %40 = vsyncadd [#allocation6], %s39
      %s42 = sshll.u32 [#allocation7], 4
      %s43 = int_to_ptr.vmem [resolvable:$true] %s42
      %45 = dma.hbm_to_vmem [thread:$0]  %s2, 64, %s43, [#allocation6]
    $region13: #{tpu_custom_call.1} parent=1 // pred_fallthru
      _
    // Predicated region
    $region14: #{tpu_custom_call.1} parent=1 // pred_check
      _
    $region15: #{tpu_custom_call.1} parent=1 // pred_check_branch
      %47 = sbr.rel (0) target = $region17
    $region16: #{tpu_custom_call.1} parent=1 // pred_region
      %s49 = ssub.s32 65536, 65536
      %50 = vsyncadd [#allocation9], %s49
      %s51 = sshll.u32 [#allocation8], 4
      %s52 = int_to_ptr.vmem [resolvable:$true] %s51
      %57 = dma.hbm_to_vmem [thread:$0]  %s3, 65536, %s52, [#allocation9], 1024, 1024, 64
    $region17: #{tpu_custom_call.1} parent=1 // pred_fallthru
      _
    // Predicated region
    $region18: #{tpu_custom_call.1} parent=1 // pred_check
      _
    $region19: #{tpu_custom_call.1} parent=1 // pred_check_branch
      %59 = sbr.rel (0) target = $region21
    $region20: #{tpu_custom_call.1} parent=1 // pred_region
      %s61 = ssub.s32 256, 256
      %62 = vsyncadd [#allocation9], %s61
      %s64 = sshll.u32 [#allocation10], 4
      %s65 = int_to_ptr.vmem [resolvable:$true] %s64
      %67 = dma.hbm_to_vmem [thread:$0]  %s4, 256, %s65, [#allocation9]
    $region21: #{tpu_custom_call.1} parent=1 // pred_fallthru
      _
    // Predicated region
    $region22: #{tpu_custom_call.1} parent=1 // pred_check
      _
    $region23: #{tpu_custom_call.1} parent=1 // pred_check_branch
      %69 = sbr.rel (0) target = $region25
    $region24: #{tpu_custom_call.1} parent=1 // pred_region
      %70 = dma.done [#allocation3], 16
    $region25: #{tpu_custom_call.1} parent=1 // pred_fallthru
      _
    // Predicated region
    $region26: #{tpu_custom_call.1} parent=1 // pred_check
      _
    $region27: #{tpu_custom_call.1} parent=1 // pred_check_branch
      %72 = sbr.rel (0) target = $region29
    $region28: #{tpu_custom_call.1} parent=1 // pred_region
      %73 = dma.done [#allocation6], 512
    $region29: #{tpu_custom_call.1} parent=1 // pred_fallthru
      _
    // Predicated region
    $region30: #{tpu_custom_call.1} parent=1 // pred_check
      _
    $region31: #{tpu_custom_call.1} parent=1 // pred_check_branch
      %75 = sbr.rel (0) target = $region33
    $region32: #{tpu_custom_call.1} parent=1 // pred_region
      %76 = dma.done [#allocation6], 64
    $region33: #{tpu_custom_call.1} parent=1 // pred_fallthru
      _
    // Predicated region
    $region34: #{tpu_custom_call.1} parent=1 // pred_check
      _
    $region35: #{tpu_custom_call.1} parent=1 // pred_check_branch
      %78 = sbr.rel (0) target = $region37
    $region36: #{tpu_custom_call.1} parent=1 // pred_region
      %79 = dma.done [#allocation9], 65536
    $region37: #{tpu_custom_call.1} parent=1 // pred_fallthru
      _
    // Predicated region
    $region38: #{tpu_custom_call.1} parent=1 // pred_check
      _
    $region39: #{tpu_custom_call.1} parent=1 // pred_check_branch
      %81 = sbr.rel (0) target = $region41
    $region40: #{tpu_custom_call.1} parent=1 // pred_region
      %82 = dma.done [#allocation9], 256
    $region41: #{tpu_custom_call.1} parent=1 // pred_fallthru
      _
    %v84 = vld [vmem:[#allocation2] sm:$0x1]
    %v85 = vld [vmem:[#allocation5] sm:$0xff]
    %v86 = vld [vmem:[#allocation5 + $0x8] sm:$0xff]
    %v87 = vld [vmem:[#allocation5 + $0x10] sm:$0x11]
    %v88 = vld [vmem:[#allocation5 + $0x18] sm:$0x11]
    %v89 = vld [vmem:[#allocation7] sm:$0xf]
    %v91 = vlaneseq
    %v92 = vshrl.u32 %v91, 7
    %v93 = vsub.s32 0, %v92
    %v94 = vrot.slane %v89, %v93
    %v95 = vlaneseq
    %v96 = vshrl.u32 %v95, 7
    %v97 = vsub.s32 1, %v96
    %v98 = vrot.slane %v89, %v97
    %v99 = vlaneseq
    %v100 = vshrl.u32 %v99, 7
    %v101 = vsub.s32 2, %v100
    %v102 = vrot.slane %v89, %v101
    %v103 = vlaneseq
    %v104 = vshrl.u32 %v103, 7
    %v105 = vsub.s32 3, %v104
    %v106 = vrot.slane %v89, %v105
    %v115 = vunpack.c.l.b16 %v85
    %v116 = vunpack.c.h.b16 %v85
    %v117 = vunpack.c.l.b16 %v86
    %v118 = vunpack.c.h.b16 %v86
    %v119 = vunpack.c.l.b16 %v87
    %v120 = vunpack.c.h.b16 %v87
    %v121 = vunpack.c.l.b16 %v88
    %v122 = vunpack.c.h.b16 %v88
    %v123 = vpack.c.b16 %v119, %v115
    %v124 = vpack.c.b16 %v120, %v116
    %v125 = vpack.c.b16 %v121, %v117
    %v126 = vpack.c.b16 %v122, %v118
    %vm127 = vcmask 80896
    %v129 = vsel %vm127, %v84, 0
    %vm131 = vcmask 1044480
    %v133 = vsel %vm131, %v123, 0
    %v136 = vsel %vm131, %v124, 0
    %v139 = vsel %vm131, %v125, 0
    %v142 = vsel %vm131, %v126, 0
    %144 = vmatprep.subr.bf16.mxu0 %v136
    %145 = vmatpush1.bf16.msra.mxu0 %v133
    %146 = vmatprep.subr.bf16.mxu0 0
    %147 = vmatpush1.bf16.msra.mxu0 0
    %148 = vmatprep.subr.bf16.mxu0 0
    %149 = vmatpush1.bf16.msra.mxu0 0
    %150 = vmatprep.subr.bf16.mxu0 0
    %151 = vmatpush1.bf16.msra.mxu0 0
    %152 = vmatprep.subr.bf16.mxu0 0
    %153 = vmatpush1.bf16.msra.mxu0 0
    %154 = vmatprep.subr.bf16.mxu0 0
    %155 = vmatpush1.bf16.msra.mxu0 0
    %156 = vmatprep.subr.bf16.mxu0 0
    %157 = vmatpush1.bf16.msra.mxu0 0
    %158 = vmatprep.subr.bf16.mxu0 0
    %159 = vmatpush1.bf16.msra.mxu0 0
    %160 = vmatprep.subr.bf16.mxu0 0
    %161 = vmatpush1.bf16.msra.mxu0 0
    %162 = vmatprep.subr.bf16.mxu0 0
    %163 = vmatpush1.bf16.msra.mxu0 0
    %164 = vmatprep.subr.bf16.mxu0 0
    %165 = vmatpush1.bf16.msra.mxu0 0
    %166 = vmatprep.subr.bf16.mxu0 0
    %167 = vmatpush1.bf16.msra.mxu0 0
    %168 = vmatprep.subr.bf16.mxu0 0
    %169 = vmatpush1.bf16.msra.mxu0 0
    %170 = vmatprep.subr.bf16.mxu0 0
    %171 = vmatpush1.bf16.msra.mxu0 0
    %172 = vmatprep.subr.bf16.mxu0 0
    %173 = vmatpush1.bf16.msra.mxu0 0
    %174 = vmatprep.subr.bf16.mxu0 0
    %175 = vmatpush1.bf16.msra.mxu0 0
    %176 = vmatprep.mubr.bf16.mxu0 0
    %177 = vmatmul.mubr.bf16.gmra.mrb[0].mxu0 %v129
    %v178 = vpop.f32.mrb[0].mxu0
    %v179 = vadd.f32 %v94, %v178
    %v180 = vpop.f32.mrb[0].mxu0
    %v181 = vadd.f32 %v98, %v180
    %v182 = vpop.f32.mrb[0].mxu0
    %v183 = vpop.f32.mrb[0].mxu0
    %184 = vdwg.mxu0
    %185 = vmatprep.subr.bf16.mxu0 %v142
    %186 = vmatpush1.bf16.msra.mxu0 %v139
    %187 = vmatprep.subr.bf16.mxu0 0
    %188 = vmatpush1.bf16.msra.mxu0 0
    %189 = vmatprep.subr.bf16.mxu0 0
    %190 = vmatpush1.bf16.msra.mxu0 0
    %191 = vmatprep.subr.bf16.mxu0 0
    %192 = vmatpush1.bf16.msra.mxu0 0
    %193 = vmatprep.subr.bf16.mxu0 0
    %194 = vmatpush1.bf16.msra.mxu0 0
    %195 = vmatprep.subr.bf16.mxu0 0
    %196 = vmatpush1.bf16.msra.mxu0 0
    %197 = vmatprep.subr.bf16.mxu0 0
    %198 = vmatpush1.bf16.msra.mxu0 0
    %199 = vmatprep.subr.bf16.mxu0 0
    %200 = vmatpush1.bf16.msra.mxu0 0
    %201 = vmatprep.subr.bf16.mxu0 0
    %202 = vmatpush1.bf16.msra.mxu0 0
    %203 = vmatprep.subr.bf16.mxu0 0
    %204 = vmatpush1.bf16.msra.mxu0 0
    %205 = vmatprep.subr.bf16.mxu0 0
    %206 = vmatpush1.bf16.msra.mxu0 0
    %207 = vmatprep.subr.bf16.mxu0 0
    %208 = vmatpush1.bf16.msra.mxu0 0
    %209 = vmatprep.subr.bf16.mxu0 0
    %210 = vmatpush1.bf16.msra.mxu0 0
    %211 = vmatprep.subr.bf16.mxu0 0
    %212 = vmatpush1.bf16.msra.mxu0 0
    %213 = vmatprep.subr.bf16.mxu0 0
    %214 = vmatpush1.bf16.msra.mxu0 0
    %215 = vmatprep.subr.bf16.mxu0 0
    %216 = vmatpush1.bf16.msra.mxu0 0
    %217 = vmatprep.mubr.bf16.mxu0 0
    %218 = vmatmul.mubr.bf16.gmra.mrb[0].mxu0 %v129
    %v219 = vpop.f32.mrb[0].mxu0
    %v220 = vadd.f32 %v102, %v219
    %v221 = vpop.f32.mrb[0].mxu0
    %v222 = vadd.f32 %v106, %v221
    %v223 = vpop.f32.mrb[0].mxu0
    %v224 = vpop.f32.mrb[0].mxu0
    %225 = vdwg.mxu0
    %v226 = vpack.c.bf16 %v179, %v179
    %v227 = vpack.c.bf16 %v181, %v181
    %v228 = vpack.c.bf16 %v220, %v220
    %v229 = vpack.c.bf16 %v222, %v222
    %v230 = vld [vmem:[#allocation8] sm:$0xff]
    %v231 = vld [vmem:[#allocation8 + $0x8] sm:$0xff]
    %v232 = vld [vmem:[#allocation8 + $0x10] sm:$0xff]
    %v233 = vld [vmem:[#allocation8 + $0x18] sm:$0xff]
    %v234 = vld [vmem:[#allocation8 + $0x20] sm:$0xff]
    %v235 = vld [vmem:[#allocation8 + $0x28] sm:$0xff]
    %v236 = vld [vmem:[#allocation8 + $0x30] sm:$0xff]
    %v237 = vld [vmem:[#allocation8 + $0x38] sm:$0xff]
    %v238 = vld [vmem:[#allocation8 + $0x40] sm:$0xff]
    %v239 = vld [vmem:[#allocation8 + $0x48] sm:$0xff]
    %v240 = vld [vmem:[#allocation8 + $0x50] sm:$0xff]
    %v241 = vld [vmem:[#allocation8 + $0x58] sm:$0xff]
    %v242 = vld [vmem:[#allocation8 + $0x60] sm:$0xff]
    %v243 = vld [vmem:[#allocation8 + $0x68] sm:$0xff]
    %v244 = vld [vmem:[#allocation8 + $0x70] sm:$0xff]
    %v245 = vld [vmem:[#allocation8 + $0x78] sm:$0xff]
    %v246 = vld [vmem:[#allocation8 + $0x80] sm:$0xff]
    %v247 = vld [vmem:[#allocation8 + $0x88] sm:$0xff]
    %v248 = vld [vmem:[#allocation8 + $0x90] sm:$0xff]
    %v249 = vld [vmem:[#allocation8 + $0x98] sm:$0xff]
    %v250 = vld [vmem:[#allocation8 + $0xa0] sm:$0xff]
    %v251 = vld [vmem:[#allocation8 + $0xa8] sm:$0xff]
    %v252 = vld [vmem:[#allocation8 + $0xb0] sm:$0xff]
    %v253 = vld [vmem:[#allocation8 + $0xb8] sm:$0xff]
    %v254 = vld [vmem:[#allocation8 + $0xc0] sm:$0xff]
    %v255 = vld [vmem:[#allocation8 + $0xc8] sm:$0xff]
    %v256 = vld [vmem:[#allocation8 + $0xd0] sm:$0xff]
    %v257 = vld [vmem:[#allocation8 + $0xd8] sm:$0xff]
    %v258 = vld [vmem:[#allocation8 + $0xe0] sm:$0xff]
    %v259 = vld [vmem:[#allocation8 + $0xe8] sm:$0xff]
    %v260 = vld [vmem:[#allocation8 + $0xf0] sm:$0xff]
    %v261 = vld [vmem:[#allocation8 + $0xf8] sm:$0xff]
    %v262 = vld [vmem:[#allocation8 + $0x100] sm:$0xff]
    %v263 = vld [vmem:[#allocation8 + $0x108] sm:$0xff]
    %v264 = vld [vmem:[#allocation8 + $0x110] sm:$0xff]
    %v265 = vld [vmem:[#allocation8 + $0x118] sm:$0xff]
    %v266 = vld [vmem:[#allocation8 + $0x120] sm:$0xff]
    %v267 = vld [vmem:[#allocation8 + $0x128] sm:$0xff]
    %v268 = vld [vmem:[#allocation8 + $0x130] sm:$0xff]
    %v269 = vld [vmem:[#allocation8 + $0x138] sm:$0xff]
    %v270 = vld [vmem:[#allocation8 + $0x140] sm:$0xff]
    %v271 = vld [vmem:[#allocation8 + $0x148] sm:$0xff]
    %v272 = vld [vmem:[#allocation8 + $0x150] sm:$0xff]
    %v273 = vld [vmem:[#allocation8 + $0x158] sm:$0xff]
    %v274 = vld [vmem:[#allocation8 + $0x160] sm:$0xff]
    %v275 = vld [vmem:[#allocation8 + $0x168] sm:$0xff]
    %v276 = vld [vmem:[#allocation8 + $0x170] sm:$0xff]
    %v277 = vld [vmem:[#allocation8 + $0x178] sm:$0xff]
    %v278 = vld [vmem:[#allocation8 + $0x180] sm:$0xff]
    %v279 = vld [vmem:[#allocation8 + $0x188] sm:$0xff]
    %v280 = vld [vmem:[#allocation8 + $0x190] sm:$0xff]
    %v281 = vld [vmem:[#allocation8 + $0x198] sm:$0xff]
    %v282 = vld [vmem:[#allocation8 + $0x1a0] sm:$0xff]
    %v283 = vld [vmem:[#allocation8 + $0x1a8] sm:$0xff]
    %v284 = vld [vmem:[#allocation8 + $0x1b0] sm:$0xff]
    %v285 = vld [vmem:[#allocation8 + $0x1b8] sm:$0xff]
    %v286 = vld [vmem:[#allocation8 + $0x1c0] sm:$0xff]
    %v287 = vld [vmem:[#allocation8 + $0x1c8] sm:$0xff]
    %v288 = vld [vmem:[#allocation8 + $0x1d0] sm:$0xff]
    %v289 = vld [vmem:[#allocation8 + $0x1d8] sm:$0xff]
    %v290 = vld [vmem:[#allocation8 + $0x1e0] sm:$0xff]
    %v291 = vld [vmem:[#allocation8 + $0x1e8] sm:$0xff]
    %v292 = vld [vmem:[#allocation8 + $0x1f0] sm:$0xff]
    %v293 = vld [vmem:[#allocation8 + $0x1f8] sm:$0xff]
    %v294 = vld [vmem:[#allocation8 + $0x200] sm:$0xff]
    %v295 = vld [vmem:[#allocation8 + $0x208] sm:$0xff]
    %v296 = vld [vmem:[#allocation8 + $0x210] sm:$0xff]
    %v297 = vld [vmem:[#allocation8 + $0x218] sm:$0xff]
    %v298 = vld [vmem:[#allocation8 + $0x220] sm:$0xff]
    %v299 = vld [vmem:[#allocation8 + $0x228] sm:$0xff]
    %v300 = vld [vmem:[#allocation8 + $0x230] sm:$0xff]
    %v301 = vld [vmem:[#allocation8 + $0x238] sm:$0xff]
    %v302 = vld [vmem:[#allocation8 + $0x240] sm:$0xff]
    %v303 = vld [vmem:[#allocation8 + $0x248] sm:$0xff]
    %v304 = vld [vmem:[#allocation8 + $0x250] sm:$0xff]
    %v305 = vld [vmem:[#allocation8 + $0x258] sm:$0xff]
    %v306 = vld [vmem:[#allocation8 + $0x260] sm:$0xff]
    %v307 = vld [vmem:[#allocation8 + $0x268] sm:$0xff]
    %v308 = vld [vmem:[#allocation8 + $0x270] sm:$0xff]
    %v309 = vld [vmem:[#allocation8 + $0x278] sm:$0xff]
    %v310 = vld [vmem:[#allocation8 + $0x280] sm:$0xff]
    %v311 = vld [vmem:[#allocation8 + $0x288] sm:$0xff]
    %v312 = vld [vmem:[#allocation8 + $0x290] sm:$0xff]
    %v313 = vld [vmem:[#allocation8 + $0x298] sm:$0xff]
    %v314 = vld [vmem:[#allocation8 + $0x2a0] sm:$0xff]
    %v315 = vld [vmem:[#allocation8 + $0x2a8] sm:$0xff]
    %v316 = vld [vmem:[#allocation8 + $0x2b0] sm:$0xff]
    %v317 = vld [vmem:[#allocation8 + $0x2b8] sm:$0xff]
    %v318 = vld [vmem:[#allocation8 + $0x2c0] sm:$0xff]
    %v319 = vld [vmem:[#allocation8 + $0x2c8] sm:$0xff]
    %v320 = vld [vmem:[#allocation8 + $0x2d0] sm:$0xff]
    %v321 = vld [vmem:[#allocation8 + $0x2d8] sm:$0xff]
    %v322 = vld [vmem:[#allocation8 + $0x2e0] sm:$0xff]
    %v323 = vld [vmem:[#allocation8 + $0x2e8] sm:$0xff]
    %v324 = vld [vmem:[#allocation8 + $0x2f0] sm:$0xff]
    %v325 = vld [vmem:[#allocation8 + $0x2f8] sm:$0xff]
    %v326 = vld [vmem:[#allocation8 + $0x300] sm:$0xff]
    %v327 = vld [vmem:[#allocation8 + $0x308] sm:$0xff]
    %v328 = vld [vmem:[#allocation8 + $0x310] sm:$0xff]
    %v329 = vld [vmem:[#allocation8 + $0x318] sm:$0xff]
    %v330 = vld [vmem:[#allocation8 + $0x320] sm:$0xff]
    %v331 = vld [vmem:[#allocation8 + $0x328] sm:$0xff]
    %v332 = vld [vmem:[#allocation8 + $0x330] sm:$0xff]
    %v333 = vld [vmem:[#allocation8 + $0x338] sm:$0xff]
    %v334 = vld [vmem:[#allocation8 + $0x340] sm:$0xff]
    %v335 = vld [vmem:[#allocation8 + $0x348] sm:$0xff]
    %v336 = vld [vmem:[#allocation8 + $0x350] sm:$0xff]
    %v337 = vld [vmem:[#allocation8 + $0x358] sm:$0xff]
    %v338 = vld [vmem:[#allocation8 + $0x360] sm:$0xff]
    %v339 = vld [vmem:[#allocation8 + $0x368] sm:$0xff]
    %v340 = vld [vmem:[#allocation8 + $0x370] sm:$0xff]
    %v341 = vld [vmem:[#allocation8 + $0x378] sm:$0xff]
    %v342 = vld [vmem:[#allocation8 + $0x380] sm:$0xff]
    %v343 = vld [vmem:[#allocation8 + $0x388] sm:$0xff]
    %v344 = vld [vmem:[#allocation8 + $0x390] sm:$0xff]
    %v345 = vld [vmem:[#allocation8 + $0x398] sm:$0xff]
    %v346 = vld [vmem:[#allocation8 + $0x3a0] sm:$0xff]
    %v347 = vld [vmem:[#allocation8 + $0x3a8] sm:$0xff]
    %v348 = vld [vmem:[#allocation8 + $0x3b0] sm:$0xff]
    %v349 = vld [vmem:[#allocation8 + $0x3b8] sm:$0xff]
    %v350 = vld [vmem:[#allocation8 + $0x3c0] sm:$0xff]
    %v351 = vld [vmem:[#allocation8 + $0x3c8] sm:$0xff]
    %v352 = vld [vmem:[#allocation8 + $0x3d0] sm:$0xff]
    %v353 = vld [vmem:[#allocation8 + $0x3d8] sm:$0xff]
    %v354 = vld [vmem:[#allocation8 + $0x3e0] sm:$0xff]
    %v355 = vld [vmem:[#allocation8 + $0x3e8] sm:$0xff]
    %v356 = vld [vmem:[#allocation8 + $0x3f0] sm:$0xff]
    %v357 = vld [vmem:[#allocation8 + $0x3f8] sm:$0xff]
    %v358 = vld [vmem:[#allocation8 + $0x400] sm:$0xff]
    %v359 = vld [vmem:[#allocation8 + $0x408] sm:$0xff]
    %v360 = vld [vmem:[#allocation8 + $0x410] sm:$0xff]
    %v361 = vld [vmem:[#allocation8 + $0x418] sm:$0xff]
    %v362 = vld [vmem:[#allocation8 + $0x420] sm:$0xff]
    %v363 = vld [vmem:[#allocation8 + $0x428] sm:$0xff]
    %v364 = vld [vmem:[#allocation8 + $0x430] sm:$0xff]
    %v365 = vld [vmem:[#allocation8 + $0x438] sm:$0xff]
    %v366 = vld [vmem:[#allocation8 + $0x440] sm:$0xff]
    %v367 = vld [vmem:[#allocation8 + $0x448] sm:$0xff]
    %v368 = vld [vmem:[#allocation8 + $0x450] sm:$0xff]
    %v369 = vld [vmem:[#allocation8 + $0x458] sm:$0xff]
    %v370 = vld [vmem:[#allocation8 + $0x460] sm:$0xff]
    %v371 = vld [vmem:[#allocation8 + $0x468] sm:$0xff]
    %v372 = vld [vmem:[#allocation8 + $0x470] sm:$0xff]
    %v373 = vld [vmem:[#allocation8 + $0x478] sm:$0xff]
    %v374 = vld [vmem:[#allocation8 + $0x480] sm:$0xff]
    %v375 = vld [vmem:[#allocation8 + $0x488] sm:$0xff]
    %v376 = vld [vmem:[#allocation8 + $0x490] sm:$0xff]
    %v377 = vld [vmem:[#allocation8 + $0x498] sm:$0xff]
    %v378 = vld [vmem:[#allocation8 + $0x4a0] sm:$0xff]
    %v379 = vld [vmem:[#allocation8 + $0x4a8] sm:$0xff]
    %v380 = vld [vmem:[#allocation8 + $0x4b0] sm:$0xff]
    %v381 = vld [vmem:[#allocation8 + $0x4b8] sm:$0xff]
    %v382 = vld [vmem:[#allocation8 + $0x4c0] sm:$0xff]
    %v383 = vld [vmem:[#allocation8 + $0x4c8] sm:$0xff]
    %v384 = vld [vmem:[#allocation8 + $0x4d0] sm:$0xff]
    %v385 = vld [vmem:[#allocation8 + $0x4d8] sm:$0xff]
    %v386 = vld [vmem:[#allocation8 + $0x4e0] sm:$0xff]
    %v387 = vld [vmem:[#allocation8 + $0x4e8] sm:$0xff]
    %v388 = vld [vmem:[#allocation8 + $0x4f0] sm:$0xff]
    %v389 = vld [vmem:[#allocation8 + $0x4f8] sm:$0xff]
    %v390 = vld [vmem:[#allocation8 + $0x500] sm:$0xff]
    %v391 = vld [vmem:[#allocation8 + $0x508] sm:$0xff]
    %v392 = vld [vmem:[#allocation8 + $0x510] sm:$0xff]
    %v393 = vld [vmem:[#allocation8 + $0x518] sm:$0xff]
    %v394 = vld [vmem:[#allocation8 + $0x520] sm:$0xff]
    %v395 = vld [vmem:[#allocation8 + $0x528] sm:$0xff]
    %v396 = vld [vmem:[#allocation8 + $0x530] sm:$0xff]
    %v397 = vld [vmem:[#allocation8 + $0x538] sm:$0xff]
    %v398 = vld [vmem:[#allocation8 + $0x540] sm:$0xff]
    %v399 = vld [vmem:[#allocation8 + $0x548] sm:$0xff]
    %v400 = vld [vmem:[#allocation8 + $0x550] sm:$0xff]
    %v401 = vld [vmem:[#allocation8 + $0x558] sm:$0xff]
    %v402 = vld [vmem:[#allocation8 + $0x560] sm:$0xff]
    %v403 = vld [vmem:[#allocation8 + $0x568] sm:$0xff]
    %v404 = vld [vmem:[#allocation8 + $0x570] sm:$0xff]
    %v405 = vld [vmem:[#allocation8 + $0x578] sm:$0xff]
    %v406 = vld [vmem:[#allocation8 + $0x580] sm:$0xff]
    %v407 = vld [vmem:[#allocation8 + $0x588] sm:$0xff]
    %v408 = vld [vmem:[#allocation8 + $0x590] sm:$0xff]
    %v409 = vld [vmem:[#allocation8 + $0x598] sm:$0xff]
    %v410 = vld [vmem:[#allocation8 + $0x5a0] sm:$0xff]
    %v411 = vld [vmem:[#allocation8 + $0x5a8] sm:$0xff]
    %v412 = vld [vmem:[#allocation8 + $0x5b0] sm:$0xff]
    %v413 = vld [vmem:[#allocation8 + $0x5b8] sm:$0xff]
    %v414 = vld [vmem:[#allocation8 + $0x5c0] sm:$0xff]
    %v415 = vld [vmem:[#allocation8 + $0x5c8] sm:$0xff]
    %v416 = vld [vmem:[#allocation8 + $0x5d0] sm:$0xff]
    %v417 = vld [vmem:[#allocation8 + $0x5d8] sm:$0xff]
    %v418 = vld [vmem:[#allocation8 + $0x5e0] sm:$0xff]
    %v419 = vld [vmem:[#allocation8 + $0x5e8] sm:$0xff]
    %v420 = vld [vmem:[#allocation8 + $0x5f0] sm:$0xff]
    %v421 = vld [vmem:[#allocation8 + $0x5f8] sm:$0xff]
    %v422 = vld [vmem:[#allocation8 + $0x600] sm:$0xff]
    %v423 = vld [vmem:[#allocation8 + $0x608] sm:$0xff]
    %v424 = vld [vmem:[#allocation8 + $0x610] sm:$0xff]
    %v425 = vld [vmem:[#allocation8 + $0x618] sm:$0xff]
    %v426 = vld [vmem:[#allocation8 + $0x620] sm:$0xff]
    %v427 = vld [vmem:[#allocation8 + $0x628] sm:$0xff]
    %v428 = vld [vmem:[#allocation8 + $0x630] sm:$0xff]
    %v429 = vld [vmem:[#allocation8 + $0x638] sm:$0xff]
    %v430 = vld [vmem:[#allocation8 + $0x640] sm:$0xff]
    %v431 = vld [vmem:[#allocation8 + $0x648] sm:$0xff]
    %v432 = vld [vmem:[#allocation8 + $0x650] sm:$0xff]
    %v433 = vld [vmem:[#allocation8 + $0x658] sm:$0xff]
    %v434 = vld [vmem:[#allocation8 + $0x660] sm:$0xff]
    %v435 = vld [vmem:[#allocation8 + $0x668] sm:$0xff]
    %v436 = vld [vmem:[#allocation8 + $0x670] sm:$0xff]
    %v437 = vld [vmem:[#allocation8 + $0x678] sm:$0xff]
    %v438 = vld [vmem:[#allocation8 + $0x680] sm:$0xff]
    %v439 = vld [vmem:[#allocation8 + $0x688] sm:$0xff]
    %v440 = vld [vmem:[#allocation8 + $0x690] sm:$0xff]
    %v441 = vld [vmem:[#allocation8 + $0x698] sm:$0xff]
    %v442 = vld [vmem:[#allocation8 + $0x6a0] sm:$0xff]
    %v443 = vld [vmem:[#allocation8 + $0x6a8] sm:$0xff]
    %v444 = vld [vmem:[#allocation8 + $0x6b0] sm:$0xff]
    %v445 = vld [vmem:[#allocation8 + $0x6b8] sm:$0xff]
    %v446 = vld [vmem:[#allocation8 + $0x6c0] sm:$0xff]
    %v447 = vld [vmem:[#allocation8 + $0x6c8] sm:$0xff]
    %v448 = vld [vmem:[#allocation8 + $0x6d0] sm:$0xff]
    %v449 = vld [vmem:[#allocation8 + $0x6d8] sm:$0xff]
    %v450 = vld [vmem:[#allocation8 + $0x6e0] sm:$0xff]
    %v451 = vld [vmem:[#allocation8 + $0x6e8] sm:$0xff]
    %v452 = vld [vmem:[#allocation8 + $0x6f0] sm:$0xff]
    %v453 = vld [vmem:[#allocation8 + $0x6f8] sm:$0xff]
    %v454 = vld [vmem:[#allocation8 + $0x700] sm:$0xff]
    %v455 = vld [vmem:[#allocation8 + $0x708] sm:$0xff]
    %v456 = vld [vmem:[#allocation8 + $0x710] sm:$0xff]
    %v457 = vld [vmem:[#allocation8 + $0x718] sm:$0xff]
    %v458 = vld [vmem:[#allocation8 + $0x720] sm:$0xff]
    %v459 = vld [vmem:[#allocation8 + $0x728] sm:$0xff]
    %v460 = vld [vmem:[#allocation8 + $0x730] sm:$0xff]
    %v461 = vld [vmem:[#allocation8 + $0x738] sm:$0xff]
    %v462 = vld [vmem:[#allocation8 + $0x740] sm:$0xff]
    %v463 = vld [vmem:[#allocation8 + $0x748] sm:$0xff]
    %v464 = vld [vmem:[#allocation8 + $0x750] sm:$0xff]
    %v465 = vld [vmem:[#allocation8 + $0x758] sm:$0xff]
    %v466 = vld [vmem:[#allocation8 + $0x760] sm:$0xff]
    %v467 = vld [vmem:[#allocation8 + $0x768] sm:$0xff]
    %v468 = vld [vmem:[#allocation8 + $0x770] sm:$0xff]
    %v469 = vld [vmem:[#allocation8 + $0x778] sm:$0xff]
    %v470 = vld [vmem:[#allocation8 + $0x780] sm:$0xff]
    %v471 = vld [vmem:[#allocation8 + $0x788] sm:$0xff]
    %v472 = vld [vmem:[#allocation8 + $0x790] sm:$0xff]
    %v473 = vld [vmem:[#allocation8 + $0x798] sm:$0xff]
    %v474 = vld [vmem:[#allocation8 + $0x7a0] sm:$0xff]
    %v475 = vld [vmem:[#allocation8 + $0x7a8] sm:$0xff]
    %v476 = vld [vmem:[#allocation8 + $0x7b0] sm:$0xff]
    %v477 = vld [vmem:[#allocation8 + $0x7b8] sm:$0xff]
    %v478 = vld [vmem:[#allocation8 + $0x7c0] sm:$0xff]
    %v479 = vld [vmem:[#allocation8 + $0x7c8] sm:$0xff]
    %v480 = vld [vmem:[#allocation8 + $0x7d0] sm:$0xff]
    %v481 = vld [vmem:[#allocation8 + $0x7d8] sm:$0xff]
    %v482 = vld [vmem:[#allocation8 + $0x7e0] sm:$0xff]
    %v483 = vld [vmem:[#allocation8 + $0x7e8] sm:$0xff]
    %v484 = vld [vmem:[#allocation8 + $0x7f0] sm:$0xff]
    %v485 = vld [vmem:[#allocation8 + $0x7f8] sm:$0xff]
    %v486 = vld [vmem:[#allocation8 + $0x800] sm:$0xff]
    %v487 = vld [vmem:[#allocation8 + $0x808] sm:$0xff]
    %v488 = vld [vmem:[#allocation8 + $0x810] sm:$0xff]
    %v489 = vld [vmem:[#allocation8 + $0x818] sm:$0xff]
    %v490 = vld [vmem:[#allocation8 + $0x820] sm:$0xff]
    %v491 = vld [vmem:[#allocation8 + $0x828] sm:$0xff]
    %v492 = vld [vmem:[#allocation8 + $0x830] sm:$0xff]
    %v493 = vld [vmem:[#allocation8 + $0x838] sm:$0xff]
    %v494 = vld [vmem:[#allocation8 + $0x840] sm:$0xff]
    %v495 = vld [vmem:[#allocation8 + $0x848] sm:$0xff]
    %v496 = vld [vmem:[#allocation8 + $0x850] sm:$0xff]
    %v497 = vld [vmem:[#allocation8 + $0x858] sm:$0xff]
    %v498 = vld [vmem:[#allocation8 + $0x860] sm:$0xff]
    %v499 = vld [vmem:[#allocation8 + $0x868] sm:$0xff]
    %v500 = vld [vmem:[#allocation8 + $0x870] sm:$0xff]
    %v501 = vld [vmem:[#allocation8 + $0x878] sm:$0xff]
    %v502 = vld [vmem:[#allocation8 + $0x880] sm:$0xff]
    %v503 = vld [vmem:[#allocation8 + $0x888] sm:$0xff]
    %v504 = vld [vmem:[#allocation8 + $0x890] sm:$0xff]
    %v505 = vld [vmem:[#allocation8 + $0x898] sm:$0xff]
    %v506 = vld [vmem:[#allocation8 + $0x8a0] sm:$0xff]
    %v507 = vld [vmem:[#allocation8 + $0x8a8] sm:$0xff]
    %v508 = vld [vmem:[#allocation8 + $0x8b0] sm:$0xff]
    %v509 = vld [vmem:[#allocation8 + $0x8b8] sm:$0xff]
    %v510 = vld [vmem:[#allocation8 + $0x8c0] sm:$0xff]
    %v511 = vld [vmem:[#allocation8 + $0x8c8] sm:$0xff]
    %v512 = vld [vmem:[#allocation8 + $0x8d0] sm:$0xff]
    %v513 = vld [vmem:[#allocation8 + $0x8d8] sm:$0xff]
    %v514 = vld [vmem:[#allocation8 + $0x8e0] sm:$0xff]
    %v515 = vld [vmem:[#allocation8 + $0x8e8] sm:$0xff]
    %v516 = vld [vmem:[#allocation8 + $0x8f0] sm:$0xff]
    %v517 = vld [vmem:[#allocation8 + $0x8f8] sm:$0xff]
    %v518 = vld [vmem:[#allocation8 + $0x900] sm:$0xff]
    %v519 = vld [vmem:[#allocation8 + $0x908] sm:$0xff]
    %v520 = vld [vmem:[#allocation8 + $0x910] sm:$0xff]
    %v521 = vld [vmem:[#allocation8 + $0x918] sm:$0xff]
    %v522 = vld [vmem:[#allocation8 + $0x920] sm:$0xff]
    %v523 = vld [vmem:[#allocation8 + $0x928] sm:$0xff]
    %v524 = vld [vmem:[#allocation8 + $0x930] sm:$0xff]
    %v525 = vld [vmem:[#allocation8 + $0x938] sm:$0xff]
    %v526 = vld [vmem:[#allocation8 + $0x940] sm:$0xff]
    %v527 = vld [vmem:[#allocation8 + $0x948] sm:$0xff]
    %v528 = vld [vmem:[#allocation8 + $0x950] sm:$0xff]
    %v529 = vld [vmem:[#allocation8 + $0x958] sm:$0xff]
    %v530 = vld [vmem:[#allocation8 + $0x960] sm:$0xff]
    %v531 = vld [vmem:[#allocation8 + $0x968] sm:$0xff]
    %v532 = vld [vmem:[#allocation8 + $0x970] sm:$0xff]
    %v533 = vld [vmem:[#allocation8 + $0x978] sm:$0xff]
    %v534 = vld [vmem:[#allocation8 + $0x980] sm:$0xff]
    %v535 = vld [vmem:[#allocation8 + $0x988] sm:$0xff]
    %v536 = vld [vmem:[#allocation8 + $0x990] sm:$0xff]
    %v537 = vld [vmem:[#allocation8 + $0x998] sm:$0xff]
    %v538 = vld [vmem:[#allocation8 + $0x9a0] sm:$0xff]
    %v539 = vld [vmem:[#allocation8 + $0x9a8] sm:$0xff]
    %v540 = vld [vmem:[#allocation8 + $0x9b0] sm:$0xff]
    %v541 = vld [vmem:[#allocation8 + $0x9b8] sm:$0xff]
    %v542 = vld [vmem:[#allocation8 + $0x9c0] sm:$0xff]
    %v543 = vld [vmem:[#allocation8 + $0x9c8] sm:$0xff]
    %v544 = vld [vmem:[#allocation8 + $0x9d0] sm:$0xff]
    %v545 = vld [vmem:[#allocation8 + $0x9d8] sm:$0xff]
    %v546 = vld [vmem:[#allocation8 + $0x9e0] sm:$0xff]
    %v547 = vld [vmem:[#allocation8 + $0x9e8] sm:$0xff]
    %v548 = vld [vmem:[#allocation8 + $0x9f0] sm:$0xff]
    %v549 = vld [vmem:[#allocation8 + $0x9f8] sm:$0xff]
    %v550 = vld [vmem:[#allocation8 + $0xa00] sm:$0xff]
    %v551 = vld [vmem:[#allocation8 + $0xa08] sm:$0xff]
    %v552 = vld [vmem:[#allocation8 + $0xa10] sm:$0xff]
    %v553 = vld [vmem:[#allocation8 + $0xa18] sm:$0xff]
    %v554 = vld [vmem:[#allocation8 + $0xa20] sm:$0xff]
    %v555 = vld [vmem:[#allocation8 + $0xa28] sm:$0xff]
    %v556 = vld [vmem:[#allocation8 + $0xa30] sm:$0xff]
    %v557 = vld [vmem:[#allocation8 + $0xa38] sm:$0xff]
    %v558 = vld [vmem:[#allocation8 + $0xa40] sm:$0xff]
    %v559 = vld [vmem:[#allocation8 + $0xa48] sm:$0xff]
    %v560 = vld [vmem:[#allocation8 + $0xa50] sm:$0xff]
    %v561 = vld [vmem:[#allocation8 + $0xa58] sm:$0xff]
    %v562 = vld [vmem:[#allocation8 + $0xa60] sm:$0xff]
    %v563 = vld [vmem:[#allocation8 + $0xa68] sm:$0xff]
    %v564 = vld [vmem:[#allocation8 + $0xa70] sm:$0xff]
    %v565 = vld [vmem:[#allocation8 + $0xa78] sm:$0xff]
    %v566 = vld [vmem:[#allocation8 + $0xa80] sm:$0xff]
    %v567 = vld [vmem:[#allocation8 + $0xa88] sm:$0xff]
    %v568 = vld [vmem:[#allocation8 + $0xa90] sm:$0xff]
    %v569 = vld [vmem:[#allocation8 + $0xa98] sm:$0xff]
    %v570 = vld [vmem:[#allocation8 + $0xaa0] sm:$0xff]
    %v571 = vld [vmem:[#allocation8 + $0xaa8] sm:$0xff]
    %v572 = vld [vmem:[#allocation8 + $0xab0] sm:$0xff]
    %v573 = vld [vmem:[#allocation8 + $0xab8] sm:$0xff]
    %v574 = vld [vmem:[#allocation8 + $0xac0] sm:$0xff]
    %v575 = vld [vmem:[#allocation8 + $0xac8] sm:$0xff]
    %v576 = vld [vmem:[#allocation8 + $0xad0] sm:$0xff]
    %v577 = vld [vmem:[#allocation8 + $0xad8] sm:$0xff]
    %v578 = vld [vmem:[#allocation8 + $0xae0] sm:$0xff]
    %v579 = vld [vmem:[#allocation8 + $0xae8] sm:$0xff]
    %v580 = vld [vmem:[#allocation8 + $0xaf0] sm:$0xff]
    %v581 = vld [vmem:[#allocation8 + $0xaf8] sm:$0xff]
    %v582 = vld [vmem:[#allocation8 + $0xb00] sm:$0xff]
    %v583 = vld [vmem:[#allocation8 + $0xb08] sm:$0xff]
    %v584 = vld [vmem:[#allocation8 + $0xb10] sm:$0xff]
    %v585 = vld [vmem:[#allocation8 + $0xb18] sm:$0xff]
    %v586 = vld [vmem:[#allocation8 + $0xb20] sm:$0xff]
    %v587 = vld [vmem:[#allocation8 + $0xb28] sm:$0xff]
    %v588 = vld [vmem:[#allocation8 + $0xb30] sm:$0xff]
    %v589 = vld [vmem:[#allocation8 + $0xb38] sm:$0xff]
    %v590 = vld [vmem:[#allocation8 + $0xb40] sm:$0xff]
    %v591 = vld [vmem:[#allocation8 + $0xb48] sm:$0xff]
    %v592 = vld [vmem:[#allocation8 + $0xb50] sm:$0xff]
    %v593 = vld [vmem:[#allocation8 + $0xb58] sm:$0xff]
    %v594 = vld [vmem:[#allocation8 + $0xb60] sm:$0xff]
    %v595 = vld [vmem:[#allocation8 + $0xb68] sm:$0xff]
    %v596 = vld [vmem:[#allocation8 + $0xb70] sm:$0xff]
    %v597 = vld [vmem:[#allocation8 + $0xb78] sm:$0xff]
    %v598 = vld [vmem:[#allocation8 + $0xb80] sm:$0xff]
    %v599 = vld [vmem:[#allocation8 + $0xb88] sm:$0xff]
    %v600 = vld [vmem:[#allocation8 + $0xb90] sm:$0xff]
    %v601 = vld [vmem:[#allocation8 + $0xb98] sm:$0xff]
    %v602 = vld [vmem:[#allocation8 + $0xba0] sm:$0xff]
    %v603 = vld [vmem:[#allocation8 + $0xba8] sm:$0xff]
    %v604 = vld [vmem:[#allocation8 + $0xbb0] sm:$0xff]
    %v605 = vld [vmem:[#allocation8 + $0xbb8] sm:$0xff]
    %v606 = vld [vmem:[#allocation8 + $0xbc0] sm:$0xff]
    %v607 = vld [vmem:[#allocation8 + $0xbc8] sm:$0xff]
    %v608 = vld [vmem:[#allocation8 + $0xbd0] sm:$0xff]
    %v609 = vld [vmem:[#allocation8 + $0xbd8] sm:$0xff]
    %v610 = vld [vmem:[#allocation8 + $0xbe0] sm:$0xff]
    %v611 = vld [vmem:[#allocation8 + $0xbe8] sm:$0xff]
    %v612 = vld [vmem:[#allocation8 + $0xbf0] sm:$0xff]
    %v613 = vld [vmem:[#allocation8 + $0xbf8] sm:$0xff]
    %v614 = vld [vmem:[#allocation8 + $0xc00] sm:$0xff]
    %v615 = vld [vmem:[#allocation8 + $0xc08] sm:$0xff]
    %v616 = vld [vmem:[#allocation8 + $0xc10] sm:$0xff]
    %v617 = vld [vmem:[#allocation8 + $0xc18] sm:$0xff]
    %v618 = vld [vmem:[#allocation8 + $0xc20] sm:$0xff]
    %v619 = vld [vmem:[#allocation8 + $0xc28] sm:$0xff]
    %v620 = vld [vmem:[#allocation8 + $0xc30] sm:$0xff]
    %v621 = vld [vmem:[#allocation8 + $0xc38] sm:$0xff]
    %v622 = vld [vmem:[#allocation8 + $0xc40] sm:$0xff]
    %v623 = vld [vmem:[#allocation8 + $0xc48] sm:$0xff]
    %v624 = vld [vmem:[#allocation8 + $0xc50] sm:$0xff]
    %v625 = vld [vmem:[#allocation8 + $0xc58] sm:$0xff]
    %v626 = vld [vmem:[#allocation8 + $0xc60] sm:$0xff]
    %v627 = vld [vmem:[#allocation8 + $0xc68] sm:$0xff]
    %v628 = vld [vmem:[#allocation8 + $0xc70] sm:$0xff]
    %v629 = vld [vmem:[#allocation8 + $0xc78] sm:$0xff]
    %v630 = vld [vmem:[#allocation8 + $0xc80] sm:$0xff]
    %v631 = vld [vmem:[#allocation8 + $0xc88] sm:$0xff]
    %v632 = vld [vmem:[#allocation8 + $0xc90] sm:$0xff]
    %v633 = vld [vmem:[#allocation8 + $0xc98] sm:$0xff]
    %v634 = vld [vmem:[#allocation8 + $0xca0] sm:$0xff]
    %v635 = vld [vmem:[#allocation8 + $0xca8] sm:$0xff]
    %v636 = vld [vmem:[#allocation8 + $0xcb0] sm:$0xff]
    %v637 = vld [vmem:[#allocation8 + $0xcb8] sm:$0xff]
    %v638 = vld [vmem:[#allocation8 + $0xcc0] sm:$0xff]
    %v639 = vld [vmem:[#allocation8 + $0xcc8] sm:$0xff]
    %v640 = vld [vmem:[#allocation8 + $0xcd0] sm:$0xff]
    %v641 = vld [vmem:[#allocation8 + $0xcd8] sm:$0xff]
    %v642 = vld [vmem:[#allocation8 + $0xce0] sm:$0xff]
    %v643 = vld [vmem:[#allocation8 + $0xce8] sm:$0xff]
    %v644 = vld [vmem:[#allocation8 + $0xcf0] sm:$0xff]
    %v645 = vld [vmem:[#allocation8 + $0xcf8] sm:$0xff]
    %v646 = vld [vmem:[#allocation8 + $0xd00] sm:$0xff]
    %v647 = vld [vmem:[#allocation8 + $0xd08] sm:$0xff]
    %v648 = vld [vmem:[#allocation8 + $0xd10] sm:$0xff]
    %v649 = vld [vmem:[#allocation8 + $0xd18] sm:$0xff]
    %v650 = vld [vmem:[#allocation8 + $0xd20] sm:$0xff]
    %v651 = vld [vmem:[#allocation8 + $0xd28] sm:$0xff]
    %v652 = vld [vmem:[#allocation8 + $0xd30] sm:$0xff]
    %v653 = vld [vmem:[#allocation8 + $0xd38] sm:$0xff]
    %v654 = vld [vmem:[#allocation8 + $0xd40] sm:$0xff]
    %v655 = vld [vmem:[#allocation8 + $0xd48] sm:$0xff]
    %v656 = vld [vmem:[#allocation8 + $0xd50] sm:$0xff]
    %v657 = vld [vmem:[#allocation8 + $0xd58] sm:$0xff]
    %v658 = vld [vmem:[#allocation8 + $0xd60] sm:$0xff]
    %v659 = vld [vmem:[#allocation8 + $0xd68] sm:$0xff]
    %v660 = vld [vmem:[#allocation8 + $0xd70] sm:$0xff]
    %v661 = vld [vmem:[#allocation8 + $0xd78] sm:$0xff]
    %v662 = vld [vmem:[#allocation8 + $0xd80] sm:$0xff]
    %v663 = vld [vmem:[#allocation8 + $0xd88] sm:$0xff]
    %v664 = vld [vmem:[#allocation8 + $0xd90] sm:$0xff]
    %v665 = vld [vmem:[#allocation8 + $0xd98] sm:$0xff]
    %v666 = vld [vmem:[#allocation8 + $0xda0] sm:$0xff]
    %v667 = vld [vmem:[#allocation8 + $0xda8] sm:$0xff]
    %v668 = vld [vmem:[#allocation8 + $0xdb0] sm:$0xff]
    %v669 = vld [vmem:[#allocation8 + $0xdb8] sm:$0xff]
    %v670 = vld [vmem:[#allocation8 + $0xdc0] sm:$0xff]
    %v671 = vld [vmem:[#allocation8 + $0xdc8] sm:$0xff]
    %v672 = vld [vmem:[#allocation8 + $0xdd0] sm:$0xff]
    %v673 = vld [vmem:[#allocation8 + $0xdd8] sm:$0xff]
    %v674 = vld [vmem:[#allocation8 + $0xde0] sm:$0xff]
    %v675 = vld [vmem:[#allocation8 + $0xde8] sm:$0xff]
    %v676 = vld [vmem:[#allocation8 + $0xdf0] sm:$0xff]
    %v677 = vld [vmem:[#allocation8 + $0xdf8] sm:$0xff]
    %v678 = vld [vmem:[#allocation8 + $0xe00] sm:$0xff]
    %v679 = vld [vmem:[#allocation8 + $0xe08] sm:$0xff]
    %v680 = vld [vmem:[#allocation8 + $0xe10] sm:$0xff]
    %v681 = vld [vmem:[#allocation8 + $0xe18] sm:$0xff]
    %v682 = vld [vmem:[#allocation8 + $0xe20] sm:$0xff]
    %v683 = vld [vmem:[#allocation8 + $0xe28] sm:$0xff]
    %v684 = vld [vmem:[#allocation8 + $0xe30] sm:$0xff]
    %v685 = vld [vmem:[#allocation8 + $0xe38] sm:$0xff]
    %v686 = vld [vmem:[#allocation8 + $0xe40] sm:$0xff]
    %v687 = vld [vmem:[#allocation8 + $0xe48] sm:$0xff]
    %v688 = vld [vmem:[#allocation8 + $0xe50] sm:$0xff]
    %v689 = vld [vmem:[#allocation8 + $0xe58] sm:$0xff]
    %v690 = vld [vmem:[#allocation8 + $0xe60] sm:$0xff]
    %v691 = vld [vmem:[#allocation8 + $0xe68] sm:$0xff]
    %v692 = vld [vmem:[#allocation8 + $0xe70] sm:$0xff]
    %v693 = vld [vmem:[#allocation8 + $0xe78] sm:$0xff]
    %v694 = vld [vmem:[#allocation8 + $0xe80] sm:$0xff]
    %v695 = vld [vmem:[#allocation8 + $0xe88] sm:$0xff]
    %v696 = vld [vmem:[#allocation8 + $0xe90] sm:$0xff]
    %v697 = vld [vmem:[#allocation8 + $0xe98] sm:$0xff]
    %v698 = vld [vmem:[#allocation8 + $0xea0] sm:$0xff]
    %v699 = vld [vmem:[#allocation8 + $0xea8] sm:$0xff]
    %v700 = vld [vmem:[#allocation8 + $0xeb0] sm:$0xff]
    %v701 = vld [vmem:[#allocation8 + $0xeb8] sm:$0xff]
    %v702 = vld [vmem:[#allocation8 + $0xec0] sm:$0xff]
    %v703 = vld [vmem:[#allocation8 + $0xec8] sm:$0xff]
    %v704 = vld [vmem:[#allocation8 + $0xed0] sm:$0xff]
    %v705 = vld [vmem:[#allocation8 + $0xed8] sm:$0xff]
    %v706 = vld [vmem:[#allocation8 + $0xee0] sm:$0xff]
    %v707 = vld [vmem:[#allocation8 + $0xee8] sm:$0xff]
    %v708 = vld [vmem:[#allocation8 + $0xef0] sm:$0xff]
    %v709 = vld [vmem:[#allocation8 + $0xef8] sm:$0xff]
    %v710 = vld [vmem:[#allocation8 + $0xf00] sm:$0xff]
    %v711 = vld [vmem:[#allocation8 + $0xf08] sm:$0xff]
    %v712 = vld [vmem:[#allocation8 + $0xf10] sm:$0xff]
    %v713 = vld [vmem:[#allocation8 + $0xf18] sm:$0xff]
    %v714 = vld [vmem:[#allocation8 + $0xf20] sm:$0xff]
    %v715 = vld [vmem:[#allocation8 + $0xf28] sm:$0xff]
    %v716 = vld [vmem:[#allocation8 + $0xf30] sm:$0xff]
    %v717 = vld [vmem:[#allocation8 + $0xf38] sm:$0xff]
    %v718 = vld [vmem:[#allocation8 + $0xf40] sm:$0xff]
    %v719 = vld [vmem:[#allocation8 + $0xf48] sm:$0xff]
    %v720 = vld [vmem:[#allocation8 + $0xf50] sm:$0xff]
    %v721 = vld [vmem:[#allocation8 + $0xf58] sm:$0xff]
    %v722 = vld [vmem:[#allocation8 + $0xf60] sm:$0xff]
    %v723 = vld [vmem:[#allocation8 + $0xf68] sm:$0xff]
    %v724 = vld [vmem:[#allocation8 + $0xf70] sm:$0xff]
    %v725 = vld [vmem:[#allocation8 + $0xf78] sm:$0xff]
    %v726 = vld [vmem:[#allocation8 + $0xf80] sm:$0xff]
    %v727 = vld [vmem:[#allocation8 + $0xf88] sm:$0xff]
    %v728 = vld [vmem:[#allocation8 + $0xf90] sm:$0xff]
    %v729 = vld [vmem:[#allocation8 + $0xf98] sm:$0xff]
    %v730 = vld [vmem:[#allocation8 + $0xfa0] sm:$0xff]
    %v731 = vld [vmem:[#allocation8 + $0xfa8] sm:$0xff]
    %v732 = vld [vmem:[#allocation8 + $0xfb0] sm:$0xff]
    %v733 = vld [vmem:[#allocation8 + $0xfb8] sm:$0xff]
    %v734 = vld [vmem:[#allocation8 + $0xfc0] sm:$0xff]
    %v735 = vld [vmem:[#allocation8 + $0xfc8] sm:$0xff]
    %v736 = vld [vmem:[#allocation8 + $0xfd0] sm:$0xff]
    %v737 = vld [vmem:[#allocation8 + $0xfd8] sm:$0xff]
    %v738 = vld [vmem:[#allocation8 + $0xfe0] sm:$0xff]
    %v739 = vld [vmem:[#allocation8 + $0xfe8] sm:$0xff]
    %v740 = vld [vmem:[#allocation8 + $0xff0] sm:$0xff]
    %v741 = vld [vmem:[#allocation8 + $0xff8] sm:$0xff]
    %v742 = vld [vmem:[#allocation10] sm:$0xff]
    %v743 = vld [vmem:[#allocation10 + $0x8] sm:$0xff]
    %v746 = vlaneseq
    %v747 = vshrl.u32 %v746, 7
    %v748 = vsub.s32 0, %v747
    %v749 = vrot.slane %v742, %v748
    %v750 = vlaneseq
    %v751 = vshrl.u32 %v750, 7
    %v752 = vsub.s32 1, %v751
    %v753 = vrot.slane %v742, %v752
    %v754 = vlaneseq
    %v755 = vshrl.u32 %v754, 7
    %v756 = vsub.s32 2, %v755
    %v757 = vrot.slane %v742, %v756
    %v758 = vlaneseq
    %v759 = vshrl.u32 %v758, 7
    %v760 = vsub.s32 3, %v759
    %v761 = vrot.slane %v742, %v760
    %v762 = vlaneseq
    %v763 = vshrl.u32 %v762, 7
    %v764 = vsub.s32 4, %v763
    %v765 = vrot.slane %v742, %v764
    %v766 = vlaneseq
    %v767 = vshrl.u32 %v766, 7
    %v768 = vsub.s32 5, %v767
    %v769 = vrot.slane %v742, %v768
    %v770 = vlaneseq
    %v771 = vshrl.u32 %v770, 7
    %v772 = vsub.s32 6, %v771
    %v773 = vrot.slane %v742, %v772
    %v774 = vlaneseq
    %v775 = vshrl.u32 %v774, 7
    %v776 = vsub.s32 7, %v775
    %v777 = vrot.slane %v742, %v776
    %v778 = vlaneseq
    %v779 = vshrl.u32 %v778, 7
    %v780 = vsub.s32 0, %v779
    %v781 = vrot.slane %v743, %v780
    %v782 = vlaneseq
    %v783 = vshrl.u32 %v782, 7
    %v784 = vsub.s32 1, %v783
    %v785 = vrot.slane %v743, %v784
    %v786 = vlaneseq
    %v787 = vshrl.u32 %v786, 7
    %v788 = vsub.s32 2, %v787
    %v789 = vrot.slane %v743, %v788
    %v790 = vlaneseq
    %v791 = vshrl.u32 %v790, 7
    %v792 = vsub.s32 3, %v791
    %v793 = vrot.slane %v743, %v792
    %v794 = vlaneseq
    %v795 = vshrl.u32 %v794, 7
    %v796 = vsub.s32 4, %v795
    %v797 = vrot.slane %v743, %v796
    %v798 = vlaneseq
    %v799 = vshrl.u32 %v798, 7
    %v800 = vsub.s32 5, %v799
    %v801 = vrot.slane %v743, %v800
    %v802 = vlaneseq
    %v803 = vshrl.u32 %v802, 7
    %v804 = vsub.s32 6, %v803
    %v805 = vrot.slane %v743, %v804
    %v806 = vlaneseq
    %v807 = vshrl.u32 %v806, 7
    %v808 = vsub.s32 7, %v807
    %v809 = vrot.slane %v743, %v808
    %v1338 = vunpack.c.l.b16 %v230
    %v1339 = vunpack.c.h.b16 %v230
    %v1340 = vunpack.c.l.b16 %v231
    %v1341 = vunpack.c.h.b16 %v231
    %v1342 = vunpack.c.l.b16 %v232
    %v1343 = vunpack.c.h.b16 %v232
    %v1344 = vunpack.c.l.b16 %v233
    %v1345 = vunpack.c.h.b16 %v233
    %v1346 = vunpack.c.l.b16 %v234
    %v1347 = vunpack.c.h.b16 %v234
    %v1348 = vunpack.c.l.b16 %v235
    %v1349 = vunpack.c.h.b16 %v235
    %v1350 = vunpack.c.l.b16 %v236
    %v1351 = vunpack.c.h.b16 %v236
    %v1352 = vunpack.c.l.b16 %v237
    %v1353 = vunpack.c.h.b16 %v237
    %v1354 = vunpack.c.l.b16 %v238
    %v1355 = vunpack.c.h.b16 %v238
    %v1356 = vunpack.c.l.b16 %v239
    %v1357 = vunpack.c.h.b16 %v239
    %v1358 = vunpack.c.l.b16 %v240
    %v1359 = vunpack.c.h.b16 %v240
    %v1360 = vunpack.c.l.b16 %v241
    %v1361 = vunpack.c.h.b16 %v241
    %v1362 = vunpack.c.l.b16 %v242
    %v1363 = vunpack.c.h.b16 %v242
    %v1364 = vunpack.c.l.b16 %v243
    %v1365 = vunpack.c.h.b16 %v243
    %v1366 = vunpack.c.l.b16 %v244
    %v1367 = vunpack.c.h.b16 %v244
    %v1368 = vunpack.c.l.b16 %v245
    %v1369 = vunpack.c.h.b16 %v245
    %v1370 = vunpack.c.l.b16 %v246
    %v1371 = vunpack.c.h.b16 %v246
    %v1372 = vunpack.c.l.b16 %v247
    %v1373 = vunpack.c.h.b16 %v247
    %v1374 = vunpack.c.l.b16 %v248
    %v1375 = vunpack.c.h.b16 %v248
    %v1376 = vunpack.c.l.b16 %v249
    %v1377 = vunpack.c.h.b16 %v249
    %v1378 = vunpack.c.l.b16 %v250
    %v1379 = vunpack.c.h.b16 %v250
    %v1380 = vunpack.c.l.b16 %v251
    %v1381 = vunpack.c.h.b16 %v251
    %v1382 = vunpack.c.l.b16 %v252
    %v1383 = vunpack.c.h.b16 %v252
    %v1384 = vunpack.c.l.b16 %v253
    %v1385 = vunpack.c.h.b16 %v253
    %v1386 = vunpack.c.l.b16 %v254
    %v1387 = vunpack.c.h.b16 %v254
    %v1388 = vunpack.c.l.b16 %v255
    %v1389 = vunpack.c.h.b16 %v255
    %v1390 = vunpack.c.l.b16 %v256
    %v1391 = vunpack.c.h.b16 %v256
    %v1392 = vunpack.c.l.b16 %v257
    %v1393 = vunpack.c.h.b16 %v257
    %v1394 = vunpack.c.l.b16 %v258
    %v1395 = vunpack.c.h.b16 %v258
    %v1396 = vunpack.c.l.b16 %v259
    %v1397 = vunpack.c.h.b16 %v259
    %v1398 = vunpack.c.l.b16 %v260
    %v1399 = vunpack.c.h.b16 %v260
    %v1400 = vunpack.c.l.b16 %v261
    %v1401 = vunpack.c.h.b16 %v261
    %v1402 = vunpack.c.l.b16 %v262
    %v1403 = vunpack.c.h.b16 %v262
    %v1404 = vunpack.c.l.b16 %v263
    %v1405 = vunpack.c.h.b16 %v263
    %v1406 = vunpack.c.l.b16 %v264
    %v1407 = vunpack.c.h.b16 %v264
    %v1408 = vunpack.c.l.b16 %v265
    %v1409 = vunpack.c.h.b16 %v265
    %v1410 = vunpack.c.l.b16 %v266
    %v1411 = vunpack.c.h.b16 %v266
    %v1412 = vunpack.c.l.b16 %v267
    %v1413 = vunpack.c.h.b16 %v267
    %v1414 = vunpack.c.l.b16 %v268
    %v1415 = vunpack.c.h.b16 %v268
    %v1416 = vunpack.c.l.b16 %v269
    %v1417 = vunpack.c.h.b16 %v269
    %v1418 = vunpack.c.l.b16 %v270
    %v1419 = vunpack.c.h.b16 %v270
    %v1420 = vunpack.c.l.b16 %v271
    %v1421 = vunpack.c.h.b16 %v271
    %v1422 = vunpack.c.l.b16 %v272
    %v1423 = vunpack.c.h.b16 %v272
    %v1424 = vunpack.c.l.b16 %v273
    %v1425 = vunpack.c.h.b16 %v273
    %v1426 = vunpack.c.l.b16 %v274
    %v1427 = vunpack.c.h.b16 %v274
    %v1428 = vunpack.c.l.b16 %v275
    %v1429 = vunpack.c.h.b16 %v275
    %v1430 = vunpack.c.l.b16 %v276
    %v1431 = vunpack.c.h.b16 %v276
    %v1432 = vunpack.c.l.b16 %v277
    %v1433 = vunpack.c.h.b16 %v277
    %v1434 = vunpack.c.l.b16 %v278
    %v1435 = vunpack.c.h.b16 %v278
    %v1436 = vunpack.c.l.b16 %v279
    %v1437 = vunpack.c.h.b16 %v279
    %v1438 = vunpack.c.l.b16 %v280
    %v1439 = vunpack.c.h.b16 %v280
    %v1440 = vunpack.c.l.b16 %v281
    %v1441 = vunpack.c.h.b16 %v281
    %v1442 = vunpack.c.l.b16 %v282
    %v1443 = vunpack.c.h.b16 %v282
    %v1444 = vunpack.c.l.b16 %v283
    %v1445 = vunpack.c.h.b16 %v283
    %v1446 = vunpack.c.l.b16 %v284
    %v1447 = vunpack.c.h.b16 %v284
    %v1448 = vunpack.c.l.b16 %v285
    %v1449 = vunpack.c.h.b16 %v285
    %v1450 = vunpack.c.l.b16 %v286
    %v1451 = vunpack.c.h.b16 %v286
    %v1452 = vunpack.c.l.b16 %v287
    %v1453 = vunpack.c.h.b16 %v287
    %v1454 = vunpack.c.l.b16 %v288
    %v1455 = vunpack.c.h.b16 %v288
    %v1456 = vunpack.c.l.b16 %v289
    %v1457 = vunpack.c.h.b16 %v289
    %v1458 = vunpack.c.l.b16 %v290
    %v1459 = vunpack.c.h.b16 %v290
    %v1460 = vunpack.c.l.b16 %v291
    %v1461 = vunpack.c.h.b16 %v291
    %v1462 = vunpack.c.l.b16 %v292
    %v1463 = vunpack.c.h.b16 %v292
    %v1464 = vunpack.c.l.b16 %v293
    %v1465 = vunpack.c.h.b16 %v293
    %v1466 = vunpack.c.l.b16 %v294
    %v1467 = vunpack.c.h.b16 %v294
    %v1468 = vunpack.c.l.b16 %v295
    %v1469 = vunpack.c.h.b16 %v295
    %v1470 = vunpack.c.l.b16 %v296
    %v1471 = vunpack.c.h.b16 %v296
    %v1472 = vunpack.c.l.b16 %v297
    %v1473 = vunpack.c.h.b16 %v297
    %v1474 = vunpack.c.l.b16 %v298
    %v1475 = vunpack.c.h.b16 %v298
    %v1476 = vunpack.c.l.b16 %v299
    %v1477 = vunpack.c.h.b16 %v299
    %v1478 = vunpack.c.l.b16 %v300
    %v1479 = vunpack.c.h.b16 %v300
    %v1480 = vunpack.c.l.b16 %v301
    %v1481 = vunpack.c.h.b16 %v301
    %v1482 = vunpack.c.l.b16 %v302
    %v1483 = vunpack.c.h.b16 %v302
    %v1484 = vunpack.c.l.b16 %v303
    %v1485 = vunpack.c.h.b16 %v303
    %v1486 = vunpack.c.l.b16 %v304
    %v1487 = vunpack.c.h.b16 %v304
    %v1488 = vunpack.c.l.b16 %v305
    %v1489 = vunpack.c.h.b16 %v305
    %v1490 = vunpack.c.l.b16 %v306
    %v1491 = vunpack.c.h.b16 %v306
    %v1492 = vunpack.c.l.b16 %v307
    %v1493 = vunpack.c.h.b16 %v307
    %v1494 = vunpack.c.l.b16 %v308
    %v1495 = vunpack.c.h.b16 %v308
    %v1496 = vunpack.c.l.b16 %v309
    %v1497 = vunpack.c.h.b16 %v309
    %v1498 = vunpack.c.l.b16 %v310
    %v1499 = vunpack.c.h.b16 %v310
    %v1500 = vunpack.c.l.b16 %v311
    %v1501 = vunpack.c.h.b16 %v311
    %v1502 = vunpack.c.l.b16 %v312
    %v1503 = vunpack.c.h.b16 %v312
    %v1504 = vunpack.c.l.b16 %v313
    %v1505 = vunpack.c.h.b16 %v313
    %v1506 = vunpack.c.l.b16 %v314
    %v1507 = vunpack.c.h.b16 %v314
    %v1508 = vunpack.c.l.b16 %v315
    %v1509 = vunpack.c.h.b16 %v315
    %v1510 = vunpack.c.l.b16 %v316
    %v1511 = vunpack.c.h.b16 %v316
    %v1512 = vunpack.c.l.b16 %v317
    %v1513 = vunpack.c.h.b16 %v317
    %v1514 = vunpack.c.l.b16 %v318
    %v1515 = vunpack.c.h.b16 %v318
    %v1516 = vunpack.c.l.b16 %v319
    %v1517 = vunpack.c.h.b16 %v319
    %v1518 = vunpack.c.l.b16 %v320
    %v1519 = vunpack.c.h.b16 %v320
    %v1520 = vunpack.c.l.b16 %v321
    %v1521 = vunpack.c.h.b16 %v321
    %v1522 = vunpack.c.l.b16 %v322
    %v1523 = vunpack.c.h.b16 %v322
    %v1524 = vunpack.c.l.b16 %v323
    %v1525 = vunpack.c.h.b16 %v323
    %v1526 = vunpack.c.l.b16 %v324
    %v1527 = vunpack.c.h.b16 %v324
    %v1528 = vunpack.c.l.b16 %v325
    %v1529 = vunpack.c.h.b16 %v325
    %v1530 = vunpack.c.l.b16 %v326
    %v1531 = vunpack.c.h.b16 %v326
    %v1532 = vunpack.c.l.b16 %v327
    %v1533 = vunpack.c.h.b16 %v327
    %v1534 = vunpack.c.l.b16 %v328
    %v1535 = vunpack.c.h.b16 %v328
    %v1536 = vunpack.c.l.b16 %v329
    %v1537 = vunpack.c.h.b16 %v329
    %v1538 = vunpack.c.l.b16 %v330
    %v1539 = vunpack.c.h.b16 %v330
    %v1540 = vunpack.c.l.b16 %v331
    %v1541 = vunpack.c.h.b16 %v331
    %v1542 = vunpack.c.l.b16 %v332
    %v1543 = vunpack.c.h.b16 %v332
    %v1544 = vunpack.c.l.b16 %v333
    %v1545 = vunpack.c.h.b16 %v333
    %v1546 = vunpack.c.l.b16 %v334
    %v1547 = vunpack.c.h.b16 %v334
    %v1548 = vunpack.c.l.b16 %v335
    %v1549 = vunpack.c.h.b16 %v335
    %v1550 = vunpack.c.l.b16 %v336
    %v1551 = vunpack.c.h.b16 %v336
    %v1552 = vunpack.c.l.b16 %v337
    %v1553 = vunpack.c.h.b16 %v337
    %v1554 = vunpack.c.l.b16 %v338
    %v1555 = vunpack.c.h.b16 %v338
    %v1556 = vunpack.c.l.b16 %v339
    %v1557 = vunpack.c.h.b16 %v339
    %v1558 = vunpack.c.l.b16 %v340
    %v1559 = vunpack.c.h.b16 %v340
    %v1560 = vunpack.c.l.b16 %v341
    %v1561 = vunpack.c.h.b16 %v341
    %v1562 = vunpack.c.l.b16 %v342
    %v1563 = vunpack.c.h.b16 %v342
    %v1564 = vunpack.c.l.b16 %v343
    %v1565 = vunpack.c.h.b16 %v343
    %v1566 = vunpack.c.l.b16 %v344
    %v1567 = vunpack.c.h.b16 %v344
    %v1568 = vunpack.c.l.b16 %v345
    %v1569 = vunpack.c.h.b16 %v345
    %v1570 = vunpack.c.l.b16 %v346
    %v1571 = vunpack.c.h.b16 %v346
    %v1572 = vunpack.c.l.b16 %v347
    %v1573 = vunpack.c.h.b16 %v347
    %v1574 = vunpack.c.l.b16 %v348
    %v1575 = vunpack.c.h.b16 %v348
    %v1576 = vunpack.c.l.b16 %v349
    %v1577 = vunpack.c.h.b16 %v349
    %v1578 = vunpack.c.l.b16 %v350
    %v1579 = vunpack.c.h.b16 %v350
    %v1580 = vunpack.c.l.b16 %v351
    %v1581 = vunpack.c.h.b16 %v351
    %v1582 = vunpack.c.l.b16 %v352
    %v1583 = vunpack.c.h.b16 %v352
    %v1584 = vunpack.c.l.b16 %v353
    %v1585 = vunpack.c.h.b16 %v353
    %v1586 = vunpack.c.l.b16 %v354
    %v1587 = vunpack.c.h.b16 %v354
    %v1588 = vunpack.c.l.b16 %v355
    %v1589 = vunpack.c.h.b16 %v355
    %v1590 = vunpack.c.l.b16 %v356
    %v1591 = vunpack.c.h.b16 %v356
    %v1592 = vunpack.c.l.b16 %v357
    %v1593 = vunpack.c.h.b16 %v357
    %v1594 = vunpack.c.l.b16 %v358
    %v1595 = vunpack.c.h.b16 %v358
    %v1596 = vunpack.c.l.b16 %v359
    %v1597 = vunpack.c.h.b16 %v359
    %v1598 = vunpack.c.l.b16 %v360
    %v1599 = vunpack.c.h.b16 %v360
    %v1600 = vunpack.c.l.b16 %v361
    %v1601 = vunpack.c.h.b16 %v361
    %v1602 = vunpack.c.l.b16 %v362
    %v1603 = vunpack.c.h.b16 %v362
    %v1604 = vunpack.c.l.b16 %v363
    %v1605 = vunpack.c.h.b16 %v363
    %v1606 = vunpack.c.l.b16 %v364
    %v1607 = vunpack.c.h.b16 %v364
    %v1608 = vunpack.c.l.b16 %v365
    %v1609 = vunpack.c.h.b16 %v365
    %v1610 = vunpack.c.l.b16 %v366
    %v1611 = vunpack.c.h.b16 %v366
    %v1612 = vunpack.c.l.b16 %v367
    %v1613 = vunpack.c.h.b16 %v367
    %v1614 = vunpack.c.l.b16 %v368
    %v1615 = vunpack.c.h.b16 %v368
    %v1616 = vunpack.c.l.b16 %v369
    %v1617 = vunpack.c.h.b16 %v369
    %v1618 = vunpack.c.l.b16 %v370
    %v1619 = vunpack.c.h.b16 %v370
    %v1620 = vunpack.c.l.b16 %v371
    %v1621 = vunpack.c.h.b16 %v371
    %v1622 = vunpack.c.l.b16 %v372
    %v1623 = vunpack.c.h.b16 %v372
    %v1624 = vunpack.c.l.b16 %v373
    %v1625 = vunpack.c.h.b16 %v373
    %v1626 = vunpack.c.l.b16 %v374
    %v1627 = vunpack.c.h.b16 %v374
    %v1628 = vunpack.c.l.b16 %v375
    %v1629 = vunpack.c.h.b16 %v375
    %v1630 = vunpack.c.l.b16 %v376
    %v1631 = vunpack.c.h.b16 %v376
    %v1632 = vunpack.c.l.b16 %v377
    %v1633 = vunpack.c.h.b16 %v377
    %v1634 = vunpack.c.l.b16 %v378
    %v1635 = vunpack.c.h.b16 %v378
    %v1636 = vunpack.c.l.b16 %v379
    %v1637 = vunpack.c.h.b16 %v379
    %v1638 = vunpack.c.l.b16 %v380
    %v1639 = vunpack.c.h.b16 %v380
    %v1640 = vunpack.c.l.b16 %v381
    %v1641 = vunpack.c.h.b16 %v381
    %v1642 = vunpack.c.l.b16 %v382
    %v1643 = vunpack.c.h.b16 %v382
    %v1644 = vunpack.c.l.b16 %v383
    %v1645 = vunpack.c.h.b16 %v383
    %v1646 = vunpack.c.l.b16 %v384
    %v1647 = vunpack.c.h.b16 %v384
    %v1648 = vunpack.c.l.b16 %v385
    %v1649 = vunpack.c.h.b16 %v385
    %v1650 = vunpack.c.l.b16 %v386
    %v1651 = vunpack.c.h.b16 %v386
    %v1652 = vunpack.c.l.b16 %v387
    %v1653 = vunpack.c.h.b16 %v387
    %v1654 = vunpack.c.l.b16 %v388
    %v1655 = vunpack.c.h.b16 %v388
    %v1656 = vunpack.c.l.b16 %v389
    %v1657 = vunpack.c.h.b16 %v389
    %v1658 = vunpack.c.l.b16 %v390
    %v1659 = vunpack.c.h.b16 %v390
    %v1660 = vunpack.c.l.b16 %v391
    %v1661 = vunpack.c.h.b16 %v391
    %v1662 = vunpack.c.l.b16 %v392
    %v1663 = vunpack.c.h.b16 %v392
    %v1664 = vunpack.c.l.b16 %v393
    %v1665 = vunpack.c.h.b16 %v393
    %v1666 = vunpack.c.l.b16 %v394
    %v1667 = vunpack.c.h.b16 %v394
    %v1668 = vunpack.c.l.b16 %v395
    %v1669 = vunpack.c.h.b16 %v395
    %v1670 = vunpack.c.l.b16 %v396
    %v1671 = vunpack.c.h.b16 %v396
    %v1672 = vunpack.c.l.b16 %v397
    %v1673 = vunpack.c.h.b16 %v397
    %v1674 = vunpack.c.l.b16 %v398
    %v1675 = vunpack.c.h.b16 %v398
    %v1676 = vunpack.c.l.b16 %v399
    %v1677 = vunpack.c.h.b16 %v399
    %v1678 = vunpack.c.l.b16 %v400
    %v1679 = vunpack.c.h.b16 %v400
    %v1680 = vunpack.c.l.b16 %v401
    %v1681 = vunpack.c.h.b16 %v401
    %v1682 = vunpack.c.l.b16 %v402
    %v1683 = vunpack.c.h.b16 %v402
    %v1684 = vunpack.c.l.b16 %v403
    %v1685 = vunpack.c.h.b16 %v403
    %v1686 = vunpack.c.l.b16 %v404
    %v1687 = vunpack.c.h.b16 %v404
    %v1688 = vunpack.c.l.b16 %v405
    %v1689 = vunpack.c.h.b16 %v405
    %v1690 = vunpack.c.l.b16 %v406
    %v1691 = vunpack.c.h.b16 %v406
    %v1692 = vunpack.c.l.b16 %v407
    %v1693 = vunpack.c.h.b16 %v407
    %v1694 = vunpack.c.l.b16 %v408
    %v1695 = vunpack.c.h.b16 %v408
    %v1696 = vunpack.c.l.b16 %v409
    %v1697 = vunpack.c.h.b16 %v409
    %v1698 = vunpack.c.l.b16 %v410
    %v1699 = vunpack.c.h.b16 %v410
    %v1700 = vunpack.c.l.b16 %v411
    %v1701 = vunpack.c.h.b16 %v411
    %v1702 = vunpack.c.l.b16 %v412
    %v1703 = vunpack.c.h.b16 %v412
    %v1704 = vunpack.c.l.b16 %v413
    %v1705 = vunpack.c.h.b16 %v413
    %v1706 = vunpack.c.l.b16 %v414
    %v1707 = vunpack.c.h.b16 %v414
    %v1708 = vunpack.c.l.b16 %v415
    %v1709 = vunpack.c.h.b16 %v415
    %v1710 = vunpack.c.l.b16 %v416
    %v1711 = vunpack.c.h.b16 %v416
    %v1712 = vunpack.c.l.b16 %v417
    %v1713 = vunpack.c.h.b16 %v417
    %v1714 = vunpack.c.l.b16 %v418
    %v1715 = vunpack.c.h.b16 %v418
    %v1716 = vunpack.c.l.b16 %v419
    %v1717 = vunpack.c.h.b16 %v419
    %v1718 = vunpack.c.l.b16 %v420
    %v1719 = vunpack.c.h.b16 %v420
    %v1720 = vunpack.c.l.b16 %v421
    %v1721 = vunpack.c.h.b16 %v421
    %v1722 = vunpack.c.l.b16 %v422
    %v1723 = vunpack.c.h.b16 %v422
    %v1724 = vunpack.c.l.b16 %v423
    %v1725 = vunpack.c.h.b16 %v423
    %v1726 = vunpack.c.l.b16 %v424
    %v1727 = vunpack.c.h.b16 %v424
    %v1728 = vunpack.c.l.b16 %v425
    %v1729 = vunpack.c.h.b16 %v425
    %v1730 = vunpack.c.l.b16 %v426
    %v1731 = vunpack.c.h.b16 %v426
    %v1732 = vunpack.c.l.b16 %v427
    %v1733 = vunpack.c.h.b16 %v427
    %v1734 = vunpack.c.l.b16 %v428
    %v1735 = vunpack.c.h.b16 %v428
    %v1736 = vunpack.c.l.b16 %v429
    %v1737 = vunpack.c.h.b16 %v429
    %v1738 = vunpack.c.l.b16 %v430
    %v1739 = vunpack.c.h.b16 %v430
    %v1740 = vunpack.c.l.b16 %v431
    %v1741 = vunpack.c.h.b16 %v431
    %v1742 = vunpack.c.l.b16 %v432
    %v1743 = vunpack.c.h.b16 %v432
    %v1744 = vunpack.c.l.b16 %v433
    %v1745 = vunpack.c.h.b16 %v433
    %v1746 = vunpack.c.l.b16 %v434
    %v1747 = vunpack.c.h.b16 %v434
    %v1748 = vunpack.c.l.b16 %v435
    %v1749 = vunpack.c.h.b16 %v435
    %v1750 = vunpack.c.l.b16 %v436
    %v1751 = vunpack.c.h.b16 %v436
    %v1752 = vunpack.c.l.b16 %v437
    %v1753 = vunpack.c.h.b16 %v437
    %v1754 = vunpack.c.l.b16 %v438
    %v1755 = vunpack.c.h.b16 %v438
    %v1756 = vunpack.c.l.b16 %v439
    %v1757 = vunpack.c.h.b16 %v439
    %v1758 = vunpack.c.l.b16 %v440
    %v1759 = vunpack.c.h.b16 %v440
    %v1760 = vunpack.c.l.b16 %v441
    %v1761 = vunpack.c.h.b16 %v441
    %v1762 = vunpack.c.l.b16 %v442
    %v1763 = vunpack.c.h.b16 %v442
    %v1764 = vunpack.c.l.b16 %v443
    %v1765 = vunpack.c.h.b16 %v443
    %v1766 = vunpack.c.l.b16 %v444
    %v1767 = vunpack.c.h.b16 %v444
    %v1768 = vunpack.c.l.b16 %v445
    %v1769 = vunpack.c.h.b16 %v445
    %v1770 = vunpack.c.l.b16 %v446
    %v1771 = vunpack.c.h.b16 %v446
    %v1772 = vunpack.c.l.b16 %v447
    %v1773 = vunpack.c.h.b16 %v447
    %v1774 = vunpack.c.l.b16 %v448
    %v1775 = vunpack.c.h.b16 %v448
    %v1776 = vunpack.c.l.b16 %v449
    %v1777 = vunpack.c.h.b16 %v449
    %v1778 = vunpack.c.l.b16 %v450
    %v1779 = vunpack.c.h.b16 %v450
    %v1780 = vunpack.c.l.b16 %v451
    %v1781 = vunpack.c.h.b16 %v451
    %v1782 = vunpack.c.l.b16 %v452
    %v1783 = vunpack.c.h.b16 %v452
    %v1784 = vunpack.c.l.b16 %v453
    %v1785 = vunpack.c.h.b16 %v453
    %v1786 = vunpack.c.l.b16 %v454
    %v1787 = vunpack.c.h.b16 %v454
    %v1788 = vunpack.c.l.b16 %v455
    %v1789 = vunpack.c.h.b16 %v455
    %v1790 = vunpack.c.l.b16 %v456
    %v1791 = vunpack.c.h.b16 %v456
    %v1792 = vunpack.c.l.b16 %v457
    %v1793 = vunpack.c.h.b16 %v457
    %v1794 = vunpack.c.l.b16 %v458
    %v1795 = vunpack.c.h.b16 %v458
    %v1796 = vunpack.c.l.b16 %v459
    %v1797 = vunpack.c.h.b16 %v459
    %v1798 = vunpack.c.l.b16 %v460
    %v1799 = vunpack.c.h.b16 %v460
    %v1800 = vunpack.c.l.b16 %v461
    %v1801 = vunpack.c.h.b16 %v461
    %v1802 = vunpack.c.l.b16 %v462
    %v1803 = vunpack.c.h.b16 %v462
    %v1804 = vunpack.c.l.b16 %v463
    %v1805 = vunpack.c.h.b16 %v463
    %v1806 = vunpack.c.l.b16 %v464
    %v1807 = vunpack.c.h.b16 %v464
    %v1808 = vunpack.c.l.b16 %v465
    %v1809 = vunpack.c.h.b16 %v465
    %v1810 = vunpack.c.l.b16 %v466
    %v1811 = vunpack.c.h.b16 %v466
    %v1812 = vunpack.c.l.b16 %v467
    %v1813 = vunpack.c.h.b16 %v467
    %v1814 = vunpack.c.l.b16 %v468
    %v1815 = vunpack.c.h.b16 %v468
    %v1816 = vunpack.c.l.b16 %v469
    %v1817 = vunpack.c.h.b16 %v469
    %v1818 = vunpack.c.l.b16 %v470
    %v1819 = vunpack.c.h.b16 %v470
    %v1820 = vunpack.c.l.b16 %v471
    %v1821 = vunpack.c.h.b16 %v471
    %v1822 = vunpack.c.l.b16 %v472
    %v1823 = vunpack.c.h.b16 %v472
    %v1824 = vunpack.c.l.b16 %v473
    %v1825 = vunpack.c.h.b16 %v473
    %v1826 = vunpack.c.l.b16 %v474
    %v1827 = vunpack.c.h.b16 %v474
    %v1828 = vunpack.c.l.b16 %v475
    %v1829 = vunpack.c.h.b16 %v475
    %v1830 = vunpack.c.l.b16 %v476
    %v1831 = vunpack.c.h.b16 %v476
    %v1832 = vunpack.c.l.b16 %v477
    %v1833 = vunpack.c.h.b16 %v477
    %v1834 = vunpack.c.l.b16 %v478
    %v1835 = vunpack.c.h.b16 %v478
    %v1836 = vunpack.c.l.b16 %v479
    %v1837 = vunpack.c.h.b16 %v479
    %v1838 = vunpack.c.l.b16 %v480
    %v1839 = vunpack.c.h.b16 %v480
    %v1840 = vunpack.c.l.b16 %v481
    %v1841 = vunpack.c.h.b16 %v481
    %v1842 = vunpack.c.l.b16 %v482
    %v1843 = vunpack.c.h.b16 %v482
    %v1844 = vunpack.c.l.b16 %v483
    %v1845 = vunpack.c.h.b16 %v483
    %v1846 = vunpack.c.l.b16 %v484
    %v1847 = vunpack.c.h.b16 %v484
    %v1848 = vunpack.c.l.b16 %v485
    %v1849 = vunpack.c.h.b16 %v485
    %v1850 = vunpack.c.l.b16 %v486
    %v1851 = vunpack.c.h.b16 %v486
    %v1852 = vunpack.c.l.b16 %v487
    %v1853 = vunpack.c.h.b16 %v487
    %v1854 = vunpack.c.l.b16 %v488
    %v1855 = vunpack.c.h.b16 %v488
    %v1856 = vunpack.c.l.b16 %v489
    %v1857 = vunpack.c.h.b16 %v489
    %v1858 = vunpack.c.l.b16 %v490
    %v1859 = vunpack.c.h.b16 %v490
    %v1860 = vunpack.c.l.b16 %v491
    %v1861 = vunpack.c.h.b16 %v491
    %v1862 = vunpack.c.l.b16 %v492
    %v1863 = vunpack.c.h.b16 %v492
    %v1864 = vunpack.c.l.b16 %v493
    %v1865 = vunpack.c.h.b16 %v493
    %v1866 = vunpack.c.l.b16 %v494
    %v1867 = vunpack.c.h.b16 %v494
    %v1868 = vunpack.c.l.b16 %v495
    %v1869 = vunpack.c.h.b16 %v495
    %v1870 = vunpack.c.l.b16 %v496
    %v1871 = vunpack.c.h.b16 %v496
    %v1872 = vunpack.c.l.b16 %v497
    %v1873 = vunpack.c.h.b16 %v497
    %v1874 = vunpack.c.l.b16 %v498
    %v1875 = vunpack.c.h.b16 %v498
    %v1876 = vunpack.c.l.b16 %v499
    %v1877 = vunpack.c.h.b16 %v499
    %v1878 = vunpack.c.l.b16 %v500
    %v1879 = vunpack.c.h.b16 %v500
    %v1880 = vunpack.c.l.b16 %v501
    %v1881 = vunpack.c.h.b16 %v501
    %v1882 = vunpack.c.l.b16 %v502
    %v1883 = vunpack.c.h.b16 %v502
    %v1884 = vunpack.c.l.b16 %v503
    %v1885 = vunpack.c.h.b16 %v503
    %v1886 = vunpack.c.l.b16 %v504
    %v1887 = vunpack.c.h.b16 %v504
    %v1888 = vunpack.c.l.b16 %v505
    %v1889 = vunpack.c.h.b16 %v505
    %v1890 = vunpack.c.l.b16 %v506
    %v1891 = vunpack.c.h.b16 %v506
    %v1892 = vunpack.c.l.b16 %v507
    %v1893 = vunpack.c.h.b16 %v507
    %v1894 = vunpack.c.l.b16 %v508
    %v1895 = vunpack.c.h.b16 %v508
    %v1896 = vunpack.c.l.b16 %v509
    %v1897 = vunpack.c.h.b16 %v509
    %v1898 = vunpack.c.l.b16 %v510
    %v1899 = vunpack.c.h.b16 %v510
    %v1900 = vunpack.c.l.b16 %v511
    %v1901 = vunpack.c.h.b16 %v511
    %v1902 = vunpack.c.l.b16 %v512
    %v1903 = vunpack.c.h.b16 %v512
    %v1904 = vunpack.c.l.b16 %v513
    %v1905 = vunpack.c.h.b16 %v513
    %v1906 = vunpack.c.l.b16 %v514
    %v1907 = vunpack.c.h.b16 %v514
    %v1908 = vunpack.c.l.b16 %v515
    %v1909 = vunpack.c.h.b16 %v515
    %v1910 = vunpack.c.l.b16 %v516
    %v1911 = vunpack.c.h.b16 %v516
    %v1912 = vunpack.c.l.b16 %v517
    %v1913 = vunpack.c.h.b16 %v517
    %v1914 = vunpack.c.l.b16 %v518
    %v1915 = vunpack.c.h.b16 %v518
    %v1916 = vunpack.c.l.b16 %v519
    %v1917 = vunpack.c.h.b16 %v519
    %v1918 = vunpack.c.l.b16 %v520
    %v1919 = vunpack.c.h.b16 %v520
    %v1920 = vunpack.c.l.b16 %v521
    %v1921 = vunpack.c.h.b16 %v521
    %v1922 = vunpack.c.l.b16 %v522
    %v1923 = vunpack.c.h.b16 %v522
    %v1924 = vunpack.c.l.b16 %v523
    %v1925 = vunpack.c.h.b16 %v523
    %v1926 = vunpack.c.l.b16 %v524
    %v1927 = vunpack.c.h.b16 %v524
    %v1928 = vunpack.c.l.b16 %v525
    %v1929 = vunpack.c.h.b16 %v525
    %v1930 = vunpack.c.l.b16 %v526
    %v1931 = vunpack.c.h.b16 %v526
    %v1932 = vunpack.c.l.b16 %v527
    %v1933 = vunpack.c.h.b16 %v527
    %v1934 = vunpack.c.l.b16 %v528
    %v1935 = vunpack.c.h.b16 %v528
    %v1936 = vunpack.c.l.b16 %v529
    %v1937 = vunpack.c.h.b16 %v529
    %v1938 = vunpack.c.l.b16 %v530
    %v1939 = vunpack.c.h.b16 %v530
    %v1940 = vunpack.c.l.b16 %v531
    %v1941 = vunpack.c.h.b16 %v531
    %v1942 = vunpack.c.l.b16 %v532
    %v1943 = vunpack.c.h.b16 %v532
    %v1944 = vunpack.c.l.b16 %v533
    %v1945 = vunpack.c.h.b16 %v533
    %v1946 = vunpack.c.l.b16 %v534
    %v1947 = vunpack.c.h.b16 %v534
    %v1948 = vunpack.c.l.b16 %v535
    %v1949 = vunpack.c.h.b16 %v535
    %v1950 = vunpack.c.l.b16 %v536
    %v1951 = vunpack.c.h.b16 %v536
    %v1952 = vunpack.c.l.b16 %v537
    %v1953 = vunpack.c.h.b16 %v537
    %v1954 = vunpack.c.l.b16 %v538
    %v1955 = vunpack.c.h.b16 %v538
    %v1956 = vunpack.c.l.b16 %v539
    %v1957 = vunpack.c.h.b16 %v539
    %v1958 = vunpack.c.l.b16 %v540
    %v1959 = vunpack.c.h.b16 %v540
    %v1960 = vunpack.c.l.b16 %v541
    %v1961 = vunpack.c.h.b16 %v541
    %v1962 = vunpack.c.l.b16 %v542
    %v1963 = vunpack.c.h.b16 %v542
    %v1964 = vunpack.c.l.b16 %v543
    %v1965 = vunpack.c.h.b16 %v543
    %v1966 = vunpack.c.l.b16 %v544
    %v1967 = vunpack.c.h.b16 %v544
    %v1968 = vunpack.c.l.b16 %v545
    %v1969 = vunpack.c.h.b16 %v545
    %v1970 = vunpack.c.l.b16 %v546
    %v1971 = vunpack.c.h.b16 %v546
    %v1972 = vunpack.c.l.b16 %v547
    %v1973 = vunpack.c.h.b16 %v547
    %v1974 = vunpack.c.l.b16 %v548
    %v1975 = vunpack.c.h.b16 %v548
    %v1976 = vunpack.c.l.b16 %v549
    %v1977 = vunpack.c.h.b16 %v549
    %v1978 = vunpack.c.l.b16 %v550
    %v1979 = vunpack.c.h.b16 %v550
    %v1980 = vunpack.c.l.b16 %v551
    %v1981 = vunpack.c.h.b16 %v551
    %v1982 = vunpack.c.l.b16 %v552
    %v1983 = vunpack.c.h.b16 %v552
    %v1984 = vunpack.c.l.b16 %v553
    %v1985 = vunpack.c.h.b16 %v553
    %v1986 = vunpack.c.l.b16 %v554
    %v1987 = vunpack.c.h.b16 %v554
    %v1988 = vunpack.c.l.b16 %v555
    %v1989 = vunpack.c.h.b16 %v555
    %v1990 = vunpack.c.l.b16 %v556
    %v1991 = vunpack.c.h.b16 %v556
    %v1992 = vunpack.c.l.b16 %v557
    %v1993 = vunpack.c.h.b16 %v557
    %v1994 = vunpack.c.l.b16 %v558
    %v1995 = vunpack.c.h.b16 %v558
    %v1996 = vunpack.c.l.b16 %v559
    %v1997 = vunpack.c.h.b16 %v559
    %v1998 = vunpack.c.l.b16 %v560
    %v1999 = vunpack.c.h.b16 %v560
    %v2000 = vunpack.c.l.b16 %v561
    %v2001 = vunpack.c.h.b16 %v561
    %v2002 = vunpack.c.l.b16 %v562
    %v2003 = vunpack.c.h.b16 %v562
    %v2004 = vunpack.c.l.b16 %v563
    %v2005 = vunpack.c.h.b16 %v563
    %v2006 = vunpack.c.l.b16 %v564
    %v2007 = vunpack.c.h.b16 %v564
    %v2008 = vunpack.c.l.b16 %v565
    %v2009 = vunpack.c.h.b16 %v565
    %v2010 = vunpack.c.l.b16 %v566
    %v2011 = vunpack.c.h.b16 %v566
    %v2012 = vunpack.c.l.b16 %v567
    %v2013 = vunpack.c.h.b16 %v567
    %v2014 = vunpack.c.l.b16 %v568
    %v2015 = vunpack.c.h.b16 %v568
    %v2016 = vunpack.c.l.b16 %v569
    %v2017 = vunpack.c.h.b16 %v569
    %v2018 = vunpack.c.l.b16 %v570
    %v2019 = vunpack.c.h.b16 %v570
    %v2020 = vunpack.c.l.b16 %v571
    %v2021 = vunpack.c.h.b16 %v571
    %v2022 = vunpack.c.l.b16 %v572
    %v2023 = vunpack.c.h.b16 %v572
    %v2024 = vunpack.c.l.b16 %v573
    %v2025 = vunpack.c.h.b16 %v573
    %v2026 = vunpack.c.l.b16 %v574
    %v2027 = vunpack.c.h.b16 %v574
    %v2028 = vunpack.c.l.b16 %v575
    %v2029 = vunpack.c.h.b16 %v575
    %v2030 = vunpack.c.l.b16 %v576
    %v2031 = vunpack.c.h.b16 %v576
    %v2032 = vunpack.c.l.b16 %v577
    %v2033 = vunpack.c.h.b16 %v577
    %v2034 = vunpack.c.l.b16 %v578
    %v2035 = vunpack.c.h.b16 %v578
    %v2036 = vunpack.c.l.b16 %v579
    %v2037 = vunpack.c.h.b16 %v579
    %v2038 = vunpack.c.l.b16 %v580
    %v2039 = vunpack.c.h.b16 %v580
    %v2040 = vunpack.c.l.b16 %v581
    %v2041 = vunpack.c.h.b16 %v581
    %v2042 = vunpack.c.l.b16 %v582
    %v2043 = vunpack.c.h.b16 %v582
    %v2044 = vunpack.c.l.b16 %v583
    %v2045 = vunpack.c.h.b16 %v583
    %v2046 = vunpack.c.l.b16 %v584
    %v2047 = vunpack.c.h.b16 %v584
    %v2048 = vunpack.c.l.b16 %v585
    %v2049 = vunpack.c.h.b16 %v585
    %v2050 = vunpack.c.l.b16 %v586
    %v2051 = vunpack.c.h.b16 %v586
    %v2052 = vunpack.c.l.b16 %v587
    %v2053 = vunpack.c.h.b16 %v587
    %v2054 = vunpack.c.l.b16 %v588
    %v2055 = vunpack.c.h.b16 %v588
    %v2056 = vunpack.c.l.b16 %v589
    %v2057 = vunpack.c.h.b16 %v589
    %v2058 = vunpack.c.l.b16 %v590
    %v2059 = vunpack.c.h.b16 %v590
    %v2060 = vunpack.c.l.b16 %v591
    %v2061 = vunpack.c.h.b16 %v591
    %v2062 = vunpack.c.l.b16 %v592
    %v2063 = vunpack.c.h.b16 %v592
    %v2064 = vunpack.c.l.b16 %v593
    %v2065 = vunpack.c.h.b16 %v593
    %v2066 = vunpack.c.l.b16 %v594
    %v2067 = vunpack.c.h.b16 %v594
    %v2068 = vunpack.c.l.b16 %v595
    %v2069 = vunpack.c.h.b16 %v595
    %v2070 = vunpack.c.l.b16 %v596
    %v2071 = vunpack.c.h.b16 %v596
    %v2072 = vunpack.c.l.b16 %v597
    %v2073 = vunpack.c.h.b16 %v597
    %v2074 = vunpack.c.l.b16 %v598
    %v2075 = vunpack.c.h.b16 %v598
    %v2076 = vunpack.c.l.b16 %v599
    %v2077 = vunpack.c.h.b16 %v599
    %v2078 = vunpack.c.l.b16 %v600
    %v2079 = vunpack.c.h.b16 %v600
    %v2080 = vunpack.c.l.b16 %v601
    %v2081 = vunpack.c.h.b16 %v601
    %v2082 = vunpack.c.l.b16 %v602
    %v2083 = vunpack.c.h.b16 %v602
    %v2084 = vunpack.c.l.b16 %v603
    %v2085 = vunpack.c.h.b16 %v603
    %v2086 = vunpack.c.l.b16 %v604
    %v2087 = vunpack.c.h.b16 %v604
    %v2088 = vunpack.c.l.b16 %v605
    %v2089 = vunpack.c.h.b16 %v605
    %v2090 = vunpack.c.l.b16 %v606
    %v2091 = vunpack.c.h.b16 %v606
    %v2092 = vunpack.c.l.b16 %v607
    %v2093 = vunpack.c.h.b16 %v607
    %v2094 = vunpack.c.l.b16 %v608
    %v2095 = vunpack.c.h.b16 %v608
    %v2096 = vunpack.c.l.b16 %v609
    %v2097 = vunpack.c.h.b16 %v609
    %v2098 = vunpack.c.l.b16 %v610
    %v2099 = vunpack.c.h.b16 %v610
    %v2100 = vunpack.c.l.b16 %v611
    %v2101 = vunpack.c.h.b16 %v611
    %v2102 = vunpack.c.l.b16 %v612
    %v2103 = vunpack.c.h.b16 %v612
    %v2104 = vunpack.c.l.b16 %v613
    %v2105 = vunpack.c.h.b16 %v613
    %v2106 = vunpack.c.l.b16 %v614
    %v2107 = vunpack.c.h.b16 %v614
    %v2108 = vunpack.c.l.b16 %v615
    %v2109 = vunpack.c.h.b16 %v615
    %v2110 = vunpack.c.l.b16 %v616
    %v2111 = vunpack.c.h.b16 %v616
    %v2112 = vunpack.c.l.b16 %v617
    %v2113 = vunpack.c.h.b16 %v617
    %v2114 = vunpack.c.l.b16 %v618
    %v2115 = vunpack.c.h.b16 %v618
    %v2116 = vunpack.c.l.b16 %v619
    %v2117 = vunpack.c.h.b16 %v619
    %v2118 = vunpack.c.l.b16 %v620
    %v2119 = vunpack.c.h.b16 %v620
    %v2120 = vunpack.c.l.b16 %v621
    %v2121 = vunpack.c.h.b16 %v621
    %v2122 = vunpack.c.l.b16 %v622
    %v2123 = vunpack.c.h.b16 %v622
    %v2124 = vunpack.c.l.b16 %v623
    %v2125 = vunpack.c.h.b16 %v623
    %v2126 = vunpack.c.l.b16 %v624
    %v2127 = vunpack.c.h.b16 %v624
    %v2128 = vunpack.c.l.b16 %v625
    %v2129 = vunpack.c.h.b16 %v625
    %v2130 = vunpack.c.l.b16 %v626
    %v2131 = vunpack.c.h.b16 %v626
    %v2132 = vunpack.c.l.b16 %v627
    %v2133 = vunpack.c.h.b16 %v627
    %v2134 = vunpack.c.l.b16 %v628
    %v2135 = vunpack.c.h.b16 %v628
    %v2136 = vunpack.c.l.b16 %v629
    %v2137 = vunpack.c.h.b16 %v629
    %v2138 = vunpack.c.l.b16 %v630
    %v2139 = vunpack.c.h.b16 %v630
    %v2140 = vunpack.c.l.b16 %v631
    %v2141 = vunpack.c.h.b16 %v631
    %v2142 = vunpack.c.l.b16 %v632
    %v2143 = vunpack.c.h.b16 %v632
    %v2144 = vunpack.c.l.b16 %v633
    %v2145 = vunpack.c.h.b16 %v633
    %v2146 = vunpack.c.l.b16 %v634
    %v2147 = vunpack.c.h.b16 %v634
    %v2148 = vunpack.c.l.b16 %v635
    %v2149 = vunpack.c.h.b16 %v635
    %v2150 = vunpack.c.l.b16 %v636
    %v2151 = vunpack.c.h.b16 %v636
    %v2152 = vunpack.c.l.b16 %v637
    %v2153 = vunpack.c.h.b16 %v637
    %v2154 = vunpack.c.l.b16 %v638
    %v2155 = vunpack.c.h.b16 %v638
    %v2156 = vunpack.c.l.b16 %v639
    %v2157 = vunpack.c.h.b16 %v639
    %v2158 = vunpack.c.l.b16 %v640
    %v2159 = vunpack.c.h.b16 %v640
    %v2160 = vunpack.c.l.b16 %v641
    %v2161 = vunpack.c.h.b16 %v641
    %v2162 = vunpack.c.l.b16 %v642
    %v2163 = vunpack.c.h.b16 %v642
    %v2164 = vunpack.c.l.b16 %v643
    %v2165 = vunpack.c.h.b16 %v643
    %v2166 = vunpack.c.l.b16 %v644
    %v2167 = vunpack.c.h.b16 %v644
    %v2168 = vunpack.c.l.b16 %v645
    %v2169 = vunpack.c.h.b16 %v645
    %v2170 = vunpack.c.l.b16 %v646
    %v2171 = vunpack.c.h.b16 %v646
    %v2172 = vunpack.c.l.b16 %v647
    %v2173 = vunpack.c.h.b16 %v647
    %v2174 = vunpack.c.l.b16 %v648
    %v2175 = vunpack.c.h.b16 %v648
    %v2176 = vunpack.c.l.b16 %v649
    %v2177 = vunpack.c.h.b16 %v649
    %v2178 = vunpack.c.l.b16 %v650
    %v2179 = vunpack.c.h.b16 %v650
    %v2180 = vunpack.c.l.b16 %v651
    %v2181 = vunpack.c.h.b16 %v651
    %v2182 = vunpack.c.l.b16 %v652
    %v2183 = vunpack.c.h.b16 %v652
    %v2184 = vunpack.c.l.b16 %v653
    %v2185 = vunpack.c.h.b16 %v653
    %v2186 = vunpack.c.l.b16 %v654
    %v2187 = vunpack.c.h.b16 %v654
    %v2188 = vunpack.c.l.b16 %v655
    %v2189 = vunpack.c.h.b16 %v655
    %v2190 = vunpack.c.l.b16 %v656
    %v2191 = vunpack.c.h.b16 %v656
    %v2192 = vunpack.c.l.b16 %v657
    %v2193 = vunpack.c.h.b16 %v657
    %v2194 = vunpack.c.l.b16 %v658
    %v2195 = vunpack.c.h.b16 %v658
    %v2196 = vunpack.c.l.b16 %v659
    %v2197 = vunpack.c.h.b16 %v659
    %v2198 = vunpack.c.l.b16 %v660
    %v2199 = vunpack.c.h.b16 %v660
    %v2200 = vunpack.c.l.b16 %v661
    %v2201 = vunpack.c.h.b16 %v661
    %v2202 = vunpack.c.l.b16 %v662
    %v2203 = vunpack.c.h.b16 %v662
    %v2204 = vunpack.c.l.b16 %v663
    %v2205 = vunpack.c.h.b16 %v663
    %v2206 = vunpack.c.l.b16 %v664
    %v2207 = vunpack.c.h.b16 %v664
    %v2208 = vunpack.c.l.b16 %v665
    %v2209 = vunpack.c.h.b16 %v665
    %v2210 = vunpack.c.l.b16 %v666
    %v2211 = vunpack.c.h.b16 %v666
    %v2212 = vunpack.c.l.b16 %v667
    %v2213 = vunpack.c.h.b16 %v667
    %v2214 = vunpack.c.l.b16 %v668
    %v2215 = vunpack.c.h.b16 %v668
    %v2216 = vunpack.c.l.b16 %v669
    %v2217 = vunpack.c.h.b16 %v669
    %v2218 = vunpack.c.l.b16 %v670
    %v2219 = vunpack.c.h.b16 %v670
    %v2220 = vunpack.c.l.b16 %v671
    %v2221 = vunpack.c.h.b16 %v671
    %v2222 = vunpack.c.l.b16 %v672
    %v2223 = vunpack.c.h.b16 %v672
    %v2224 = vunpack.c.l.b16 %v673
    %v2225 = vunpack.c.h.b16 %v673
    %v2226 = vunpack.c.l.b16 %v674
    %v2227 = vunpack.c.h.b16 %v674
    %v2228 = vunpack.c.l.b16 %v675
    %v2229 = vunpack.c.h.b16 %v675
    %v2230 = vunpack.c.l.b16 %v676
    %v2231 = vunpack.c.h.b16 %v676
    %v2232 = vunpack.c.l.b16 %v677
    %v2233 = vunpack.c.h.b16 %v677
    %v2234 = vunpack.c.l.b16 %v678
    %v2235 = vunpack.c.h.b16 %v678
    %v2236 = vunpack.c.l.b16 %v679
    %v2237 = vunpack.c.h.b16 %v679
    %v2238 = vunpack.c.l.b16 %v680
    %v2239 = vunpack.c.h.b16 %v680
    %v2240 = vunpack.c.l.b16 %v681
    %v2241 = vunpack.c.h.b16 %v681
    %v2242 = vunpack.c.l.b16 %v682
    %v2243 = vunpack.c.h.b16 %v682
    %v2244 = vunpack.c.l.b16 %v683
    %v2245 = vunpack.c.h.b16 %v683
    %v2246 = vunpack.c.l.b16 %v684
    %v2247 = vunpack.c.h.b16 %v684
    %v2248 = vunpack.c.l.b16 %v685
    %v2249 = vunpack.c.h.b16 %v685
    %v2250 = vunpack.c.l.b16 %v686
    %v2251 = vunpack.c.h.b16 %v686
    %v2252 = vunpack.c.l.b16 %v687
    %v2253 = vunpack.c.h.b16 %v687
    %v2254 = vunpack.c.l.b16 %v688
    %v2255 = vunpack.c.h.b16 %v688
    %v2256 = vunpack.c.l.b16 %v689
    %v2257 = vunpack.c.h.b16 %v689
    %v2258 = vunpack.c.l.b16 %v690
    %v2259 = vunpack.c.h.b16 %v690
    %v2260 = vunpack.c.l.b16 %v691
    %v2261 = vunpack.c.h.b16 %v691
    %v2262 = vunpack.c.l.b16 %v692
    %v2263 = vunpack.c.h.b16 %v692
    %v2264 = vunpack.c.l.b16 %v693
    %v2265 = vunpack.c.h.b16 %v693
    %v2266 = vunpack.c.l.b16 %v694
    %v2267 = vunpack.c.h.b16 %v694
    %v2268 = vunpack.c.l.b16 %v695
    %v2269 = vunpack.c.h.b16 %v695
    %v2270 = vunpack.c.l.b16 %v696
    %v2271 = vunpack.c.h.b16 %v696
    %v2272 = vunpack.c.l.b16 %v697
    %v2273 = vunpack.c.h.b16 %v697
    %v2274 = vunpack.c.l.b16 %v698
    %v2275 = vunpack.c.h.b16 %v698
    %v2276 = vunpack.c.l.b16 %v699
    %v2277 = vunpack.c.h.b16 %v699
    %v2278 = vunpack.c.l.b16 %v700
    %v2279 = vunpack.c.h.b16 %v700
    %v2280 = vunpack.c.l.b16 %v701
    %v2281 = vunpack.c.h.b16 %v701
    %v2282 = vunpack.c.l.b16 %v702
    %v2283 = vunpack.c.h.b16 %v702
    %v2284 = vunpack.c.l.b16 %v703
    %v2285 = vunpack.c.h.b16 %v703
    %v2286 = vunpack.c.l.b16 %v704
    %v2287 = vunpack.c.h.b16 %v704
    %v2288 = vunpack.c.l.b16 %v705
    %v2289 = vunpack.c.h.b16 %v705
    %v2290 = vunpack.c.l.b16 %v706
    %v2291 = vunpack.c.h.b16 %v706
    %v2292 = vunpack.c.l.b16 %v707
    %v2293 = vunpack.c.h.b16 %v707
    %v2294 = vunpack.c.l.b16 %v708
    %v2295 = vunpack.c.h.b16 %v708
    %v2296 = vunpack.c.l.b16 %v709
    %v2297 = vunpack.c.h.b16 %v709
    %v2298 = vunpack.c.l.b16 %v710
    %v2299 = vunpack.c.h.b16 %v710
    %v2300 = vunpack.c.l.b16 %v711
    %v2301 = vunpack.c.h.b16 %v711
    %v2302 = vunpack.c.l.b16 %v712
    %v2303 = vunpack.c.h.b16 %v712
    %v2304 = vunpack.c.l.b16 %v713
    %v2305 = vunpack.c.h.b16 %v713
    %v2306 = vunpack.c.l.b16 %v714
    %v2307 = vunpack.c.h.b16 %v714
    %v2308 = vunpack.c.l.b16 %v715
    %v2309 = vunpack.c.h.b16 %v715
    %v2310 = vunpack.c.l.b16 %v716
    %v2311 = vunpack.c.h.b16 %v716
    %v2312 = vunpack.c.l.b16 %v717
    %v2313 = vunpack.c.h.b16 %v717
    %v2314 = vunpack.c.l.b16 %v718
    %v2315 = vunpack.c.h.b16 %v718
    %v2316 = vunpack.c.l.b16 %v719
    %v2317 = vunpack.c.h.b16 %v719
    %v2318 = vunpack.c.l.b16 %v720
    %v2319 = vunpack.c.h.b16 %v720
    %v2320 = vunpack.c.l.b16 %v721
    %v2321 = vunpack.c.h.b16 %v721
    %v2322 = vunpack.c.l.b16 %v722
    %v2323 = vunpack.c.h.b16 %v722
    %v2324 = vunpack.c.l.b16 %v723
    %v2325 = vunpack.c.h.b16 %v723
    %v2326 = vunpack.c.l.b16 %v724
    %v2327 = vunpack.c.h.b16 %v724
    %v2328 = vunpack.c.l.b16 %v725
    %v2329 = vunpack.c.h.b16 %v725
    %v2330 = vunpack.c.l.b16 %v726
    %v2331 = vunpack.c.h.b16 %v726
    %v2332 = vunpack.c.l.b16 %v727
    %v2333 = vunpack.c.h.b16 %v727
    %v2334 = vunpack.c.l.b16 %v728
    %v2335 = vunpack.c.h.b16 %v728
    %v2336 = vunpack.c.l.b16 %v729
    %v2337 = vunpack.c.h.b16 %v729
    %v2338 = vunpack.c.l.b16 %v730
    %v2339 = vunpack.c.h.b16 %v730
    %v2340 = vunpack.c.l.b16 %v731
    %v2341 = vunpack.c.h.b16 %v731
    %v2342 = vunpack.c.l.b16 %v732
    %v2343 = vunpack.c.h.b16 %v732
    %v2344 = vunpack.c.l.b16 %v733
    %v2345 = vunpack.c.h.b16 %v733
    %v2346 = vunpack.c.l.b16 %v734
    %v2347 = vunpack.c.h.b16 %v734
    %v2348 = vunpack.c.l.b16 %v735
    %v2349 = vunpack.c.h.b16 %v735
    %v2350 = vunpack.c.l.b16 %v736
    %v2351 = vunpack.c.h.b16 %v736
    %v2352 = vunpack.c.l.b16 %v737
    %v2353 = vunpack.c.h.b16 %v737
    %v2354 = vunpack.c.l.b16 %v738
    %v2355 = vunpack.c.h.b16 %v738
    %v2356 = vunpack.c.l.b16 %v739
    %v2357 = vunpack.c.h.b16 %v739
    %v2358 = vunpack.c.l.b16 %v740
    %v2359 = vunpack.c.h.b16 %v740
    %v2360 = vunpack.c.l.b16 %v741
    %v2361 = vunpack.c.h.b16 %v741
    %v2362 = vpack.c.b16 %v1354, %v1338
    %v2363 = vpack.c.b16 %v1355, %v1339
    %v2364 = vpack.c.b16 %v1356, %v1340
    %v2365 = vpack.c.b16 %v1357, %v1341
    %v2366 = vpack.c.b16 %v1358, %v1342
    %v2367 = vpack.c.b16 %v1359, %v1343
    %v2368 = vpack.c.b16 %v1360, %v1344
    %v2369 = vpack.c.b16 %v1361, %v1345
    %v2370 = vpack.c.b16 %v1362, %v1346
    %v2371 = vpack.c.b16 %v1363, %v1347
    %v2372 = vpack.c.b16 %v1364, %v1348
    %v2373 = vpack.c.b16 %v1365, %v1349
    %v2374 = vpack.c.b16 %v1366, %v1350
    %v2375 = vpack.c.b16 %v1367, %v1351
    %v2376 = vpack.c.b16 %v1368, %v1352
    %v2377 = vpack.c.b16 %v1369, %v1353
    %v2378 = vpack.c.b16 %v1386, %v1370
    %v2379 = vpack.c.b16 %v1387, %v1371
    %v2380 = vpack.c.b16 %v1388, %v1372
    %v2381 = vpack.c.b16 %v1389, %v1373
    %v2382 = vpack.c.b16 %v1390, %v1374
    %v2383 = vpack.c.b16 %v1391, %v1375
    %v2384 = vpack.c.b16 %v1392, %v1376
    %v2385 = vpack.c.b16 %v1393, %v1377
    %v2386 = vpack.c.b16 %v1394, %v1378
    %v2387 = vpack.c.b16 %v1395, %v1379
    %v2388 = vpack.c.b16 %v1396, %v1380
    %v2389 = vpack.c.b16 %v1397, %v1381
    %v2390 = vpack.c.b16 %v1398, %v1382
    %v2391 = vpack.c.b16 %v1399, %v1383
    %v2392 = vpack.c.b16 %v1400, %v1384
    %v2393 = vpack.c.b16 %v1401, %v1385
    %v2394 = vpack.c.b16 %v1418, %v1402
    %v2395 = vpack.c.b16 %v1419, %v1403
    %v2396 = vpack.c.b16 %v1420, %v1404
    %v2397 = vpack.c.b16 %v1421, %v1405
    %v2398 = vpack.c.b16 %v1422, %v1406
    %v2399 = vpack.c.b16 %v1423, %v1407
    %v2400 = vpack.c.b16 %v1424, %v1408
    %v2401 = vpack.c.b16 %v1425, %v1409
    %v2402 = vpack.c.b16 %v1426, %v1410
    %v2403 = vpack.c.b16 %v1427, %v1411
    %v2404 = vpack.c.b16 %v1428, %v1412
    %v2405 = vpack.c.b16 %v1429, %v1413
    %v2406 = vpack.c.b16 %v1430, %v1414
    %v2407 = vpack.c.b16 %v1431, %v1415
    %v2408 = vpack.c.b16 %v1432, %v1416
    %v2409 = vpack.c.b16 %v1433, %v1417
    %v2410 = vpack.c.b16 %v1450, %v1434
    %v2411 = vpack.c.b16 %v1451, %v1435
    %v2412 = vpack.c.b16 %v1452, %v1436
    %v2413 = vpack.c.b16 %v1453, %v1437
    %v2414 = vpack.c.b16 %v1454, %v1438
    %v2415 = vpack.c.b16 %v1455, %v1439
    %v2416 = vpack.c.b16 %v1456, %v1440
    %v2417 = vpack.c.b16 %v1457, %v1441
    %v2418 = vpack.c.b16 %v1458, %v1442
    %v2419 = vpack.c.b16 %v1459, %v1443
    %v2420 = vpack.c.b16 %v1460, %v1444
    %v2421 = vpack.c.b16 %v1461, %v1445
    %v2422 = vpack.c.b16 %v1462, %v1446
    %v2423 = vpack.c.b16 %v1463, %v1447
    %v2424 = vpack.c.b16 %v1464, %v1448
    %v2425 = vpack.c.b16 %v1465, %v1449
    %v2426 = vpack.c.b16 %v1482, %v1466
    %v2427 = vpack.c.b16 %v1483, %v1467
    %v2428 = vpack.c.b16 %v1484, %v1468
    %v2429 = vpack.c.b16 %v1485, %v1469
    %v2430 = vpack.c.b16 %v1486, %v1470
    %v2431 = vpack.c.b16 %v1487, %v1471
    %v2432 = vpack.c.b16 %v1488, %v1472
    %v2433 = vpack.c.b16 %v1489, %v1473
    %v2434 = vpack.c.b16 %v1490, %v1474
    %v2435 = vpack.c.b16 %v1491, %v1475
    %v2436 = vpack.c.b16 %v1492, %v1476
    %v2437 = vpack.c.b16 %v1493, %v1477
    %v2438 = vpack.c.b16 %v1494, %v1478
    %v2439 = vpack.c.b16 %v1495, %v1479
    %v2440 = vpack.c.b16 %v1496, %v1480
    %v2441 = vpack.c.b16 %v1497, %v1481
    %v2442 = vpack.c.b16 %v1514, %v1498
    %v2443 = vpack.c.b16 %v1515, %v1499
    %v2444 = vpack.c.b16 %v1516, %v1500
    %v2445 = vpack.c.b16 %v1517, %v1501
    %v2446 = vpack.c.b16 %v1518, %v1502
    %v2447 = vpack.c.b16 %v1519, %v1503
    %v2448 = vpack.c.b16 %v1520, %v1504
    %v2449 = vpack.c.b16 %v1521, %v1505
    %v2450 = vpack.c.b16 %v1522, %v1506
    %v2451 = vpack.c.b16 %v1523, %v1507
    %v2452 = vpack.c.b16 %v1524, %v1508
    %v2453 = vpack.c.b16 %v1525, %v1509
    %v2454 = vpack.c.b16 %v1526, %v1510
    %v2455 = vpack.c.b16 %v1527, %v1511
    %v2456 = vpack.c.b16 %v1528, %v1512
    %v2457 = vpack.c.b16 %v1529, %v1513
    %v2458 = vpack.c.b16 %v1546, %v1530
    %v2459 = vpack.c.b16 %v1547, %v1531
    %v2460 = vpack.c.b16 %v1548, %v1532
    %v2461 = vpack.c.b16 %v1549, %v1533
    %v2462 = vpack.c.b16 %v1550, %v1534
    %v2463 = vpack.c.b16 %v1551, %v1535
    %v2464 = vpack.c.b16 %v1552, %v1536
    %v2465 = vpack.c.b16 %v1553, %v1537
    %v2466 = vpack.c.b16 %v1554, %v1538
    %v2467 = vpack.c.b16 %v1555, %v1539
    %v2468 = vpack.c.b16 %v1556, %v1540
    %v2469 = vpack.c.b16 %v1557, %v1541
    %v2470 = vpack.c.b16 %v1558, %v1542
    %v2471 = vpack.c.b16 %v1559, %v1543
    %v2472 = vpack.c.b16 %v1560, %v1544
    %v2473 = vpack.c.b16 %v1561, %v1545
    %v2474 = vpack.c.b16 %v1578, %v1562
    %v2475 = vpack.c.b16 %v1579, %v1563
    %v2476 = vpack.c.b16 %v1580, %v1564
    %v2477 = vpack.c.b16 %v1581, %v1565
    %v2478 = vpack.c.b16 %v1582, %v1566
    %v2479 = vpack.c.b16 %v1583, %v1567
    %v2480 = vpack.c.b16 %v1584, %v1568
    %v2481 = vpack.c.b16 %v1585, %v1569
    %v2482 = vpack.c.b16 %v1586, %v1570
    %v2483 = vpack.c.b16 %v1587, %v1571
    %v2484 = vpack.c.b16 %v1588, %v1572
    %v2485 = vpack.c.b16 %v1589, %v1573
    %v2486 = vpack.c.b16 %v1590, %v1574
    %v2487 = vpack.c.b16 %v1591, %v1575
    %v2488 = vpack.c.b16 %v1592, %v1576
    %v2489 = vpack.c.b16 %v1593, %v1577
    %v2490 = vpack.c.b16 %v1610, %v1594
    %v2491 = vpack.c.b16 %v1611, %v1595
    %v2492 = vpack.c.b16 %v1612, %v1596
    %v2493 = vpack.c.b16 %v1613, %v1597
    %v2494 = vpack.c.b16 %v1614, %v1598
    %v2495 = vpack.c.b16 %v1615, %v1599
    %v2496 = vpack.c.b16 %v1616, %v1600
    %v2497 = vpack.c.b16 %v1617, %v1601
    %v2498 = vpack.c.b16 %v1618, %v1602
    %v2499 = vpack.c.b16 %v1619, %v1603
    %v2500 = vpack.c.b16 %v1620, %v1604
    %v2501 = vpack.c.b16 %v1621, %v1605
    %v2502 = vpack.c.b16 %v1622, %v1606
    %v2503 = vpack.c.b16 %v1623, %v1607
    %v2504 = vpack.c.b16 %v1624, %v1608
    %v2505 = vpack.c.b16 %v1625, %v1609
    %v2506 = vpack.c.b16 %v1642, %v1626
    %v2507 = vpack.c.b16 %v1643, %v1627
    %v2508 = vpack.c.b16 %v1644, %v1628
    %v2509 = vpack.c.b16 %v1645, %v1629
    %v2510 = vpack.c.b16 %v1646, %v1630
    %v2511 = vpack.c.b16 %v1647, %v1631
    %v2512 = vpack.c.b16 %v1648, %v1632
    %v2513 = vpack.c.b16 %v1649, %v1633
    %v2514 = vpack.c.b16 %v1650, %v1634
    %v2515 = vpack.c.b16 %v1651, %v1635
    %v2516 = vpack.c.b16 %v1652, %v1636
    %v2517 = vpack.c.b16 %v1653, %v1637
    %v2518 = vpack.c.b16 %v1654, %v1638
    %v2519 = vpack.c.b16 %v1655, %v1639
    %v2520 = vpack.c.b16 %v1656, %v1640
    %v2521 = vpack.c.b16 %v1657, %v1641
    %v2522 = vpack.c.b16 %v1674, %v1658
    %v2523 = vpack.c.b16 %v1675, %v1659
    %v2524 = vpack.c.b16 %v1676, %v1660
    %v2525 = vpack.c.b16 %v1677, %v1661
    %v2526 = vpack.c.b16 %v1678, %v1662
    %v2527 = vpack.c.b16 %v1679, %v1663
    %v2528 = vpack.c.b16 %v1680, %v1664
    %v2529 = vpack.c.b16 %v1681, %v1665
    %v2530 = vpack.c.b16 %v1682, %v1666
    %v2531 = vpack.c.b16 %v1683, %v1667
    %v2532 = vpack.c.b16 %v1684, %v1668
    %v2533 = vpack.c.b16 %v1685, %v1669
    %v2534 = vpack.c.b16 %v1686, %v1670
    %v2535 = vpack.c.b16 %v1687, %v1671
    %v2536 = vpack.c.b16 %v1688, %v1672
    %v2537 = vpack.c.b16 %v1689, %v1673
    %v2538 = vpack.c.b16 %v1706, %v1690
    %v2539 = vpack.c.b16 %v1707, %v1691
    %v2540 = vpack.c.b16 %v1708, %v1692
    %v2541 = vpack.c.b16 %v1709, %v1693
    %v2542 = vpack.c.b16 %v1710, %v1694
    %v2543 = vpack.c.b16 %v1711, %v1695
    %v2544 = vpack.c.b16 %v1712, %v1696
    %v2545 = vpack.c.b16 %v1713, %v1697
    %v2546 = vpack.c.b16 %v1714, %v1698
    %v2547 = vpack.c.b16 %v1715, %v1699
    %v2548 = vpack.c.b16 %v1716, %v1700
    %v2549 = vpack.c.b16 %v1717, %v1701
    %v2550 = vpack.c.b16 %v1718, %v1702
    %v2551 = vpack.c.b16 %v1719, %v1703
    %v2552 = vpack.c.b16 %v1720, %v1704
    %v2553 = vpack.c.b16 %v1721, %v1705
    %v2554 = vpack.c.b16 %v1738, %v1722
    %v2555 = vpack.c.b16 %v1739, %v1723
    %v2556 = vpack.c.b16 %v1740, %v1724
    %v2557 = vpack.c.b16 %v1741, %v1725
    %v2558 = vpack.c.b16 %v1742, %v1726
    %v2559 = vpack.c.b16 %v1743, %v1727
    %v2560 = vpack.c.b16 %v1744, %v1728
    %v2561 = vpack.c.b16 %v1745, %v1729
    %v2562 = vpack.c.b16 %v1746, %v1730
    %v2563 = vpack.c.b16 %v1747, %v1731
    %v2564 = vpack.c.b16 %v1748, %v1732
    %v2565 = vpack.c.b16 %v1749, %v1733
    %v2566 = vpack.c.b16 %v1750, %v1734
    %v2567 = vpack.c.b16 %v1751, %v1735
    %v2568 = vpack.c.b16 %v1752, %v1736
    %v2569 = vpack.c.b16 %v1753, %v1737
    %v2570 = vpack.c.b16 %v1770, %v1754
    %v2571 = vpack.c.b16 %v1771, %v1755
    %v2572 = vpack.c.b16 %v1772, %v1756
    %v2573 = vpack.c.b16 %v1773, %v1757
    %v2574 = vpack.c.b16 %v1774, %v1758
    %v2575 = vpack.c.b16 %v1775, %v1759
    %v2576 = vpack.c.b16 %v1776, %v1760
    %v2577 = vpack.c.b16 %v1777, %v1761
    %v2578 = vpack.c.b16 %v1778, %v1762
    %v2579 = vpack.c.b16 %v1779, %v1763
    %v2580 = vpack.c.b16 %v1780, %v1764
    %v2581 = vpack.c.b16 %v1781, %v1765
    %v2582 = vpack.c.b16 %v1782, %v1766
    %v2583 = vpack.c.b16 %v1783, %v1767
    %v2584 = vpack.c.b16 %v1784, %v1768
    %v2585 = vpack.c.b16 %v1785, %v1769
    %v2586 = vpack.c.b16 %v1802, %v1786
    %v2587 = vpack.c.b16 %v1803, %v1787
    %v2588 = vpack.c.b16 %v1804, %v1788
    %v2589 = vpack.c.b16 %v1805, %v1789
    %v2590 = vpack.c.b16 %v1806, %v1790
    %v2591 = vpack.c.b16 %v1807, %v1791
    %v2592 = vpack.c.b16 %v1808, %v1792
    %v2593 = vpack.c.b16 %v1809, %v1793
    %v2594 = vpack.c.b16 %v1810, %v1794
    %v2595 = vpack.c.b16 %v1811, %v1795
    %v2596 = vpack.c.b16 %v1812, %v1796
    %v2597 = vpack.c.b16 %v1813, %v1797
    %v2598 = vpack.c.b16 %v1814, %v1798
    %v2599 = vpack.c.b16 %v1815, %v1799
    %v2600 = vpack.c.b16 %v1816, %v1800
    %v2601 = vpack.c.b16 %v1817, %v1801
    %v2602 = vpack.c.b16 %v1834, %v1818
    %v2603 = vpack.c.b16 %v1835, %v1819
    %v2604 = vpack.c.b16 %v1836, %v1820
    %v2605 = vpack.c.b16 %v1837, %v1821
    %v2606 = vpack.c.b16 %v1838, %v1822
    %v2607 = vpack.c.b16 %v1839, %v1823
    %v2608 = vpack.c.b16 %v1840, %v1824
    %v2609 = vpack.c.b16 %v1841, %v1825
    %v2610 = vpack.c.b16 %v1842, %v1826
    %v2611 = vpack.c.b16 %v1843, %v1827
    %v2612 = vpack.c.b16 %v1844, %v1828
    %v2613 = vpack.c.b16 %v1845, %v1829
    %v2614 = vpack.c.b16 %v1846, %v1830
    %v2615 = vpack.c.b16 %v1847, %v1831
    %v2616 = vpack.c.b16 %v1848, %v1832
    %v2617 = vpack.c.b16 %v1849, %v1833
    %v2618 = vpack.c.b16 %v1866, %v1850
    %v2619 = vpack.c.b16 %v1867, %v1851
    %v2620 = vpack.c.b16 %v1868, %v1852
    %v2621 = vpack.c.b16 %v1869, %v1853
    %v2622 = vpack.c.b16 %v1870, %v1854
    %v2623 = vpack.c.b16 %v1871, %v1855
    %v2624 = vpack.c.b16 %v1872, %v1856
    %v2625 = vpack.c.b16 %v1873, %v1857
    %v2626 = vpack.c.b16 %v1874, %v1858
    %v2627 = vpack.c.b16 %v1875, %v1859
    %v2628 = vpack.c.b16 %v1876, %v1860
    %v2629 = vpack.c.b16 %v1877, %v1861
    %v2630 = vpack.c.b16 %v1878, %v1862
    %v2631 = vpack.c.b16 %v1879, %v1863
    %v2632 = vpack.c.b16 %v1880, %v1864
    %v2633 = vpack.c.b16 %v1881, %v1865
    %v2634 = vpack.c.b16 %v1898, %v1882
    %v2635 = vpack.c.b16 %v1899, %v1883
    %v2636 = vpack.c.b16 %v1900, %v1884
    %v2637 = vpack.c.b16 %v1901, %v1885
    %v2638 = vpack.c.b16 %v1902, %v1886
    %v2639 = vpack.c.b16 %v1903, %v1887
    %v2640 = vpack.c.b16 %v1904, %v1888
    %v2641 = vpack.c.b16 %v1905, %v1889
    %v2642 = vpack.c.b16 %v1906, %v1890
    %v2643 = vpack.c.b16 %v1907, %v1891
    %v2644 = vpack.c.b16 %v1908, %v1892
    %v2645 = vpack.c.b16 %v1909, %v1893
    %v2646 = vpack.c.b16 %v1910, %v1894
    %v2647 = vpack.c.b16 %v1911, %v1895
    %v2648 = vpack.c.b16 %v1912, %v1896
    %v2649 = vpack.c.b16 %v1913, %v1897
    %v2650 = vpack.c.b16 %v1930, %v1914
    %v2651 = vpack.c.b16 %v1931, %v1915
    %v2652 = vpack.c.b16 %v1932, %v1916
    %v2653 = vpack.c.b16 %v1933, %v1917
    %v2654 = vpack.c.b16 %v1934, %v1918
    %v2655 = vpack.c.b16 %v1935, %v1919
    %v2656 = vpack.c.b16 %v1936, %v1920
    %v2657 = vpack.c.b16 %v1937, %v1921
    %v2658 = vpack.c.b16 %v1938, %v1922
    %v2659 = vpack.c.b16 %v1939, %v1923
    %v2660 = vpack.c.b16 %v1940, %v1924
    %v2661 = vpack.c.b16 %v1941, %v1925
    %v2662 = vpack.c.b16 %v1942, %v1926
    %v2663 = vpack.c.b16 %v1943, %v1927
    %v2664 = vpack.c.b16 %v1944, %v1928
    %v2665 = vpack.c.b16 %v1945, %v1929
    %v2666 = vpack.c.b16 %v1962, %v1946
    %v2667 = vpack.c.b16 %v1963, %v1947
    %v2668 = vpack.c.b16 %v1964, %v1948
    %v2669 = vpack.c.b16 %v1965, %v1949
    %v2670 = vpack.c.b16 %v1966, %v1950
    %v2671 = vpack.c.b16 %v1967, %v1951
    %v2672 = vpack.c.b16 %v1968, %v1952
    %v2673 = vpack.c.b16 %v1969, %v1953
    %v2674 = vpack.c.b16 %v1970, %v1954
    %v2675 = vpack.c.b16 %v1971, %v1955
    %v2676 = vpack.c.b16 %v1972, %v1956
    %v2677 = vpack.c.b16 %v1973, %v1957
    %v2678 = vpack.c.b16 %v1974, %v1958
    %v2679 = vpack.c.b16 %v1975, %v1959
    %v2680 = vpack.c.b16 %v1976, %v1960
    %v2681 = vpack.c.b16 %v1977, %v1961
    %v2682 = vpack.c.b16 %v1994, %v1978
    %v2683 = vpack.c.b16 %v1995, %v1979
    %v2684 = vpack.c.b16 %v1996, %v1980
    %v2685 = vpack.c.b16 %v1997, %v1981
    %v2686 = vpack.c.b16 %v1998, %v1982
    %v2687 = vpack.c.b16 %v1999, %v1983
    %v2688 = vpack.c.b16 %v2000, %v1984
    %v2689 = vpack.c.b16 %v2001, %v1985
    %v2690 = vpack.c.b16 %v2002, %v1986
    %v2691 = vpack.c.b16 %v2003, %v1987
    %v2692 = vpack.c.b16 %v2004, %v1988
    %v2693 = vpack.c.b16 %v2005, %v1989
    %v2694 = vpack.c.b16 %v2006, %v1990
    %v2695 = vpack.c.b16 %v2007, %v1991
    %v2696 = vpack.c.b16 %v2008, %v1992
    %v2697 = vpack.c.b16 %v2009, %v1993
    %v2698 = vpack.c.b16 %v2026, %v2010
    %v2699 = vpack.c.b16 %v2027, %v2011
    %v2700 = vpack.c.b16 %v2028, %v2012
    %v2701 = vpack.c.b16 %v2029, %v2013
    %v2702 = vpack.c.b16 %v2030, %v2014
    %v2703 = vpack.c.b16 %v2031, %v2015
    %v2704 = vpack.c.b16 %v2032, %v2016
    %v2705 = vpack.c.b16 %v2033, %v2017
    %v2706 = vpack.c.b16 %v2034, %v2018
    %v2707 = vpack.c.b16 %v2035, %v2019
    %v2708 = vpack.c.b16 %v2036, %v2020
    %v2709 = vpack.c.b16 %v2037, %v2021
    %v2710 = vpack.c.b16 %v2038, %v2022
    %v2711 = vpack.c.b16 %v2039, %v2023
    %v2712 = vpack.c.b16 %v2040, %v2024
    %v2713 = vpack.c.b16 %v2041, %v2025
    %v2714 = vpack.c.b16 %v2058, %v2042
    %v2715 = vpack.c.b16 %v2059, %v2043
    %v2716 = vpack.c.b16 %v2060, %v2044
    %v2717 = vpack.c.b16 %v2061, %v2045
    %v2718 = vpack.c.b16 %v2062, %v2046
    %v2719 = vpack.c.b16 %v2063, %v2047
    %v2720 = vpack.c.b16 %v2064, %v2048
    %v2721 = vpack.c.b16 %v2065, %v2049
    %v2722 = vpack.c.b16 %v2066, %v2050
    %v2723 = vpack.c.b16 %v2067, %v2051
    %v2724 = vpack.c.b16 %v2068, %v2052
    %v2725 = vpack.c.b16 %v2069, %v2053
    %v2726 = vpack.c.b16 %v2070, %v2054
    %v2727 = vpack.c.b16 %v2071, %v2055
    %v2728 = vpack.c.b16 %v2072, %v2056
    %v2729 = vpack.c.b16 %v2073, %v2057
    %v2730 = vpack.c.b16 %v2090, %v2074
    %v2731 = vpack.c.b16 %v2091, %v2075
    %v2732 = vpack.c.b16 %v2092, %v2076
    %v2733 = vpack.c.b16 %v2093, %v2077
    %v2734 = vpack.c.b16 %v2094, %v2078
    %v2735 = vpack.c.b16 %v2095, %v2079
    %v2736 = vpack.c.b16 %v2096, %v2080
    %v2737 = vpack.c.b16 %v2097, %v2081
    %v2738 = vpack.c.b16 %v2098, %v2082
    %v2739 = vpack.c.b16 %v2099, %v2083
    %v2740 = vpack.c.b16 %v2100, %v2084
    %v2741 = vpack.c.b16 %v2101, %v2085
    %v2742 = vpack.c.b16 %v2102, %v2086
    %v2743 = vpack.c.b16 %v2103, %v2087
    %v2744 = vpack.c.b16 %v2104, %v2088
    %v2745 = vpack.c.b16 %v2105, %v2089
    %v2746 = vpack.c.b16 %v2122, %v2106
    %v2747 = vpack.c.b16 %v2123, %v2107
    %v2748 = vpack.c.b16 %v2124, %v2108
    %v2749 = vpack.c.b16 %v2125, %v2109
    %v2750 = vpack.c.b16 %v2126, %v2110
    %v2751 = vpack.c.b16 %v2127, %v2111
    %v2752 = vpack.c.b16 %v2128, %v2112
    %v2753 = vpack.c.b16 %v2129, %v2113
    %v2754 = vpack.c.b16 %v2130, %v2114
    %v2755 = vpack.c.b16 %v2131, %v2115
    %v2756 = vpack.c.b16 %v2132, %v2116
    %v2757 = vpack.c.b16 %v2133, %v2117
    %v2758 = vpack.c.b16 %v2134, %v2118
    %v2759 = vpack.c.b16 %v2135, %v2119
    %v2760 = vpack.c.b16 %v2136, %v2120
    %v2761 = vpack.c.b16 %v2137, %v2121
    %v2762 = vpack.c.b16 %v2154, %v2138
    %v2763 = vpack.c.b16 %v2155, %v2139
    %v2764 = vpack.c.b16 %v2156, %v2140
    %v2765 = vpack.c.b16 %v2157, %v2141
    %v2766 = vpack.c.b16 %v2158, %v2142
    %v2767 = vpack.c.b16 %v2159, %v2143
    %v2768 = vpack.c.b16 %v2160, %v2144
    %v2769 = vpack.c.b16 %v2161, %v2145
    %v2770 = vpack.c.b16 %v2162, %v2146
    %v2771 = vpack.c.b16 %v2163, %v2147
    %v2772 = vpack.c.b16 %v2164, %v2148
    %v2773 = vpack.c.b16 %v2165, %v2149
    %v2774 = vpack.c.b16 %v2166, %v2150
    %v2775 = vpack.c.b16 %v2167, %v2151
    %v2776 = vpack.c.b16 %v2168, %v2152
    %v2777 = vpack.c.b16 %v2169, %v2153
    %v2778 = vpack.c.b16 %v2186, %v2170
    %v2779 = vpack.c.b16 %v2187, %v2171
    %v2780 = vpack.c.b16 %v2188, %v2172
    %v2781 = vpack.c.b16 %v2189, %v2173
    %v2782 = vpack.c.b16 %v2190, %v2174
    %v2783 = vpack.c.b16 %v2191, %v2175
    %v2784 = vpack.c.b16 %v2192, %v2176
    %v2785 = vpack.c.b16 %v2193, %v2177
    %v2786 = vpack.c.b16 %v2194, %v2178
    %v2787 = vpack.c.b16 %v2195, %v2179
    %v2788 = vpack.c.b16 %v2196, %v2180
    %v2789 = vpack.c.b16 %v2197, %v2181
    %v2790 = vpack.c.b16 %v2198, %v2182
    %v2791 = vpack.c.b16 %v2199, %v2183
    %v2792 = vpack.c.b16 %v2200, %v2184
    %v2793 = vpack.c.b16 %v2201, %v2185
    %v2794 = vpack.c.b16 %v2218, %v2202
    %v2795 = vpack.c.b16 %v2219, %v2203
    %v2796 = vpack.c.b16 %v2220, %v2204
    %v2797 = vpack.c.b16 %v2221, %v2205
    %v2798 = vpack.c.b16 %v2222, %v2206
    %v2799 = vpack.c.b16 %v2223, %v2207
    %v2800 = vpack.c.b16 %v2224, %v2208
    %v2801 = vpack.c.b16 %v2225, %v2209
    %v2802 = vpack.c.b16 %v2226, %v2210
    %v2803 = vpack.c.b16 %v2227, %v2211
    %v2804 = vpack.c.b16 %v2228, %v2212
    %v2805 = vpack.c.b16 %v2229, %v2213
    %v2806 = vpack.c.b16 %v2230, %v2214
    %v2807 = vpack.c.b16 %v2231, %v2215
    %v2808 = vpack.c.b16 %v2232, %v2216
    %v2809 = vpack.c.b16 %v2233, %v2217
    %v2810 = vpack.c.b16 %v2250, %v2234
    %v2811 = vpack.c.b16 %v2251, %v2235
    %v2812 = vpack.c.b16 %v2252, %v2236
    %v2813 = vpack.c.b16 %v2253, %v2237
    %v2814 = vpack.c.b16 %v2254, %v2238
    %v2815 = vpack.c.b16 %v2255, %v2239
    %v2816 = vpack.c.b16 %v2256, %v2240
    %v2817 = vpack.c.b16 %v2257, %v2241
    %v2818 = vpack.c.b16 %v2258, %v2242
    %v2819 = vpack.c.b16 %v2259, %v2243
    %v2820 = vpack.c.b16 %v2260, %v2244
    %v2821 = vpack.c.b16 %v2261, %v2245
    %v2822 = vpack.c.b16 %v2262, %v2246
    %v2823 = vpack.c.b16 %v2263, %v2247
    %v2824 = vpack.c.b16 %v2264, %v2248
    %v2825 = vpack.c.b16 %v2265, %v2249
    %v2826 = vpack.c.b16 %v2282, %v2266
    %v2827 = vpack.c.b16 %v2283, %v2267
    %v2828 = vpack.c.b16 %v2284, %v2268
    %v2829 = vpack.c.b16 %v2285, %v2269
    %v2830 = vpack.c.b16 %v2286, %v2270
    %v2831 = vpack.c.b16 %v2287, %v2271
    %v2832 = vpack.c.b16 %v2288, %v2272
    %v2833 = vpack.c.b16 %v2289, %v2273
    %v2834 = vpack.c.b16 %v2290, %v2274
    %v2835 = vpack.c.b16 %v2291, %v2275
    %v2836 = vpack.c.b16 %v2292, %v2276
    %v2837 = vpack.c.b16 %v2293, %v2277
    %v2838 = vpack.c.b16 %v2294, %v2278
    %v2839 = vpack.c.b16 %v2295, %v2279
    %v2840 = vpack.c.b16 %v2296, %v2280
    %v2841 = vpack.c.b16 %v2297, %v2281
    %v2842 = vpack.c.b16 %v2314, %v2298
    %v2843 = vpack.c.b16 %v2315, %v2299
    %v2844 = vpack.c.b16 %v2316, %v2300
    %v2845 = vpack.c.b16 %v2317, %v2301
    %v2846 = vpack.c.b16 %v2318, %v2302
    %v2847 = vpack.c.b16 %v2319, %v2303
    %v2848 = vpack.c.b16 %v2320, %v2304
    %v2849 = vpack.c.b16 %v2321, %v2305
    %v2850 = vpack.c.b16 %v2322, %v2306
    %v2851 = vpack.c.b16 %v2323, %v2307
    %v2852 = vpack.c.b16 %v2324, %v2308
    %v2853 = vpack.c.b16 %v2325, %v2309
    %v2854 = vpack.c.b16 %v2326, %v2310
    %v2855 = vpack.c.b16 %v2327, %v2311
    %v2856 = vpack.c.b16 %v2328, %v2312
    %v2857 = vpack.c.b16 %v2329, %v2313
    %v2858 = vpack.c.b16 %v2346, %v2330
    %v2859 = vpack.c.b16 %v2347, %v2331
    %v2860 = vpack.c.b16 %v2348, %v2332
    %v2861 = vpack.c.b16 %v2349, %v2333
    %v2862 = vpack.c.b16 %v2350, %v2334
    %v2863 = vpack.c.b16 %v2351, %v2335
    %v2864 = vpack.c.b16 %v2352, %v2336
    %v2865 = vpack.c.b16 %v2353, %v2337
    %v2866 = vpack.c.b16 %v2354, %v2338
    %v2867 = vpack.c.b16 %v2355, %v2339
    %v2868 = vpack.c.b16 %v2356, %v2340
    %v2869 = vpack.c.b16 %v2357, %v2341
    %v2870 = vpack.c.b16 %v2358, %v2342
    %v2871 = vpack.c.b16 %v2359, %v2343
    %v2872 = vpack.c.b16 %v2360, %v2344
    %v2873 = vpack.c.b16 %v2361, %v2345
    %3386 = vmatprep.subr.bf16.mxu0 %v2363
    %3387 = vmatpush1.bf16.msra.mxu0 %v2362
    %3388 = vmatprep.subr.bf16.mxu0 %v2379
    %3389 = vmatpush1.bf16.msra.mxu0 %v2378
    %3390 = vmatprep.subr.bf16.mxu0 %v2395
    %3391 = vmatpush1.bf16.msra.mxu0 %v2394
    %3392 = vmatprep.subr.bf16.mxu0 %v2411
    %3393 = vmatpush1.bf16.msra.mxu0 %v2410
    %3394 = vmatprep.subr.bf16.mxu0 %v2427
    %3395 = vmatpush1.bf16.msra.mxu0 %v2426
    %3396 = vmatprep.subr.bf16.mxu0 %v2443
    %3397 = vmatpush1.bf16.msra.mxu0 %v2442
    %3398 = vmatprep.subr.bf16.mxu0 %v2459
    %3399 = vmatpush1.bf16.msra.mxu0 %v2458
    %3400 = vmatprep.subr.bf16.mxu0 %v2475
    %3401 = vmatpush1.bf16.msra.mxu0 %v2474
    %3402 = vmatprep.subr.bf16.mxu0 %v2491
    %3403 = vmatpush1.bf16.msra.mxu0 %v2490
    %3404 = vmatprep.subr.bf16.mxu0 %v2507
    %3405 = vmatpush1.bf16.msra.mxu0 %v2506
    %3406 = vmatprep.subr.bf16.mxu0 %v2523
    %3407 = vmatpush1.bf16.msra.mxu0 %v2522
    %3408 = vmatprep.subr.bf16.mxu0 %v2539
    %3409 = vmatpush1.bf16.msra.mxu0 %v2538
    %3410 = vmatprep.subr.bf16.mxu0 %v2555
    %3411 = vmatpush1.bf16.msra.mxu0 %v2554
    %3412 = vmatprep.subr.bf16.mxu0 %v2571
    %3413 = vmatpush1.bf16.msra.mxu0 %v2570
    %3414 = vmatprep.subr.bf16.mxu0 %v2587
    %3415 = vmatpush1.bf16.msra.mxu0 %v2586
    %3416 = vmatprep.subr.bf16.mxu0 %v2603
    %3417 = vmatpush1.bf16.msra.mxu0 %v2602
    %3418 = vmatprep.mubr.bf16.mxu0 %v227
    %3419 = vmatmul.mubr.bf16.gmra.mrb[0].mxu0 %v226
    %v3420 = vpop.f32.mrb[0].mxu0
    %v3421 = vadd.f32 %v749, %v3420
    %v3422 = vpop.f32.mrb[0].mxu0
    %v3423 = vadd.f32 %v753, %v3422
    %v3424 = vpop.f32.mrb[0].mxu0
    %v3425 = vpop.f32.mrb[0].mxu0
    %3426 = vdwg.mxu0
    %3427 = vmatprep.subr.bf16.mxu0 %v2619
    %3428 = vmatpush1.bf16.msra.mxu0 %v2618
    %3429 = vmatprep.subr.bf16.mxu0 %v2635
    %3430 = vmatpush1.bf16.msra.mxu0 %v2634
    %3431 = vmatprep.subr.bf16.mxu0 %v2651
    %3432 = vmatpush1.bf16.msra.mxu0 %v2650
    %3433 = vmatprep.subr.bf16.mxu0 %v2667
    %3434 = vmatpush1.bf16.msra.mxu0 %v2666
    %3435 = vmatprep.subr.bf16.mxu0 %v2683
    %3436 = vmatpush1.bf16.msra.mxu0 %v2682
    %3437 = vmatprep.subr.bf16.mxu0 %v2699
    %3438 = vmatpush1.bf16.msra.mxu0 %v2698
    %3439 = vmatprep.subr.bf16.mxu0 %v2715
    %3440 = vmatpush1.bf16.msra.mxu0 %v2714
    %3441 = vmatprep.subr.bf16.mxu0 %v2731
    %3442 = vmatpush1.bf16.msra.mxu0 %v2730
    %3443 = vmatprep.subr.bf16.mxu0 %v2747
    %3444 = vmatpush1.bf16.msra.mxu0 %v2746
    %3445 = vmatprep.subr.bf16.mxu0 %v2763
    %3446 = vmatpush1.bf16.msra.mxu0 %v2762
    %3447 = vmatprep.subr.bf16.mxu0 %v2779
    %3448 = vmatpush1.bf16.msra.mxu0 %v2778
    %3449 = vmatprep.subr.bf16.mxu0 %v2795
    %3450 = vmatpush1.bf16.msra.mxu0 %v2794
    %3451 = vmatprep.subr.bf16.mxu0 %v2811
    %3452 = vmatpush1.bf16.msra.mxu0 %v2810
    %3453 = vmatprep.subr.bf16.mxu0 %v2827
    %3454 = vmatpush1.bf16.msra.mxu0 %v2826
    %3455 = vmatprep.subr.bf16.mxu0 %v2843
    %3456 = vmatpush1.bf16.msra.mxu0 %v2842
    %3457 = vmatprep.subr.bf16.mxu0 %v2859
    %3458 = vmatpush1.bf16.msra.mxu0 %v2858
    %3459 = vmatprep.mubr.bf16.mxu0 %v229
    %3460 = vmatmul.mubr.bf16.gmra.mrb[0].mxu0 %v228
    %v3461 = vpop.f32.mrb[0].mxu0
    %v3462 = vadd.f32 %v3421, %v3461
    %v3463 = vpop.f32.mrb[0].mxu0
    %v3464 = vadd.f32 %v3423, %v3463
    %v3465 = vpop.f32.mrb[0].mxu0
    %v3466 = vpop.f32.mrb[0].mxu0
    %3467 = vdwg.mxu0
    %3468 = vmatprep.subr.bf16.mxu0 %v2365
    %3469 = vmatpush1.bf16.msra.mxu0 %v2364
    %3470 = vmatprep.subr.bf16.mxu0 %v2381
    %3471 = vmatpush1.bf16.msra.mxu0 %v2380
    %3472 = vmatprep.subr.bf16.mxu0 %v2397
    %3473 = vmatpush1.bf16.msra.mxu0 %v2396
    %3474 = vmatprep.subr.bf16.mxu0 %v2413
    %3475 = vmatpush1.bf16.msra.mxu0 %v2412
    %3476 = vmatprep.subr.bf16.mxu0 %v2429
    %3477 = vmatpush1.bf16.msra.mxu0 %v2428
    %3478 = vmatprep.subr.bf16.mxu0 %v2445
    %3479 = vmatpush1.bf16.msra.mxu0 %v2444
    %3480 = vmatprep.subr.bf16.mxu0 %v2461
    %3481 = vmatpush1.bf16.msra.mxu0 %v2460
    %3482 = vmatprep.subr.bf16.mxu0 %v2477
    %3483 = vmatpush1.bf16.msra.mxu0 %v2476
    %3484 = vmatprep.subr.bf16.mxu0 %v2493
    %3485 = vmatpush1.bf16.msra.mxu0 %v2492
    %3486 = vmatprep.subr.bf16.mxu0 %v2509
    %3487 = vmatpush1.bf16.msra.mxu0 %v2508
    %3488 = vmatprep.subr.bf16.mxu0 %v2525
    %3489 = vmatpush1.bf16.msra.mxu0 %v2524
    %3490 = vmatprep.subr.bf16.mxu0 %v2541
    %3491 = vmatpush1.bf16.msra.mxu0 %v2540
    %3492 = vmatprep.subr.bf16.mxu0 %v2557
    %3493 = vmatpush1.bf16.msra.mxu0 %v2556
    %3494 = vmatprep.subr.bf16.mxu0 %v2573
    %3495 = vmatpush1.bf16.msra.mxu0 %v2572
    %3496 = vmatprep.subr.bf16.mxu0 %v2589
    %3497 = vmatpush1.bf16.msra.mxu0 %v2588
    %3498 = vmatprep.subr.bf16.mxu0 %v2605
    %3499 = vmatpush1.bf16.msra.mxu0 %v2604
    %3500 = vmatprep.mubr.bf16.mxu0 %v227
    %3501 = vmatmul.mubr.bf16.gmra.mrb[0].mxu0 %v226
    %v3502 = vpop.f32.mrb[0].mxu0
    %v3503 = vadd.f32 %v757, %v3502
    %v3504 = vpop.f32.mrb[0].mxu0
    %v3505 = vadd.f32 %v761, %v3504
    %v3506 = vpop.f32.mrb[0].mxu0
    %v3507 = vpop.f32.mrb[0].mxu0
    %3508 = vdwg.mxu0
    %3509 = vmatprep.subr.bf16.mxu0 %v2621
    %3510 = vmatpush1.bf16.msra.mxu0 %v2620
    %3511 = vmatprep.subr.bf16.mxu0 %v2637
    %3512 = vmatpush1.bf16.msra.mxu0 %v2636
    %3513 = vmatprep.subr.bf16.mxu0 %v2653
    %3514 = vmatpush1.bf16.msra.mxu0 %v2652
    %3515 = vmatprep.subr.bf16.mxu0 %v2669
    %3516 = vmatpush1.bf16.msra.mxu0 %v2668
    %3517 = vmatprep.subr.bf16.mxu0 %v2685
    %3518 = vmatpush1.bf16.msra.mxu0 %v2684
    %3519 = vmatprep.subr.bf16.mxu0 %v2701
    %3520 = vmatpush1.bf16.msra.mxu0 %v2700
    %3521 = vmatprep.subr.bf16.mxu0 %v2717
    %3522 = vmatpush1.bf16.msra.mxu0 %v2716
    %3523 = vmatprep.subr.bf16.mxu0 %v2733
    %3524 = vmatpush1.bf16.msra.mxu0 %v2732
    %3525 = vmatprep.subr.bf16.mxu0 %v2749
    %3526 = vmatpush1.bf16.msra.mxu0 %v2748
    %3527 = vmatprep.subr.bf16.mxu0 %v2765
    %3528 = vmatpush1.bf16.msra.mxu0 %v2764
    %3529 = vmatprep.subr.bf16.mxu0 %v2781
    %3530 = vmatpush1.bf16.msra.mxu0 %v2780
    %3531 = vmatprep.subr.bf16.mxu0 %v2797
    %3532 = vmatpush1.bf16.msra.mxu0 %v2796
    %3533 = vmatprep.subr.bf16.mxu0 %v2813
    %3534 = vmatpush1.bf16.msra.mxu0 %v2812
    %3535 = vmatprep.subr.bf16.mxu0 %v2829
    %3536 = vmatpush1.bf16.msra.mxu0 %v2828
    %3537 = vmatprep.subr.bf16.mxu0 %v2845
    %3538 = vmatpush1.bf16.msra.mxu0 %v2844
    %3539 = vmatprep.subr.bf16.mxu0 %v2861
    %3540 = vmatpush1.bf16.msra.mxu0 %v2860
    %3541 = vmatprep.mubr.bf16.mxu0 %v229
    %3542 = vmatmul.mubr.bf16.gmra.mrb[0].mxu0 %v228
    %v3543 = vpop.f32.mrb[0].mxu0
    %v3544 = vadd.f32 %v3503, %v3543
    %v3545 = vpop.f32.mrb[0].mxu0
    %v3546 = vadd.f32 %v3505, %v3545
    %v3547 = vpop.f32.mrb[0].mxu0
    %v3548 = vpop.f32.mrb[0].mxu0
    %3549 = vdwg.mxu0
    %3550 = vmatprep.subr.bf16.mxu0 %v2367
    %3551 = vmatpush1.bf16.msra.mxu0 %v2366
    %3552 = vmatprep.subr.bf16.mxu0 %v2383
    %3553 = vmatpush1.bf16.msra.mxu0 %v2382
    %3554 = vmatprep.subr.bf16.mxu0 %v2399
    %3555 = vmatpush1.bf16.msra.mxu0 %v2398
    %3556 = vmatprep.subr.bf16.mxu0 %v2415
    %3557 = vmatpush1.bf16.msra.mxu0 %v2414
    %3558 = vmatprep.subr.bf16.mxu0 %v2431
    %3559 = vmatpush1.bf16.msra.mxu0 %v2430
    %3560 = vmatprep.subr.bf16.mxu0 %v2447
    %3561 = vmatpush1.bf16.msra.mxu0 %v2446
    %3562 = vmatprep.subr.bf16.mxu0 %v2463
    %3563 = vmatpush1.bf16.msra.mxu0 %v2462
    %3564 = vmatprep.subr.bf16.mxu0 %v2479
    %3565 = vmatpush1.bf16.msra.mxu0 %v2478
    %3566 = vmatprep.subr.bf16.mxu0 %v2495
    %3567 = vmatpush1.bf16.msra.mxu0 %v2494
    %3568 = vmatprep.subr.bf16.mxu0 %v2511
    %3569 = vmatpush1.bf16.msra.mxu0 %v2510
    %3570 = vmatprep.subr.bf16.mxu0 %v2527
    %3571 = vmatpush1.bf16.msra.mxu0 %v2526
    %3572 = vmatprep.subr.bf16.mxu0 %v2543
    %3573 = vmatpush1.bf16.msra.mxu0 %v2542
    %3574 = vmatprep.subr.bf16.mxu0 %v2559
    %3575 = vmatpush1.bf16.msra.mxu0 %v2558
    %3576 = vmatprep.subr.bf16.mxu0 %v2575
    %3577 = vmatpush1.bf16.msra.mxu0 %v2574
    %3578 = vmatprep.subr.bf16.mxu0 %v2591
    %3579 = vmatpush1.bf16.msra.mxu0 %v2590
    %3580 = vmatprep.subr.bf16.mxu0 %v2607
    %3581 = vmatpush1.bf16.msra.mxu0 %v2606
    %3582 = vmatprep.mubr.bf16.mxu0 %v227
    %3583 = vmatmul.mubr.bf16.gmra.mrb[0].mxu0 %v226
    %v3584 = vpop.f32.mrb[0].mxu0
    %v3585 = vadd.f32 %v765, %v3584
    %v3586 = vpop.f32.mrb[0].mxu0
    %v3587 = vadd.f32 %v769, %v3586
    %v3588 = vpop.f32.mrb[0].mxu0
    %v3589 = vpop.f32.mrb[0].mxu0
    %3590 = vdwg.mxu0
    %3591 = vmatprep.subr.bf16.mxu0 %v2623
    %3592 = vmatpush1.bf16.msra.mxu0 %v2622
    %3593 = vmatprep.subr.bf16.mxu0 %v2639
    %3594 = vmatpush1.bf16.msra.mxu0 %v2638
    %3595 = vmatprep.subr.bf16.mxu0 %v2655
    %3596 = vmatpush1.bf16.msra.mxu0 %v2654
    %3597 = vmatprep.subr.bf16.mxu0 %v2671
    %3598 = vmatpush1.bf16.msra.mxu0 %v2670
    %3599 = vmatprep.subr.bf16.mxu0 %v2687
    %3600 = vmatpush1.bf16.msra.mxu0 %v2686
    %3601 = vmatprep.subr.bf16.mxu0 %v2703
    %3602 = vmatpush1.bf16.msra.mxu0 %v2702
    %3603 = vmatprep.subr.bf16.mxu0 %v2719
    %3604 = vmatpush1.bf16.msra.mxu0 %v2718
    %3605 = vmatprep.subr.bf16.mxu0 %v2735
    %3606 = vmatpush1.bf16.msra.mxu0 %v2734
    %3607 = vmatprep.subr.bf16.mxu0 %v2751
    %3608 = vmatpush1.bf16.msra.mxu0 %v2750
    %3609 = vmatprep.subr.bf16.mxu0 %v2767
    %3610 = vmatpush1.bf16.msra.mxu0 %v2766
    %3611 = vmatprep.subr.bf16.mxu0 %v2783
    %3612 = vmatpush1.bf16.msra.mxu0 %v2782
    %3613 = vmatprep.subr.bf16.mxu0 %v2799
    %3614 = vmatpush1.bf16.msra.mxu0 %v2798
    %3615 = vmatprep.subr.bf16.mxu0 %v2815
    %3616 = vmatpush1.bf16.msra.mxu0 %v2814
    %3617 = vmatprep.subr.bf16.mxu0 %v2831
    %3618 = vmatpush1.bf16.msra.mxu0 %v2830
    %3619 = vmatprep.subr.bf16.mxu0 %v2847
    %3620 = vmatpush1.bf16.msra.mxu0 %v2846
    %3621 = vmatprep.subr.bf16.mxu0 %v2863
    %3622 = vmatpush1.bf16.msra.mxu0 %v2862
    %3623 = vmatprep.mubr.bf16.mxu0 %v229
    %3624 = vmatmul.mubr.bf16.gmra.mrb[0].mxu0 %v228
    %v3625 = vpop.f32.mrb[0].mxu0
    %v3626 = vadd.f32 %v3585, %v3625
    %v3627 = vpop.f32.mrb[0].mxu0
    %v3628 = vadd.f32 %v3587, %v3627
    %v3629 = vpop.f32.mrb[0].mxu0
    %v3630 = vpop.f32.mrb[0].mxu0
    %3631 = vdwg.mxu0
    %3632 = vmatprep.subr.bf16.mxu0 %v2369
    %3633 = vmatpush1.bf16.msra.mxu0 %v2368
    %3634 = vmatprep.subr.bf16.mxu0 %v2385
    %3635 = vmatpush1.bf16.msra.mxu0 %v2384
    %3636 = vmatprep.subr.bf16.mxu0 %v2401
    %3637 = vmatpush1.bf16.msra.mxu0 %v2400
    %3638 = vmatprep.subr.bf16.mxu0 %v2417
    %3639 = vmatpush1.bf16.msra.mxu0 %v2416
    %3640 = vmatprep.subr.bf16.mxu0 %v2433
    %3641 = vmatpush1.bf16.msra.mxu0 %v2432
    %3642 = vmatprep.subr.bf16.mxu0 %v2449
    %3643 = vmatpush1.bf16.msra.mxu0 %v2448
    %3644 = vmatprep.subr.bf16.mxu0 %v2465
    %3645 = vmatpush1.bf16.msra.mxu0 %v2464
    %3646 = vmatprep.subr.bf16.mxu0 %v2481
    %3647 = vmatpush1.bf16.msra.mxu0 %v2480
    %3648 = vmatprep.subr.bf16.mxu0 %v2497
    %3649 = vmatpush1.bf16.msra.mxu0 %v2496
    %3650 = vmatprep.subr.bf16.mxu0 %v2513
    %3651 = vmatpush1.bf16.msra.mxu0 %v2512
    %3652 = vmatprep.subr.bf16.mxu0 %v2529
    %3653 = vmatpush1.bf16.msra.mxu0 %v2528
    %3654 = vmatprep.subr.bf16.mxu0 %v2545
    %3655 = vmatpush1.bf16.msra.mxu0 %v2544
    %3656 = vmatprep.subr.bf16.mxu0 %v2561
    %3657 = vmatpush1.bf16.msra.mxu0 %v2560
    %3658 = vmatprep.subr.bf16.mxu0 %v2577
    %3659 = vmatpush1.bf16.msra.mxu0 %v2576
    %3660 = vmatprep.subr.bf16.mxu0 %v2593
    %3661 = vmatpush1.bf16.msra.mxu0 %v2592
    %3662 = vmatprep.subr.bf16.mxu0 %v2609
    %3663 = vmatpush1.bf16.msra.mxu0 %v2608
    %3664 = vmatprep.mubr.bf16.mxu0 %v227
    %3665 = vmatmul.mubr.bf16.gmra.mrb[0].mxu0 %v226
    %v3666 = vpop.f32.mrb[0].mxu0
    %v3667 = vadd.f32 %v773, %v3666
    %v3668 = vpop.f32.mrb[0].mxu0
    %v3669 = vadd.f32 %v777, %v3668
    %v3670 = vpop.f32.mrb[0].mxu0
    %v3671 = vpop.f32.mrb[0].mxu0
    %3672 = vdwg.mxu0
    %3673 = vmatprep.subr.bf16.mxu0 %v2625
    %3674 = vmatpush1.bf16.msra.mxu0 %v2624
    %3675 = vmatprep.subr.bf16.mxu0 %v2641
    %3676 = vmatpush1.bf16.msra.mxu0 %v2640
    %3677 = vmatprep.subr.bf16.mxu0 %v2657
    %3678 = vmatpush1.bf16.msra.mxu0 %v2656
    %3679 = vmatprep.subr.bf16.mxu0 %v2673
    %3680 = vmatpush1.bf16.msra.mxu0 %v2672
    %3681 = vmatprep.subr.bf16.mxu0 %v2689
    %3682 = vmatpush1.bf16.msra.mxu0 %v2688
    %3683 = vmatprep.subr.bf16.mxu0 %v2705
    %3684 = vmatpush1.bf16.msra.mxu0 %v2704
    %3685 = vmatprep.subr.bf16.mxu0 %v2721
    %3686 = vmatpush1.bf16.msra.mxu0 %v2720
    %3687 = vmatprep.subr.bf16.mxu0 %v2737
    %3688 = vmatpush1.bf16.msra.mxu0 %v2736
    %3689 = vmatprep.subr.bf16.mxu0 %v2753
    %3690 = vmatpush1.bf16.msra.mxu0 %v2752
    %3691 = vmatprep.subr.bf16.mxu0 %v2769
    %3692 = vmatpush1.bf16.msra.mxu0 %v2768
    %3693 = vmatprep.subr.bf16.mxu0 %v2785
    %3694 = vmatpush1.bf16.msra.mxu0 %v2784
    %3695 = vmatprep.subr.bf16.mxu0 %v2801
    %3696 = vmatpush1.bf16.msra.mxu0 %v2800
    %3697 = vmatprep.subr.bf16.mxu0 %v2817
    %3698 = vmatpush1.bf16.msra.mxu0 %v2816
    %3699 = vmatprep.subr.bf16.mxu0 %v2833
    %3700 = vmatpush1.bf16.msra.mxu0 %v2832
    %3701 = vmatprep.subr.bf16.mxu0 %v2849
    %3702 = vmatpush1.bf16.msra.mxu0 %v2848
    %3703 = vmatprep.subr.bf16.mxu0 %v2865
    %3704 = vmatpush1.bf16.msra.mxu0 %v2864
    %3705 = vmatprep.mubr.bf16.mxu0 %v229
    %3706 = vmatmul.mubr.bf16.gmra.mrb[0].mxu0 %v228
    %v3707 = vpop.f32.mrb[0].mxu0
    %v3708 = vadd.f32 %v3667, %v3707
    %v3709 = vpop.f32.mrb[0].mxu0
    %v3710 = vadd.f32 %v3669, %v3709
    %v3711 = vpop.f32.mrb[0].mxu0
    %v3712 = vpop.f32.mrb[0].mxu0
    %3713 = vdwg.mxu0
    %3714 = vmatprep.subr.bf16.mxu0 %v2371
    %3715 = vmatpush1.bf16.msra.mxu0 %v2370
    %3716 = vmatprep.subr.bf16.mxu0 %v2387
    %3717 = vmatpush1.bf16.msra.mxu0 %v2386
    %3718 = vmatprep.subr.bf16.mxu0 %v2403
    %3719 = vmatpush1.bf16.msra.mxu0 %v2402
    %3720 = vmatprep.subr.bf16.mxu0 %v2419
    %3721 = vmatpush1.bf16.msra.mxu0 %v2418
    %3722 = vmatprep.subr.bf16.mxu0 %v2435
    %3723 = vmatpush1.bf16.msra.mxu0 %v2434
    %3724 = vmatprep.subr.bf16.mxu0 %v2451
    %3725 = vmatpush1.bf16.msra.mxu0 %v2450
    %3726 = vmatprep.subr.bf16.mxu0 %v2467
    %3727 = vmatpush1.bf16.msra.mxu0 %v2466
    %3728 = vmatprep.subr.bf16.mxu0 %v2483
    %3729 = vmatpush1.bf16.msra.mxu0 %v2482
    %3730 = vmatprep.subr.bf16.mxu0 %v2499
    %3731 = vmatpush1.bf16.msra.mxu0 %v2498
    %3732 = vmatprep.subr.bf16.mxu0 %v2515
    %3733 = vmatpush1.bf16.msra.mxu0 %v2514
    %3734 = vmatprep.subr.bf16.mxu0 %v2531
    %3735 = vmatpush1.bf16.msra.mxu0 %v2530
    %3736 = vmatprep.subr.bf16.mxu0 %v2547
    %3737 = vmatpush1.bf16.msra.mxu0 %v2546
    %3738 = vmatprep.subr.bf16.mxu0 %v2563
    %3739 = vmatpush1.bf16.msra.mxu0 %v2562
    %3740 = vmatprep.subr.bf16.mxu0 %v2579
    %3741 = vmatpush1.bf16.msra.mxu0 %v2578
    %3742 = vmatprep.subr.bf16.mxu0 %v2595
    %3743 = vmatpush1.bf16.msra.mxu0 %v2594
    %3744 = vmatprep.subr.bf16.mxu0 %v2611
    %3745 = vmatpush1.bf16.msra.mxu0 %v2610
    %3746 = vmatprep.mubr.bf16.mxu0 %v227
    %3747 = vmatmul.mubr.bf16.gmra.mrb[0].mxu0 %v226
    %v3748 = vpop.f32.mrb[0].mxu0
    %v3749 = vadd.f32 %v781, %v3748
    %v3750 = vpop.f32.mrb[0].mxu0
    %v3751 = vadd.f32 %v785, %v3750
    %v3752 = vpop.f32.mrb[0].mxu0
    %v3753 = vpop.f32.mrb[0].mxu0
    %3754 = vdwg.mxu0
    %3755 = vmatprep.subr.bf16.mxu0 %v2627
    %3756 = vmatpush1.bf16.msra.mxu0 %v2626
    %3757 = vmatprep.subr.bf16.mxu0 %v2643
    %3758 = vmatpush1.bf16.msra.mxu0 %v2642
    %3759 = vmatprep.subr.bf16.mxu0 %v2659
    %3760 = vmatpush1.bf16.msra.mxu0 %v2658
    %3761 = vmatprep.subr.bf16.mxu0 %v2675
    %3762 = vmatpush1.bf16.msra.mxu0 %v2674
    %3763 = vmatprep.subr.bf16.mxu0 %v2691
    %3764 = vmatpush1.bf16.msra.mxu0 %v2690
    %3765 = vmatprep.subr.bf16.mxu0 %v2707
    %3766 = vmatpush1.bf16.msra.mxu0 %v2706
    %3767 = vmatprep.subr.bf16.mxu0 %v2723
    %3768 = vmatpush1.bf16.msra.mxu0 %v2722
    %3769 = vmatprep.subr.bf16.mxu0 %v2739
    %3770 = vmatpush1.bf16.msra.mxu0 %v2738
    %3771 = vmatprep.subr.bf16.mxu0 %v2755
    %3772 = vmatpush1.bf16.msra.mxu0 %v2754
    %3773 = vmatprep.subr.bf16.mxu0 %v2771
    %3774 = vmatpush1.bf16.msra.mxu0 %v2770
    %3775 = vmatprep.subr.bf16.mxu0 %v2787
    %3776 = vmatpush1.bf16.msra.mxu0 %v2786
    %3777 = vmatprep.subr.bf16.mxu0 %v2803
    %3778 = vmatpush1.bf16.msra.mxu0 %v2802
    %3779 = vmatprep.subr.bf16.mxu0 %v2819
    %3780 = vmatpush1.bf16.msra.mxu0 %v2818
    %3781 = vmatprep.subr.bf16.mxu0 %v2835
    %3782 = vmatpush1.bf16.msra.mxu0 %v2834
    %3783 = vmatprep.subr.bf16.mxu0 %v2851
    %3784 = vmatpush1.bf16.msra.mxu0 %v2850
    %3785 = vmatprep.subr.bf16.mxu0 %v2867
    %3786 = vmatpush1.bf16.msra.mxu0 %v2866
    %3787 = vmatprep.mubr.bf16.mxu0 %v229
    %3788 = vmatmul.mubr.bf16.gmra.mrb[0].mxu0 %v228
    %v3789 = vpop.f32.mrb[0].mxu0
    %v3790 = vadd.f32 %v3749, %v3789
    %v3791 = vpop.f32.mrb[0].mxu0
    %v3792 = vadd.f32 %v3751, %v3791
    %v3793 = vpop.f32.mrb[0].mxu0
    %v3794 = vpop.f32.mrb[0].mxu0
    %3795 = vdwg.mxu0
    %3796 = vmatprep.subr.bf16.mxu0 %v2373
    %3797 = vmatpush1.bf16.msra.mxu0 %v2372
    %3798 = vmatprep.subr.bf16.mxu0 %v2389
    %3799 = vmatpush1.bf16.msra.mxu0 %v2388
    %3800 = vmatprep.subr.bf16.mxu0 %v2405
    %3801 = vmatpush1.bf16.msra.mxu0 %v2404
    %3802 = vmatprep.subr.bf16.mxu0 %v2421
    %3803 = vmatpush1.bf16.msra.mxu0 %v2420
    %3804 = vmatprep.subr.bf16.mxu0 %v2437
    %3805 = vmatpush1.bf16.msra.mxu0 %v2436
    %3806 = vmatprep.subr.bf16.mxu0 %v2453
    %3807 = vmatpush1.bf16.msra.mxu0 %v2452
    %3808 = vmatprep.subr.bf16.mxu0 %v2469
    %3809 = vmatpush1.bf16.msra.mxu0 %v2468
    %3810 = vmatprep.subr.bf16.mxu0 %v2485
    %3811 = vmatpush1.bf16.msra.mxu0 %v2484
    %3812 = vmatprep.subr.bf16.mxu0 %v2501
    %3813 = vmatpush1.bf16.msra.mxu0 %v2500
    %3814 = vmatprep.subr.bf16.mxu0 %v2517
    %3815 = vmatpush1.bf16.msra.mxu0 %v2516
    %3816 = vmatprep.subr.bf16.mxu0 %v2533
    %3817 = vmatpush1.bf16.msra.mxu0 %v2532
    %3818 = vmatprep.subr.bf16.mxu0 %v2549
    %3819 = vmatpush1.bf16.msra.mxu0 %v2548
    %3820 = vmatprep.subr.bf16.mxu0 %v2565
    %3821 = vmatpush1.bf16.msra.mxu0 %v2564
    %3822 = vmatprep.subr.bf16.mxu0 %v2581
    %3823 = vmatpush1.bf16.msra.mxu0 %v2580
    %3824 = vmatprep.subr.bf16.mxu0 %v2597
    %3825 = vmatpush1.bf16.msra.mxu0 %v2596
    %3826 = vmatprep.subr.bf16.mxu0 %v2613
    %3827 = vmatpush1.bf16.msra.mxu0 %v2612
    %3828 = vmatprep.mubr.bf16.mxu0 %v227
    %3829 = vmatmul.mubr.bf16.gmra.mrb[0].mxu0 %v226
    %v3830 = vpop.f32.mrb[0].mxu0
    %v3831 = vadd.f32 %v789, %v3830
    %v3832 = vpop.f32.mrb[0].mxu0
    %v3833 = vadd.f32 %v793, %v3832
    %v3834 = vpop.f32.mrb[0].mxu0
    %v3835 = vpop.f32.mrb[0].mxu0
    %3836 = vdwg.mxu0
    %3837 = vmatprep.subr.bf16.mxu0 %v2629
    %3838 = vmatpush1.bf16.msra.mxu0 %v2628
    %3839 = vmatprep.subr.bf16.mxu0 %v2645
    %3840 = vmatpush1.bf16.msra.mxu0 %v2644
    %3841 = vmatprep.subr.bf16.mxu0 %v2661
    %3842 = vmatpush1.bf16.msra.mxu0 %v2660
    %3843 = vmatprep.subr.bf16.mxu0 %v2677
    %3844 = vmatpush1.bf16.msra.mxu0 %v2676
    %3845 = vmatprep.subr.bf16.mxu0 %v2693
    %3846 = vmatpush1.bf16.msra.mxu0 %v2692
    %3847 = vmatprep.subr.bf16.mxu0 %v2709
    %3848 = vmatpush1.bf16.msra.mxu0 %v2708
    %3849 = vmatprep.subr.bf16.mxu0 %v2725
    %3850 = vmatpush1.bf16.msra.mxu0 %v2724
    %3851 = vmatprep.subr.bf16.mxu0 %v2741
    %3852 = vmatpush1.bf16.msra.mxu0 %v2740
    %3853 = vmatprep.subr.bf16.mxu0 %v2757
    %3854 = vmatpush1.bf16.msra.mxu0 %v2756
    %3855 = vmatprep.subr.bf16.mxu0 %v2773
    %3856 = vmatpush1.bf16.msra.mxu0 %v2772
    %3857 = vmatprep.subr.bf16.mxu0 %v2789
    %3858 = vmatpush1.bf16.msra.mxu0 %v2788
    %3859 = vmatprep.subr.bf16.mxu0 %v2805
    %3860 = vmatpush1.bf16.msra.mxu0 %v2804
    %3861 = vmatprep.subr.bf16.mxu0 %v2821
    %3862 = vmatpush1.bf16.msra.mxu0 %v2820
    %3863 = vmatprep.subr.bf16.mxu0 %v2837
    %3864 = vmatpush1.bf16.msra.mxu0 %v2836
    %3865 = vmatprep.subr.bf16.mxu0 %v2853
    %3866 = vmatpush1.bf16.msra.mxu0 %v2852
    %3867 = vmatprep.subr.bf16.mxu0 %v2869
    %3868 = vmatpush1.bf16.msra.mxu0 %v2868
    %3869 = vmatprep.mubr.bf16.mxu0 %v229
    %3870 = vmatmul.mubr.bf16.gmra.mrb[0].mxu0 %v228
    %v3871 = vpop.f32.mrb[0].mxu0
    %v3872 = vadd.f32 %v3831, %v3871
    %v3873 = vpop.f32.mrb[0].mxu0
    %v3874 = vadd.f32 %v3833, %v3873
    %v3875 = vpop.f32.mrb[0].mxu0
    %v3876 = vpop.f32.mrb[0].mxu0
    %3877 = vdwg.mxu0
    %3878 = vmatprep.subr.bf16.mxu0 %v2375
    %3879 = vmatpush1.bf16.msra.mxu0 %v2374
    %3880 = vmatprep.subr.bf16.mxu0 %v2391
    %3881 = vmatpush1.bf16.msra.mxu0 %v2390
    %3882 = vmatprep.subr.bf16.mxu0 %v2407
    %3883 = vmatpush1.bf16.msra.mxu0 %v2406
    %3884 = vmatprep.subr.bf16.mxu0 %v2423
    %3885 = vmatpush1.bf16.msra.mxu0 %v2422
    %3886 = vmatprep.subr.bf16.mxu0 %v2439
    %3887 = vmatpush1.bf16.msra.mxu0 %v2438
    %3888 = vmatprep.subr.bf16.mxu0 %v2455
    %3889 = vmatpush1.bf16.msra.mxu0 %v2454
    %3890 = vmatprep.subr.bf16.mxu0 %v2471
    %3891 = vmatpush1.bf16.msra.mxu0 %v2470
    %3892 = vmatprep.subr.bf16.mxu0 %v2487
    %3893 = vmatpush1.bf16.msra.mxu0 %v2486
    %3894 = vmatprep.subr.bf16.mxu0 %v2503
    %3895 = vmatpush1.bf16.msra.mxu0 %v2502
    %3896 = vmatprep.subr.bf16.mxu0 %v2519
    %3897 = vmatpush1.bf16.msra.mxu0 %v2518
    %3898 = vmatprep.subr.bf16.mxu0 %v2535
    %3899 = vmatpush1.bf16.msra.mxu0 %v2534
    %3900 = vmatprep.subr.bf16.mxu0 %v2551
    %3901 = vmatpush1.bf16.msra.mxu0 %v2550
    %3902 = vmatprep.subr.bf16.mxu0 %v2567
    %3903 = vmatpush1.bf16.msra.mxu0 %v2566
    %3904 = vmatprep.subr.bf16.mxu0 %v2583
    %3905 = vmatpush1.bf16.msra.mxu0 %v2582
    %3906 = vmatprep.subr.bf16.mxu0 %v2599
    %3907 = vmatpush1.bf16.msra.mxu0 %v2598
    %3908 = vmatprep.subr.bf16.mxu0 %v2615
    %3909 = vmatpush1.bf16.msra.mxu0 %v2614
    %3910 = vmatprep.mubr.bf16.mxu0 %v227
    %3911 = vmatmul.mubr.bf16.gmra.mrb[0].mxu0 %v226
    %v3912 = vpop.f32.mrb[0].mxu0
    %v3913 = vadd.f32 %v797, %v3912
    %v3914 = vpop.f32.mrb[0].mxu0
    %v3915 = vadd.f32 %v801, %v3914
    %v3916 = vpop.f32.mrb[0].mxu0
    %v3917 = vpop.f32.mrb[0].mxu0
    %3918 = vdwg.mxu0
    %3919 = vmatprep.subr.bf16.mxu0 %v2631
    %3920 = vmatpush1.bf16.msra.mxu0 %v2630
    %3921 = vmatprep.subr.bf16.mxu0 %v2647
    %3922 = vmatpush1.bf16.msra.mxu0 %v2646
    %3923 = vmatprep.subr.bf16.mxu0 %v2663
    %3924 = vmatpush1.bf16.msra.mxu0 %v2662
    %3925 = vmatprep.subr.bf16.mxu0 %v2679
    %3926 = vmatpush1.bf16.msra.mxu0 %v2678
    %3927 = vmatprep.subr.bf16.mxu0 %v2695
    %3928 = vmatpush1.bf16.msra.mxu0 %v2694
    %3929 = vmatprep.subr.bf16.mxu0 %v2711
    %3930 = vmatpush1.bf16.msra.mxu0 %v2710
    %3931 = vmatprep.subr.bf16.mxu0 %v2727
    %3932 = vmatpush1.bf16.msra.mxu0 %v2726
    %3933 = vmatprep.subr.bf16.mxu0 %v2743
    %3934 = vmatpush1.bf16.msra.mxu0 %v2742
    %3935 = vmatprep.subr.bf16.mxu0 %v2759
    %3936 = vmatpush1.bf16.msra.mxu0 %v2758
    %3937 = vmatprep.subr.bf16.mxu0 %v2775
    %3938 = vmatpush1.bf16.msra.mxu0 %v2774
    %3939 = vmatprep.subr.bf16.mxu0 %v2791
    %3940 = vmatpush1.bf16.msra.mxu0 %v2790
    %3941 = vmatprep.subr.bf16.mxu0 %v2807
    %3942 = vmatpush1.bf16.msra.mxu0 %v2806
    %3943 = vmatprep.subr.bf16.mxu0 %v2823
    %3944 = vmatpush1.bf16.msra.mxu0 %v2822
    %3945 = vmatprep.subr.bf16.mxu0 %v2839
    %3946 = vmatpush1.bf16.msra.mxu0 %v2838
    %3947 = vmatprep.subr.bf16.mxu0 %v2855
    %3948 = vmatpush1.bf16.msra.mxu0 %v2854
    %3949 = vmatprep.subr.bf16.mxu0 %v2871
    %3950 = vmatpush1.bf16.msra.mxu0 %v2870
    %3951 = vmatprep.mubr.bf16.mxu0 %v229
    %3952 = vmatmul.mubr.bf16.gmra.mrb[0].mxu0 %v228
    %v3953 = vpop.f32.mrb[0].mxu0
    %v3954 = vadd.f32 %v3913, %v3953
    %v3955 = vpop.f32.mrb[0].mxu0
    %v3956 = vadd.f32 %v3915, %v3955
    %v3957 = vpop.f32.mrb[0].mxu0
    %v3958 = vpop.f32.mrb[0].mxu0
    %3959 = vdwg.mxu0
    %3960 = vmatprep.subr.bf16.mxu0 %v2377
    %3961 = vmatpush1.bf16.msra.mxu0 %v2376
    %3962 = vmatprep.subr.bf16.mxu0 %v2393
    %3963 = vmatpush1.bf16.msra.mxu0 %v2392
    %3964 = vmatprep.subr.bf16.mxu0 %v2409
    %3965 = vmatpush1.bf16.msra.mxu0 %v2408
    %3966 = vmatprep.subr.bf16.mxu0 %v2425
    %3967 = vmatpush1.bf16.msra.mxu0 %v2424
    %3968 = vmatprep.subr.bf16.mxu0 %v2441
    %3969 = vmatpush1.bf16.msra.mxu0 %v2440
    %3970 = vmatprep.subr.bf16.mxu0 %v2457
    %3971 = vmatpush1.bf16.msra.mxu0 %v2456
    %3972 = vmatprep.subr.bf16.mxu0 %v2473
    %3973 = vmatpush1.bf16.msra.mxu0 %v2472
    %3974 = vmatprep.subr.bf16.mxu0 %v2489
    %3975 = vmatpush1.bf16.msra.mxu0 %v2488
    %3976 = vmatprep.subr.bf16.mxu0 %v2505
    %3977 = vmatpush1.bf16.msra.mxu0 %v2504
    %3978 = vmatprep.subr.bf16.mxu0 %v2521
    %3979 = vmatpush1.bf16.msra.mxu0 %v2520
    %3980 = vmatprep.subr.bf16.mxu0 %v2537
    %3981 = vmatpush1.bf16.msra.mxu0 %v2536
    %3982 = vmatprep.subr.bf16.mxu0 %v2553
    %3983 = vmatpush1.bf16.msra.mxu0 %v2552
    %3984 = vmatprep.subr.bf16.mxu0 %v2569
    %3985 = vmatpush1.bf16.msra.mxu0 %v2568
    %3986 = vmatprep.subr.bf16.mxu0 %v2585
    %3987 = vmatpush1.bf16.msra.mxu0 %v2584
    %3988 = vmatprep.subr.bf16.mxu0 %v2601
    %3989 = vmatpush1.bf16.msra.mxu0 %v2600
    %3990 = vmatprep.subr.bf16.mxu0 %v2617
    %3991 = vmatpush1.bf16.msra.mxu0 %v2616
    %3992 = vmatprep.mubr.bf16.mxu0 %v227
    %3993 = vmatmul.mubr.bf16.gmra.mrb[0].mxu0 %v226
    %v3994 = vpop.f32.mrb[0].mxu0
    %v3995 = vadd.f32 %v805, %v3994
    %v3996 = vpop.f32.mrb[0].mxu0
    %v3997 = vadd.f32 %v809, %v3996
    %v3998 = vpop.f32.mrb[0].mxu0
    %v3999 = vpop.f32.mrb[0].mxu0
    %4000 = vdwg.mxu0
    %4001 = vmatprep.subr.bf16.mxu0 %v2633
    %4002 = vmatpush1.bf16.msra.mxu0 %v2632
    %4003 = vmatprep.subr.bf16.mxu0 %v2649
    %4004 = vmatpush1.bf16.msra.mxu0 %v2648
    %4005 = vmatprep.subr.bf16.mxu0 %v2665
    %4006 = vmatpush1.bf16.msra.mxu0 %v2664
    %4007 = vmatprep.subr.bf16.mxu0 %v2681
    %4008 = vmatpush1.bf16.msra.mxu0 %v2680
    %4009 = vmatprep.subr.bf16.mxu0 %v2697
    %4010 = vmatpush1.bf16.msra.mxu0 %v2696
    %4011 = vmatprep.subr.bf16.mxu0 %v2713
    %4012 = vmatpush1.bf16.msra.mxu0 %v2712
    %4013 = vmatprep.subr.bf16.mxu0 %v2729
    %4014 = vmatpush1.bf16.msra.mxu0 %v2728
    %4015 = vmatprep.subr.bf16.mxu0 %v2745
    %4016 = vmatpush1.bf16.msra.mxu0 %v2744
    %4017 = vmatprep.subr.bf16.mxu0 %v2761
    %4018 = vmatpush1.bf16.msra.mxu0 %v2760
    %4019 = vmatprep.subr.bf16.mxu0 %v2777
    %4020 = vmatpush1.bf16.msra.mxu0 %v2776
    %4021 = vmatprep.subr.bf16.mxu0 %v2793
    %4022 = vmatpush1.bf16.msra.mxu0 %v2792
    %4023 = vmatprep.subr.bf16.mxu0 %v2809
    %4024 = vmatpush1.bf16.msra.mxu0 %v2808
    %4025 = vmatprep.subr.bf16.mxu0 %v2825
    %4026 = vmatpush1.bf16.msra.mxu0 %v2824
    %4027 = vmatprep.subr.bf16.mxu0 %v2841
    %4028 = vmatpush1.bf16.msra.mxu0 %v2840
    %4029 = vmatprep.subr.bf16.mxu0 %v2857
    %4030 = vmatpush1.bf16.msra.mxu0 %v2856
    %4031 = vmatprep.subr.bf16.mxu0 %v2873
    %4032 = vmatpush1.bf16.msra.mxu0 %v2872
    %4033 = vmatprep.mubr.bf16.mxu0 %v229
    %4034 = vmatmul.mubr.bf16.gmra.mrb[0].mxu0 %v228
    %v4035 = vpop.f32.mrb[0].mxu0
    %v4036 = vadd.f32 %v3995, %v4035
    %v4037 = vpop.f32.mrb[0].mxu0
    %v4038 = vadd.f32 %v3997, %v4037
    %v4039 = vpop.f32.mrb[0].mxu0
    %v4040 = vpop.f32.mrb[0].mxu0
    %4041 = vdwg.mxu0
    %v4058 = vcombine.low %v3462, %v3464
    %v4059 = vcombine.low %v3544, %v3546
    %v4061 = vunpack.c.l.s4 1983009808
    %v4062 = vunpack.c.0.s8 %v4061
    %v4063 = vlaneseq
    %v4064 = vshrl.u32 %v4063, 7
    %v4065 = vsub.s32 %v4062, %v4064
    %v4066 = vrot.slane %v4058, %v4065
    %v4068 = vunpack.c.l.s4 1983009808
    %v4069 = vunpack.c.0.s8 %v4068
    %v4070 = vlaneseq
    %v4071 = vshrl.u32 %v4070, 7
    %v4072 = vsub.s32 %v4069, %v4071
    %v4073 = vrot.slane %v4059, %v4072
    %v4074 = vcombine.low %v4066, %v4073
    %v4075 = vcombine.low %v3626, %v3628
    %v4076 = vcombine.low %v3708, %v3710
    %v4078 = vunpack.c.l.s4 1983009808
    %v4079 = vunpack.c.0.s8 %v4078
    %v4080 = vlaneseq
    %v4081 = vshrl.u32 %v4080, 7
    %v4082 = vsub.s32 %v4079, %v4081
    %v4083 = vrot.slane %v4075, %v4082
    %v4085 = vunpack.c.l.s4 1983009808
    %v4086 = vunpack.c.0.s8 %v4085
    %v4087 = vlaneseq
    %v4088 = vshrl.u32 %v4087, 7
    %v4089 = vsub.s32 %v4086, %v4088
    %v4090 = vrot.slane %v4076, %v4089
    %v4091 = vcombine.low %v4083, %v4090
    %v4092 = vcombine.low %v3790, %v3792
    %v4093 = vcombine.low %v3872, %v3874
    %v4095 = vunpack.c.l.s4 1983009808
    %v4096 = vunpack.c.0.s8 %v4095
    %v4097 = vlaneseq
    %v4098 = vshrl.u32 %v4097, 7
    %v4099 = vsub.s32 %v4096, %v4098
    %v4100 = vrot.slane %v4092, %v4099
    %v4102 = vunpack.c.l.s4 1983009808
    %v4103 = vunpack.c.0.s8 %v4102
    %v4104 = vlaneseq
    %v4105 = vshrl.u32 %v4104, 7
    %v4106 = vsub.s32 %v4103, %v4105
    %v4107 = vrot.slane %v4093, %v4106
    %v4108 = vcombine.low %v4100, %v4107
    %v4109 = vcombine.low %v3954, %v3956
    %v4110 = vcombine.low %v4036, %v4038
    %v4112 = vunpack.c.l.s4 1983009808
    %v4113 = vunpack.c.0.s8 %v4112
    %v4114 = vlaneseq
    %v4115 = vshrl.u32 %v4114, 7
    %v4116 = vsub.s32 %v4113, %v4115
    %v4117 = vrot.slane %v4109, %v4116
    %v4119 = vunpack.c.l.s4 1983009808
    %v4120 = vunpack.c.0.s8 %v4119
    %v4121 = vlaneseq
    %v4122 = vshrl.u32 %v4121, 7
    %v4123 = vsub.s32 %v4120, %v4122
    %v4124 = vrot.slane %v4110, %v4123
    %v4125 = vcombine.low %v4117, %v4124
    %4130 = vst [vmem:[#allocation11] sm:$0xff] %v4074
    %4131 = vst [vmem:[#allocation11 + $0x8] sm:$0xff] %v4091
    %4132 = vst [vmem:[#allocation11 + $0x10] sm:$0xff] %v4108
    %4133 = vst [vmem:[#allocation11 + $0x18] sm:$0xff] %v4125
    // Predicated region
    $region42: #{tpu_custom_call.1} parent=1 // pred_check
      _
    $region43: #{tpu_custom_call.1} parent=1 // pred_check_branch
      %4135 = sbr.rel (0) target = $region45
    $region44: #{tpu_custom_call.1} parent=1 // pred_region
      %s4137 = ssub.s32 512, 512
      %4138 = vsyncadd [#allocation4], %s4137
      %s4140 = sshll.u32 [#allocation11], 4
      %s4141 = int_to_ptr.vmem [resolvable:$true] %s4140
      %4143 = dma.vmem_to_hbm [thread:$0]  %s4141, 512, %s5, [#allocation4]
    $region45: #{tpu_custom_call.1} parent=1 // pred_fallthru
      _
    // Predicated region
    $region46: #{tpu_custom_call.1} parent=1 // pred_check
      _
    $region47: #{tpu_custom_call.1} parent=1 // pred_check_branch
      %4145 = sbr.rel (0) target = $region49
    $region48: #{tpu_custom_call.1} parent=1 // pred_region
      %4146 = dma.done [#allocation4], 512
    $region49: #{tpu_custom_call.1} parent=1 // pred_fallthru
      _
    %4147 = vsyncpa [#allocation3], 1
    %4148 = vsyncpa [#allocation6], 1
    %4149 = vsyncpa [#allocation9], 1
    %4150 = vsyncpa [#allocation4], 1

</llo_original>
